<compile_context>
chip_gen: v7x
topology: tpu7x:2x2x1
jax: 0.10.0
libtpu: 0.0.40
codegen_flags: <defaults>
</compile_context>

<pallas_src>
import functools

import jax
import jax.numpy as jnp
import numpy as np
from jax.experimental import pallas as pl
from jax.experimental.pallas import tpu as pltpu

LANE = 128      # vreg lane width
SUBLANE = 8     # vreg sublane width


def _round_up(x, m):
    return (x + m - 1) // m * m


# ---------------------------------------------------------------------------
# Fused forward kernel
# ---------------------------------------------------------------------------
def _fused_forward_kernel(*refs, num_lstm, num_tail, seq_len, bp, hp, hidden):
    """refs = [x,
               (w_ih, w_hh, b) * num_lstm,
               (w_tail, b_tail) * num_tail,
               out,
               hseq_scratch]

    x:            (T*BP, P)   time-major, batch/feature padded
    w_ih:         (P, P)      gates PACKED into lanes [0, 4H), rows >= in_dim zero
    w_hh:         (P, P)      gates packed, rows >= H zero
    b:            (1, P)      b_ih + b_hh, gates packed
    w_tail:       (P, P)      real block [:in_size, :out_size], rest zero
    b_tail:       (1, P)
    out:          (T*BP, P)
    hseq_scratch: (T*BP, P)   inter-layer hidden sequence (VMEM resident)
    """
    idx = 0
    x_ref = refs[idx]; idx += 1
    lstm_refs = []
    for _ in range(num_lstm):
        lstm_refs.append((refs[idx], refs[idx + 1], refs[idx + 2]))
        idx += 3
    tail_refs = []
    for _ in range(num_tail):
        tail_refs.append((refs[idx], refs[idx + 1]))
        idx += 2
    out_ref = refs[idx]; idx += 1
    hseq_ref = refs[idx]; idx += 1

    # Lane shifts (jnp.roll convention) that bring each packed gate block
    # (PyTorch order i, f, g, o at lanes [kH, (k+1)H)) onto lanes [0, H).
    sh_f = (hp - 1 * hidden) % hp
    sh_g = (hp - 2 * hidden) % hp
    sh_o = (hp - 3 * hidden) % hp

    # ---------------- LSTM stack ----------------
    for layer, (wih_ref, whh_ref, b_ref) in enumerate(lstm_refs):
        layer_in = x_ref[...] if layer == 0 else hseq_ref[...]      # (T*BP, P)

        # Hoisted input projection + bias: one batched MXU matmul per layer,
        # kept as a value (8 vregs) and sliced per step -- no scratch buffer.
        gx = (jnp.dot(layer_in, wih_ref[...],
                      preferred_element_type=jnp.float32) + b_ref[...])

        h = jnp.zeros((bp, hp), jnp.float32)
        c = jnp.zeros((bp, hp), jnp.float32)

        # Statically unrolled recurrence: only h @ W_hh (one 128x128 tile)
        # is serial.  W_hh is read from the ref each step (not hoisted) to
        # keep vreg pressure low.
        for t in range(seq_len):
            gates = gx[t * bp:(t + 1) * bp, :] + jnp.dot(
                h, whh_ref[...], preferred_element_type=jnp.float32)  # (BP, P)

            # Whole-vreg activations: sigmoid(x) = 0.5*tanh(0.5x) + 0.5
            sig = 0.5 * jnp.tanh(0.5 * gates) + 0.5   # sigmoid of all gates
            th = jnp.tanh(gates)                      # tanh of all gates

            i_g = sig                                   # i already at [0, H)
            f_g = pltpu.roll(sig, shift=sh_f, axis=1)   # f: [H, 2H)  -> [0, H)
            g_g = pltpu.roll(th, shift=sh_g, axis=1)    # g: [2H, 3H) -> [0, H)
            o_g = pltpu.roll(sig, shift=sh_o, axis=1)   # o: [3H, 4H) -> [0, H)

            # Lanes >= H hold bounded garbage; zero weight rows downstream
            # (W_ih/W_hh/tail-W rows >= H are zero) keep it out of real lanes.
            c = f_g * c + i_g * g_g
            h = o_g * jnp.tanh(c)
            hseq_ref[pl.ds(t * bp, bp), :] = h

    # ---------------- Tail: (ReLU -> Linear) x num_tail ----------------
    # TODO(synk): last projection has out_size = num_classes = 1 real lane;
    # could be a broadcast-multiply + lane reduction instead of an MXU pass.
    y = hseq_ref[...]                                              # (T*BP, P)
    for (tw_ref, tb_ref) in tail_refs:
        y = jnp.dot(jnp.maximum(y, 0.0), tw_ref[...],
                    preferred_element_type=jnp.float32) + tb_ref[...]
    out_ref[...] = y


def fused_forward(packed, x_flat, *, num_lstm, num_tail, seq_len, bp, hp, hidden):
    n_rows = seq_len * bp
    kernel = functools.partial(
        _fused_forward_kernel, num_lstm=num_lstm, num_tail=num_tail,
        seq_len=seq_len, bp=bp, hp=hp, hidden=hidden)
    vmem = pl.BlockSpec(memory_space=pltpu.MemorySpace.VMEM)

    args = [x_flat]
    for lp in packed["lstm"]:
        args += [lp["wih"], lp["whh"], lp["b"]]
    for tp in packed["tail"]:
        args += [tp["w"], tp["b"]]

    return pl.pallas_call(
        kernel,
        out_shape=jax.ShapeDtypeStruct((n_rows, hp), jnp.float32),
        in_specs=[vmem] * len(args),
        out_specs=vmem,
        scratch_shapes=[
            pltpu.VMEM((n_rows, hp), jnp.float32),   # inter-layer hidden seq
        ],
    )(*args)


# ---------------------------------------------------------------------------
# Parameters (PyTorch-layout) + packing into padded kernel layout
# ---------------------------------------------------------------------------
def init_params(key, num_classes, input_size, hidden_size, num_layers,
                nn_inter_dim, tail_length):
    params = {"lstm": [], "tail": []}
    k = 1.0 / np.sqrt(hidden_size)
    for layer in range(num_layers):
        in_dim = input_size if layer == 0 else hidden_size
        key, k1, k2, k3, k4 = jax.random.split(key, 5)
        params["lstm"].append(dict(
            w_ih=jax.random.uniform(k1, (4 * hidden_size, in_dim), jnp.float32, -k, k),
            w_hh=jax.random.uniform(k2, (4 * hidden_size, hidden_size), jnp.float32, -k, k),
            b_ih=jax.random.uniform(k3, (4 * hidden_size,), jnp.float32, -k, k),
            b_hh=jax.random.uniform(k4, (4 * hidden_size,), jnp.float32, -k, k)))
    for i_layer in range(tail_length):
        in_size = nn_inter_dim if i_layer > 0 else hidden_size
        out_size = nn_inter_dim if i_layer < tail_length - 1 else num_classes
        kl = 1.0 / np.sqrt(in_size)
        key, k1, k2 = jax.random.split(key, 3)
        params["tail"].append(dict(
            w=jax.random.uniform(k1, (out_size, in_size), jnp.float32, -kl, kl),
            b=jax.random.uniform(k2, (out_size,), jnp.float32, -kl, kl)))
    return params


def pack_params(params, *, input_size, hidden_size, nn_inter_dim,
                num_classes, tail_length):
    """Transpose + pad weights into the packed-gate, lane-friendly layout."""
    P = LANE
    H = hidden_size
    assert max(input_size, hidden_size, nn_inter_dim, num_classes) <= P
    # Packed-gate layout requires all four gates to fit in one lane block.
    assert 4 * H <= P, "packed-gate layout requires 4*hidden_size <= 128"
    packed = {"lstm": [], "tail": []}
    for layer, lp in enumerate(params["lstm"]):
        in_dim = input_size if layer == 0 else hidden_size
        wih_p = jnp.zeros((P, P), jnp.float32).at[:in_dim, :4 * H].set(lp["w_ih"].T)
        whh_p = jnp.zeros((P, P), jnp.float32).at[:H, :4 * H].set(lp["w_hh"].T)
        b_p = jnp.zeros((1, P), jnp.float32).at[0, :4 * H].set(lp["b_ih"] + lp["b_hh"])
        packed["lstm"].append(dict(wih=wih_p, whh=whh_p, b=b_p))
    for i_layer, tp in enumerate(params["tail"]):
        in_size = nn_inter_dim if i_layer > 0 else hidden_size
        out_size = nn_inter_dim if i_layer < tail_length - 1 else num_classes
        w_p = jnp.zeros((P, P), jnp.float32).at[:in_size, :out_size].set(tp["w"].T)
        b_p = jnp.zeros((1, P), jnp.float32).at[0, :out_size].set(tp["b"])
        packed["tail"].append(dict(w=w_p, b=b_p))
    return packed


# ---------------------------------------------------------------------------
# Forward pass (glue in the wrapper, all compute in one Pallas kernel)
# ---------------------------------------------------------------------------
def forward(config, packed, x_in):
    B, T, D = x_in.shape
    P = LANE
    BP = _round_up(B, SUBLANE)

    # batch-first -> time-major, pad batch to sublanes and features to lanes.
    x_tm = jnp.transpose(x_in, (1, 0, 2)).astype(jnp.float32)     # (T, B, D)
    x_pad = jnp.zeros((T, BP, P), jnp.float32).at[:, :B, :D].set(x_tm)
    x_flat = x_pad.reshape(T * BP, P)

    out_pad = fused_forward(
        packed, x_flat,
        num_lstm=config["num_layers"], num_tail=config["tail_length"],
        seq_len=T, bp=BP, hp=P, hidden=config["hidden_size"])       # (T*BP, P)

    # rows are (t, b)-ordered; reorder to PyTorch's batch-major flattening.
    nc = config["num_classes"]
    out = out_pad.reshape(T, BP, P)[:, :B, :nc]                    # (T, B, nc)
    return jnp.transpose(out, (1, 0, 2)).reshape(B * T, nc)


# ---------------------------------------------------------------------------
# Pure-JAX reference (unpadded) for correctness check
# ---------------------------------------------------------------------------
def forward_ref(params, x_in, hidden_size):
    B, T, _ = x_in.shape
    H = hidden_size
    h_seq = jnp.transpose(x_in, (1, 0, 2)).astype(jnp.float32)
    for lp in params["lstm"]:
        w_ih_t = lp["w_ih"].T
        w_hh_t = lp["w_hh"].T
        b = (lp["b_ih"] + lp["b_hh"]).reshape(1, -1)

        def step(carry, x_t, w_ih_t=w_ih_t, w_hh_t=w_hh_t, b=b):
            h, c = carry
            gates = x_t @ w_ih_t + h @ w_hh_t + b
            i_g = jax.nn.sigmoid(gates[:, 0 * H:1 * H])
            f_g = jax.nn.sigmoid(gates[:, 1 * H:2 * H])
            g_g = jnp.tanh(gates[:, 2 * H:3 * H])
            o_g = jax.nn.sigmoid(gates[:, 3 * H:4 * H])
            c_new = f_g * c + i_g * g_g
            h_new = o_g * jnp.tanh(c_new)
            return (h_new, c_new), h_new

        init = (jnp.zeros((B, H), jnp.float32), jnp.zeros((B, H), jnp.float32))
        _, h_seq = jax.lax.scan(step, init, h_seq)
    y = jnp.transpose(h_seq, (1, 0, 2)).reshape(B * T, H)
    for tp in params["tail"]:
        y = jnp.maximum(y, 0.0) @ tp["w"].T + tp["b"]
    return y


# ---------------------------------------------------------------------------
if __name__ == "__main__":
    # Module hyper-parameters (small, consistent with the PyTorch module).
    num_classes = 1
    input_size = 4
    hidden_size = 32
    num_layers = 2
    nn_inter_dim = 16
    tail_length = 3

    batch = 2
    seq = 8

    key = jax.random.PRNGKey(0)
    k_x, k_p = jax.random.split(key)
    x_in = jax.random.normal(k_x, (batch, seq, input_size), jnp.float32)

    params = init_params(k_p, num_classes, input_size, hidden_size,
                         num_layers, nn_inter_dim, tail_length)
    packed = pack_params(params, input_size=input_size, hidden_size=hidden_size,
                         nn_inter_dim=nn_inter_dim, num_classes=num_classes,
                         tail_length=tail_length)

    config = dict(num_classes=num_classes, num_layers=num_layers,
                  tail_length=tail_length, hidden_size=hidden_size)
    fwd = jax.jit(functools.partial(forward, config))

    out = jax.block_until_ready(fwd(packed, x_in))
    ref = jax.block_until_ready(forward_ref(params, x_in, hidden_size))

    assert out.shape == (batch * seq, num_classes), out.shape
    # Kernel uses the exact identity sigmoid(x) = 0.5*tanh(0.5x)+0.5 (1 EUP op);
    # allow a few ulps of drift vs. XLA's logistic in the reference.
    np.testing.assert_allclose(np.asarray(out), np.asarray(ref),
                               rtol=5e-4, atol=1e-5)
    print("KERNEL_OK")
</pallas_src>

<mosaic_0001>
module attributes {stable_mosaic.version = 11 : i64} {
  func.func @_fused_forward_kernel(%arg0: memref<64x128xf32, #tpu.memory_space<vmem>>, %arg1: memref<128x128xf32, #tpu.memory_space<vmem>>, %arg2: memref<128x128xf32, #tpu.memory_space<vmem>>, %arg3: memref<1x128xf32, #tpu.memory_space<vmem>>, %arg4: memref<128x128xf32, #tpu.memory_space<vmem>>, %arg5: memref<128x128xf32, #tpu.memory_space<vmem>>, %arg6: memref<1x128xf32, #tpu.memory_space<vmem>>, %arg7: memref<128x128xf32, #tpu.memory_space<vmem>>, %arg8: memref<1x128xf32, #tpu.memory_space<vmem>>, %arg9: memref<128x128xf32, #tpu.memory_space<vmem>>, %arg10: memref<1x128xf32, #tpu.memory_space<vmem>>, %arg11: memref<128x128xf32, #tpu.memory_space<vmem>>, %arg12: memref<1x128xf32, #tpu.memory_space<vmem>>, %arg13: memref<64x128xf32, #tpu.memory_space<vmem>>, %arg14: memref<64x128xf32, #tpu.memory_space<vmem>>) attributes {dimension_semantics = [], scalar_prefetch = 0 : i64, scratch_operands = 1 : i64, tpu.core_type = #tpu.core_type<tc>} {
    %c0 = arith.constant 0 : index
    %c0_0 = arith.constant 0 : index
    %0 = vector.load %arg0[%c0, %c0_0] : memref<64x128xf32, #tpu.memory_space<vmem>>, vector<64x128xf32>
    %c0_1 = arith.constant 0 : index
    %c0_2 = arith.constant 0 : index
    %1 = vector.load %arg1[%c0_1, %c0_2] : memref<128x128xf32, #tpu.memory_space<vmem>>, vector<128x128xf32>
    %cst = arith.constant dense<0.000000e+00> : vector<64x128xf32>
    %2 = tpu.matmul %0, %1, %cst {dimension_numbers = #tpu.dot_dimension_numbers<[1], [0], [0], [1], [0, 0, 1, 1], [], []>} : vector<64x128xf32>, vector<128x128xf32>, vector<64x128xf32> -> vector<64x128xf32>
    %c0_3 = arith.constant 0 : index
    %c0_4 = arith.constant 0 : index
    %3 = vector.load %arg3[%c0_3, %c0_4] : memref<1x128xf32, #tpu.memory_space<vmem>>, vector<1x128xf32>
    %4 = vector.broadcast %3 : vector<1x128xf32> to vector<64x128xf32>
    %5 = arith.addf %2, %4 : vector<64x128xf32>
    %cst_5 = arith.constant 0.000000e+00 : f32
    %6 = vector.broadcast %cst_5 : f32 to vector<8x128xf32>
    %cst_6 = arith.constant 0.000000e+00 : f32
    %7 = vector.broadcast %cst_6 : f32 to vector<8x128xf32>
    %8 = vector.extract_strided_slice %5 {offsets = [0, 0], sizes = [8, 128], strides = [1, 1]} : vector<64x128xf32> to vector<8x128xf32>
    %c0_7 = arith.constant 0 : index
    %c0_8 = arith.constant 0 : index
    %9 = vector.load %arg2[%c0_7, %c0_8] : memref<128x128xf32, #tpu.memory_space<vmem>>, vector<128x128xf32>
    %cst_9 = arith.constant dense<0.000000e+00> : vector<8x128xf32>
    %10 = tpu.matmul %6, %9, %cst_9 {dimension_numbers = #tpu.dot_dimension_numbers<[1], [0], [0], [1], [0, 0, 1, 1], [], []>} : vector<8x128xf32>, vector<128x128xf32>, vector<8x128xf32> -> vector<8x128xf32>
    %11 = arith.addf %8, %10 : vector<8x128xf32>
    %cst_10 = arith.constant 5.000000e-01 : f32
    %12 = vector.broadcast %cst_10 : f32 to vector<8x128xf32>
    %13 = arith.mulf %12, %11 : vector<8x128xf32>
    %14 = math.tanh %13 : vector<8x128xf32>
    %cst_11 = arith.constant 5.000000e-01 : f32
    %15 = vector.broadcast %cst_11 : f32 to vector<8x128xf32>
    %16 = arith.mulf %15, %14 : vector<8x128xf32>
    %cst_12 = arith.constant 5.000000e-01 : f32
    %17 = vector.broadcast %cst_12 : f32 to vector<8x128xf32>
    %18 = arith.addf %16, %17 : vector<8x128xf32>
    %19 = math.tanh %11 : vector<8x128xf32>
    %c96_i32 = arith.constant 96 : i32
    %20 = tpu.dynamic_rotate %18 by %c96_i32 dim 1 : vector<8x128xf32>, i32 -> vector<8x128xf32>
    %c64_i32 = arith.constant 64 : i32
    %21 = tpu.dynamic_rotate %19 by %c64_i32 dim 1 : vector<8x128xf32>, i32 -> vector<8x128xf32>
    %c32_i32 = arith.constant 32 : i32
    %22 = tpu.dynamic_rotate %18 by %c32_i32 dim 1 : vector<8x128xf32>, i32 -> vector<8x128xf32>
    %23 = arith.mulf %20, %7 : vector<8x128xf32>
    %24 = arith.mulf %18, %21 : vector<8x128xf32>
    %25 = arith.addf %23, %24 : vector<8x128xf32>
    %26 = math.tanh %25 : vector<8x128xf32>
    %27 = arith.mulf %22, %26 : vector<8x128xf32>
    %c0_13 = arith.constant 0 : index
    %c0_14 = arith.constant 0 : index
    %28 = vector.load %arg14[%c0_13, %c0_14] : memref<64x128xf32, #tpu.memory_space<vmem>>, vector<8x128xf32>
    tpu.vector_store %arg14[%c0_13, %c0_14], %27 {strides = array<i32>} : memref<64x128xf32, #tpu.memory_space<vmem>>, vector<8x128xf32>,
    %29 = vector.extract_strided_slice %5 {offsets = [8, 0], sizes = [8, 128], strides = [1, 1]} : vector<64x128xf32> to vector<8x128xf32>
    %c0_15 = arith.constant 0 : index
    %c0_16 = arith.constant 0 : index
    %30 = vector.load %arg2[%c0_15, %c0_16] : memref<128x128xf32, #tpu.memory_space<vmem>>, vector<128x128xf32>
    %cst_17 = arith.constant dense<0.000000e+00> : vector<8x128xf32>
    %31 = tpu.matmul %27, %30, %cst_17 {dimension_numbers = #tpu.dot_dimension_numbers<[1], [0], [0], [1], [0, 0, 1, 1], [], []>} : vector<8x128xf32>, vector<128x128xf32>, vector<8x128xf32> -> vector<8x128xf32>
    %32 = arith.addf %29, %31 : vector<8x128xf32>
    %cst_18 = arith.constant 5.000000e-01 : f32
    %33 = vector.broadcast %cst_18 : f32 to vector<8x128xf32>
    %34 = arith.mulf %33, %32 : vector<8x128xf32>
    %35 = math.tanh %34 : vector<8x128xf32>
    %cst_19 = arith.constant 5.000000e-01 : f32
    %36 = vector.broadcast %cst_19 : f32 to vector<8x128xf32>
    %37 = arith.mulf %36, %35 : vector<8x128xf32>
    %cst_20 = arith.constant 5.000000e-01 : f32
    %38 = vector.broadcast %cst_20 : f32 to vector<8x128xf32>
    %39 = arith.addf %37, %38 : vector<8x128xf32>
    %40 = math.tanh %32 : vector<8x128xf32>
    %c96_i32_21 = arith.constant 96 : i32
    %41 = tpu.dynamic_rotate %39 by %c96_i32_21 dim 1 : vector<8x128xf32>, i32 -> vector<8x128xf32>
    %c64_i32_22 = arith.constant 64 : i32
    %42 = tpu.dynamic_rotate %40 by %c64_i32_22 dim 1 : vector<8x128xf32>, i32 -> vector<8x128xf32>
    %c32_i32_23 = arith.constant 32 : i32
    %43 = tpu.dynamic_rotate %39 by %c32_i32_23 dim 1 : vector<8x128xf32>, i32 -> vector<8x128xf32>
    %44 = arith.mulf %41, %25 : vector<8x128xf32>
    %45 = arith.mulf %39, %42 : vector<8x128xf32>
    %46 = arith.addf %44, %45 : vector<8x128xf32>
    %47 = math.tanh %46 : vector<8x128xf32>
    %48 = arith.mulf %43, %47 : vector<8x128xf32>
    %c8 = arith.constant 8 : index
    %c0_24 = arith.constant 0 : index
    %49 = vector.load %arg14[%c8, %c0_24] : memref<64x128xf32, #tpu.memory_space<vmem>>, vector<8x128xf32>
    tpu.vector_store %arg14[%c8, %c0_24], %48 {strides = array<i32>} : memref<64x128xf32, #tpu.memory_space<vmem>>, vector<8x128xf32>,
    %50 = vector.extract_strided_slice %5 {offsets = [16, 0], sizes = [8, 128], strides = [1, 1]} : vector<64x128xf32> to vector<8x128xf32>
    %c0_25 = arith.constant 0 : index
    %c0_26 = arith.constant 0 : index
    %51 = vector.load %arg2[%c0_25, %c0_26] : memref<128x128xf32, #tpu.memory_space<vmem>>, vector<128x128xf32>
    %cst_27 = arith.constant dense<0.000000e+00> : vector<8x128xf32>
    %52 = tpu.matmul %48, %51, %cst_27 {dimension_numbers = #tpu.dot_dimension_numbers<[1], [0], [0], [1], [0, 0, 1, 1], [], []>} : vector<8x128xf32>, vector<128x128xf32>, vector<8x128xf32> -> vector<8x128xf32>
    %53 = arith.addf %50, %52 : vector<8x128xf32>
    %cst_28 = arith.constant 5.000000e-01 : f32
    %54 = vector.broadcast %cst_28 : f32 to vector<8x128xf32>
    %55 = arith.mulf %54, %53 : vector<8x128xf32>
    %56 = math.tanh %55 : vector<8x128xf32>
    %cst_29 = arith.constant 5.000000e-01 : f32
    %57 = vector.broadcast %cst_29 : f32 to vector<8x128xf32>
    %58 = arith.mulf %57, %56 : vector<8x128xf32>
    %cst_30 = arith.constant 5.000000e-01 : f32
    %59 = vector.broadcast %cst_30 : f32 to vector<8x128xf32>
    %60 = arith.addf %58, %59 : vector<8x128xf32>
    %61 = math.tanh %53 : vector<8x128xf32>
    %c96_i32_31 = arith.constant 96 : i32
    %62 = tpu.dynamic_rotate %60 by %c96_i32_31 dim 1 : vector<8x128xf32>, i32 -> vector<8x128xf32>
    %c64_i32_32 = arith.constant 64 : i32
    %63 = tpu.dynamic_rotate %61 by %c64_i32_32 dim 1 : vector<8x128xf32>, i32 -> vector<8x128xf32>
    %c32_i32_33 = arith.constant 32 : i32
    %64 = tpu.dynamic_rotate %60 by %c32_i32_33 dim 1 : vector<8x128xf32>, i32 -> vector<8x128xf32>
    %65 = arith.mulf %62, %46 : vector<8x128xf32>
    %66 = arith.mulf %60, %63 : vector<8x128xf32>
    %67 = arith.addf %65, %66 : vector<8x128xf32>
    %68 = math.tanh %67 : vector<8x128xf32>
    %69 = arith.mulf %64, %68 : vector<8x128xf32>
    %c16 = arith.constant 16 : index
    %c0_34 = arith.constant 0 : index
    %70 = vector.load %arg14[%c16, %c0_34] : memref<64x128xf32, #tpu.memory_space<vmem>>, vector<8x128xf32>
    tpu.vector_store %arg14[%c16, %c0_34], %69 {strides = array<i32>} : memref<64x128xf32, #tpu.memory_space<vmem>>, vector<8x128xf32>,
    %71 = vector.extract_strided_slice %5 {offsets = [24, 0], sizes = [8, 128], strides = [1, 1]} : vector<64x128xf32> to vector<8x128xf32>
    %c0_35 = arith.constant 0 : index
    %c0_36 = arith.constant 0 : index
    %72 = vector.load %arg2[%c0_35, %c0_36] : memref<128x128xf32, #tpu.memory_space<vmem>>, vector<128x128xf32>
    %cst_37 = arith.constant dense<0.000000e+00> : vector<8x128xf32>
    %73 = tpu.matmul %69, %72, %cst_37 {dimension_numbers = #tpu.dot_dimension_numbers<[1], [0], [0], [1], [0, 0, 1, 1], [], []>} : vector<8x128xf32>, vector<128x128xf32>, vector<8x128xf32> -> vector<8x128xf32>
    %74 = arith.addf %71, %73 : vector<8x128xf32>
    %cst_38 = arith.constant 5.000000e-01 : f32
    %75 = vector.broadcast %cst_38 : f32 to vector<8x128xf32>
    %76 = arith.mulf %75, %74 : vector<8x128xf32>
    %77 = math.tanh %76 : vector<8x128xf32>
    %cst_39 = arith.constant 5.000000e-01 : f32
    %78 = vector.broadcast %cst_39 : f32 to vector<8x128xf32>
    %79 = arith.mulf %78, %77 : vector<8x128xf32>
    %cst_40 = arith.constant 5.000000e-01 : f32
    %80 = vector.broadcast %cst_40 : f32 to vector<8x128xf32>
    %81 = arith.addf %79, %80 : vector<8x128xf32>
    %82 = math.tanh %74 : vector<8x128xf32>
    %c96_i32_41 = arith.constant 96 : i32
    %83 = tpu.dynamic_rotate %81 by %c96_i32_41 dim 1 : vector<8x128xf32>, i32 -> vector<8x128xf32>
    %c64_i32_42 = arith.constant 64 : i32
    %84 = tpu.dynamic_rotate %82 by %c64_i32_42 dim 1 : vector<8x128xf32>, i32 -> vector<8x128xf32>
    %c32_i32_43 = arith.constant 32 : i32
    %85 = tpu.dynamic_rotate %81 by %c32_i32_43 dim 1 : vector<8x128xf32>, i32 -> vector<8x128xf32>
    %86 = arith.mulf %83, %67 : vector<8x128xf32>
    %87 = arith.mulf %81, %84 : vector<8x128xf32>
    %88 = arith.addf %86, %87 : vector<8x128xf32>
    %89 = math.tanh %88 : vector<8x128xf32>
    %90 = arith.mulf %85, %89 : vector<8x128xf32>
    %c24 = arith.constant 24 : index
    %c0_44 = arith.constant 0 : index
    %91 = vector.load %arg14[%c24, %c0_44] : memref<64x128xf32, #tpu.memory_space<vmem>>, vector<8x128xf32>
    tpu.vector_store %arg14[%c24, %c0_44], %90 {strides = array<i32>} : memref<64x128xf32, #tpu.memory_space<vmem>>, vector<8x128xf32>,
    %92 = vector.extract_strided_slice %5 {offsets = [32, 0], sizes = [8, 128], strides = [1, 1]} : vector<64x128xf32> to vector<8x128xf32>
    %c0_45 = arith.constant 0 : index
    %c0_46 = arith.constant 0 : index
    %93 = vector.load %arg2[%c0_45, %c0_46] : memref<128x128xf32, #tpu.memory_space<vmem>>, vector<128x128xf32>
    %cst_47 = arith.constant dense<0.000000e+00> : vector<8x128xf32>
    %94 = tpu.matmul %90, %93, %cst_47 {dimension_numbers = #tpu.dot_dimension_numbers<[1], [0], [0], [1], [0, 0, 1, 1], [], []>} : vector<8x128xf32>, vector<128x128xf32>, vector<8x128xf32> -> vector<8x128xf32>
    %95 = arith.addf %92, %94 : vector<8x128xf32>
    %cst_48 = arith.constant 5.000000e-01 : f32
    %96 = vector.broadcast %cst_48 : f32 to vector<8x128xf32>
    %97 = arith.mulf %96, %95 : vector<8x128xf32>
    %98 = math.tanh %97 : vector<8x128xf32>
    %cst_49 = arith.constant 5.000000e-01 : f32
    %99 = vector.broadcast %cst_49 : f32 to vector<8x128xf32>
    %100 = arith.mulf %99, %98 : vector<8x128xf32>
    %cst_50 = arith.constant 5.000000e-01 : f32
    %101 = vector.broadcast %cst_50 : f32 to vector<8x128xf32>
    %102 = arith.addf %100, %101 : vector<8x128xf32>
    %103 = math.tanh %95 : vector<8x128xf32>
    %c96_i32_51 = arith.constant 96 : i32
    %104 = tpu.dynamic_rotate %102 by %c96_i32_51 dim 1 : vector<8x128xf32>, i32 -> vector<8x128xf32>
    %c64_i32_52 = arith.constant 64 : i32
    %105 = tpu.dynamic_rotate %103 by %c64_i32_52 dim 1 : vector<8x128xf32>, i32 -> vector<8x128xf32>
    %c32_i32_53 = arith.constant 32 : i32
    %106 = tpu.dynamic_rotate %102 by %c32_i32_53 dim 1 : vector<8x128xf32>, i32 -> vector<8x128xf32>
    %107 = arith.mulf %104, %88 : vector<8x128xf32>
    %108 = arith.mulf %102, %105 : vector<8x128xf32>
    %109 = arith.addf %107, %108 : vector<8x128xf32>
    %110 = math.tanh %109 : vector<8x128xf32>
    %111 = arith.mulf %106, %110 : vector<8x128xf32>
    %c32 = arith.constant 32 : index
    %c0_54 = arith.constant 0 : index
    %112 = vector.load %arg14[%c32, %c0_54] : memref<64x128xf32, #tpu.memory_space<vmem>>, vector<8x128xf32>
    tpu.vector_store %arg14[%c32, %c0_54], %111 {strides = array<i32>} : memref<64x128xf32, #tpu.memory_space<vmem>>, vector<8x128xf32>,
    %113 = vector.extract_strided_slice %5 {offsets = [40, 0], sizes = [8, 128], strides = [1, 1]} : vector<64x128xf32> to vector<8x128xf32>
    %c0_55 = arith.constant 0 : index
    %c0_56 = arith.constant 0 : index
    %114 = vector.load %arg2[%c0_55, %c0_56] : memref<128x128xf32, #tpu.memory_space<vmem>>, vector<128x128xf32>
    %cst_57 = arith.constant dense<0.000000e+00> : vector<8x128xf32>
    %115 = tpu.matmul %111, %114, %cst_57 {dimension_numbers = #tpu.dot_dimension_numbers<[1], [0], [0], [1], [0, 0, 1, 1], [], []>} : vector<8x128xf32>, vector<128x128xf32>, vector<8x128xf32> -> vector<8x128xf32>
    %116 = arith.addf %113, %115 : vector<8x128xf32>
    %cst_58 = arith.constant 5.000000e-01 : f32
    %117 = vector.broadcast %cst_58 : f32 to vector<8x128xf32>
    %118 = arith.mulf %117, %116 : vector<8x128xf32>
    %119 = math.tanh %118 : vector<8x128xf32>
    %cst_59 = arith.constant 5.000000e-01 : f32
    %120 = vector.broadcast %cst_59 : f32 to vector<8x128xf32>
    %121 = arith.mulf %120, %119 : vector<8x128xf32>
    %cst_60 = arith.constant 5.000000e-01 : f32
    %122 = vector.broadcast %cst_60 : f32 to vector<8x128xf32>
    %123 = arith.addf %121, %122 : vector<8x128xf32>
    %124 = math.tanh %116 : vector<8x128xf32>
    %c96_i32_61 = arith.constant 96 : i32
    %125 = tpu.dynamic_rotate %123 by %c96_i32_61 dim 1 : vector<8x128xf32>, i32 -> vector<8x128xf32>
    %c64_i32_62 = arith.constant 64 : i32
    %126 = tpu.dynamic_rotate %124 by %c64_i32_62 dim 1 : vector<8x128xf32>, i32 -> vector<8x128xf32>
    %c32_i32_63 = arith.constant 32 : i32
    %127 = tpu.dynamic_rotate %123 by %c32_i32_63 dim 1 : vector<8x128xf32>, i32 -> vector<8x128xf32>
    %128 = arith.mulf %125, %109 : vector<8x128xf32>
    %129 = arith.mulf %123, %126 : vector<8x128xf32>
    %130 = arith.addf %128, %129 : vector<8x128xf32>
    %131 = math.tanh %130 : vector<8x128xf32>
    %132 = arith.mulf %127, %131 : vector<8x128xf32>
    %c40 = arith.constant 40 : index
    %c0_64 = arith.constant 0 : index
    %133 = vector.load %arg14[%c40, %c0_64] : memref<64x128xf32, #tpu.memory_space<vmem>>, vector<8x128xf32>
    tpu.vector_store %arg14[%c40, %c0_64], %132 {strides = array<i32>} : memref<64x128xf32, #tpu.memory_space<vmem>>, vector<8x128xf32>,
    %134 = vector.extract_strided_slice %5 {offsets = [48, 0], sizes = [8, 128], strides = [1, 1]} : vector<64x128xf32> to vector<8x128xf32>
    %c0_65 = arith.constant 0 : index
    %c0_66 = arith.constant 0 : index
    %135 = vector.load %arg2[%c0_65, %c0_66] : memref<128x128xf32, #tpu.memory_space<vmem>>, vector<128x128xf32>
    %cst_67 = arith.constant dense<0.000000e+00> : vector<8x128xf32>
    %136 = tpu.matmul %132, %135, %cst_67 {dimension_numbers = #tpu.dot_dimension_numbers<[1], [0], [0], [1], [0, 0, 1, 1], [], []>} : vector<8x128xf32>, vector<128x128xf32>, vector<8x128xf32> -> vector<8x128xf32>
    %137 = arith.addf %134, %136 : vector<8x128xf32>
    %cst_68 = arith.constant 5.000000e-01 : f32
    %138 = vector.broadcast %cst_68 : f32 to vector<8x128xf32>
    %139 = arith.mulf %138, %137 : vector<8x128xf32>
    %140 = math.tanh %139 : vector<8x128xf32>
    %cst_69 = arith.constant 5.000000e-01 : f32
    %141 = vector.broadcast %cst_69 : f32 to vector<8x128xf32>
    %142 = arith.mulf %141, %140 : vector<8x128xf32>
    %cst_70 = arith.constant 5.000000e-01 : f32
    %143 = vector.broadcast %cst_70 : f32 to vector<8x128xf32>
    %144 = arith.addf %142, %143 : vector<8x128xf32>
    %145 = math.tanh %137 : vector<8x128xf32>
    %c96_i32_71 = arith.constant 96 : i32
    %146 = tpu.dynamic_rotate %144 by %c96_i32_71 dim 1 : vector<8x128xf32>, i32 -> vector<8x128xf32>
    %c64_i32_72 = arith.constant 64 : i32
    %147 = tpu.dynamic_rotate %145 by %c64_i32_72 dim 1 : vector<8x128xf32>, i32 -> vector<8x128xf32>
    %c32_i32_73 = arith.constant 32 : i32
    %148 = tpu.dynamic_rotate %144 by %c32_i32_73 dim 1 : vector<8x128xf32>, i32 -> vector<8x128xf32>
    %149 = arith.mulf %146, %130 : vector<8x128xf32>
    %150 = arith.mulf %144, %147 : vector<8x128xf32>
    %151 = arith.addf %149, %150 : vector<8x128xf32>
    %152 = math.tanh %151 : vector<8x128xf32>
    %153 = arith.mulf %148, %152 : vector<8x128xf32>
    %c48 = arith.constant 48 : index
    %c0_74 = arith.constant 0 : index
    %154 = vector.load %arg14[%c48, %c0_74] : memref<64x128xf32, #tpu.memory_space<vmem>>, vector<8x128xf32>
    tpu.vector_store %arg14[%c48, %c0_74], %153 {strides = array<i32>} : memref<64x128xf32, #tpu.memory_space<vmem>>, vector<8x128xf32>,
    %155 = vector.extract_strided_slice %5 {offsets = [56, 0], sizes = [8, 128], strides = [1, 1]} : vector<64x128xf32> to vector<8x128xf32>
    %c0_75 = arith.constant 0 : index
    %c0_76 = arith.constant 0 : index
    %156 = vector.load %arg2[%c0_75, %c0_76] : memref<128x128xf32, #tpu.memory_space<vmem>>, vector<128x128xf32>
    %cst_77 = arith.constant dense<0.000000e+00> : vector<8x128xf32>
    %157 = tpu.matmul %153, %156, %cst_77 {dimension_numbers = #tpu.dot_dimension_numbers<[1], [0], [0], [1], [0, 0, 1, 1], [], []>} : vector<8x128xf32>, vector<128x128xf32>, vector<8x128xf32> -> vector<8x128xf32>
    %158 = arith.addf %155, %157 : vector<8x128xf32>
    %cst_78 = arith.constant 5.000000e-01 : f32
    %159 = vector.broadcast %cst_78 : f32 to vector<8x128xf32>
    %160 = arith.mulf %159, %158 : vector<8x128xf32>
    %161 = math.tanh %160 : vector<8x128xf32>
    %cst_79 = arith.constant 5.000000e-01 : f32
    %162 = vector.broadcast %cst_79 : f32 to vector<8x128xf32>
    %163 = arith.mulf %162, %161 : vector<8x128xf32>
    %cst_80 = arith.constant 5.000000e-01 : f32
    %164 = vector.broadcast %cst_80 : f32 to vector<8x128xf32>
    %165 = arith.addf %163, %164 : vector<8x128xf32>
    %166 = math.tanh %158 : vector<8x128xf32>
    %c96_i32_81 = arith.constant 96 : i32
    %167 = tpu.dynamic_rotate %165 by %c96_i32_81 dim 1 : vector<8x128xf32>, i32 -> vector<8x128xf32>
    %c64_i32_82 = arith.constant 64 : i32
    %168 = tpu.dynamic_rotate %166 by %c64_i32_82 dim 1 : vector<8x128xf32>, i32 -> vector<8x128xf32>
    %c32_i32_83 = arith.constant 32 : i32
    %169 = tpu.dynamic_rotate %165 by %c32_i32_83 dim 1 : vector<8x128xf32>, i32 -> vector<8x128xf32>
    %170 = arith.mulf %167, %151 : vector<8x128xf32>
    %171 = arith.mulf %165, %168 : vector<8x128xf32>
    %172 = arith.addf %170, %171 : vector<8x128xf32>
    %173 = math.tanh %172 : vector<8x128xf32>
    %174 = arith.mulf %169, %173 : vector<8x128xf32>
    %c56 = arith.constant 56 : index
    %c0_84 = arith.constant 0 : index
    %175 = vector.load %arg14[%c56, %c0_84] : memref<64x128xf32, #tpu.memory_space<vmem>>, vector<8x128xf32>
    tpu.vector_store %arg14[%c56, %c0_84], %174 {strides = array<i32>} : memref<64x128xf32, #tpu.memory_space<vmem>>, vector<8x128xf32>,
    %c0_85 = arith.constant 0 : index
    %c0_86 = arith.constant 0 : index
    %176 = vector.load %arg14[%c0_85, %c0_86] : memref<64x128xf32, #tpu.memory_space<vmem>>, vector<64x128xf32>
    %c0_87 = arith.constant 0 : index
    %c0_88 = arith.constant 0 : index
    %177 = vector.load %arg4[%c0_87, %c0_88] : memref<128x128xf32, #tpu.memory_space<vmem>>, vector<128x128xf32>
    %cst_89 = arith.constant dense<0.000000e+00> : vector<64x128xf32>
    %178 = tpu.matmul %176, %177, %cst_89 {dimension_numbers = #tpu.dot_dimension_numbers<[1], [0], [0], [1], [0, 0, 1, 1], [], []>} : vector<64x128xf32>, vector<128x128xf32>, vector<64x128xf32> -> vector<64x128xf32>
    %c0_90 = arith.constant 0 : index
    %c0_91 = arith.constant 0 : index
    %179 = vector.load %arg6[%c0_90, %c0_91] : memref<1x128xf32, #tpu.memory_space<vmem>>, vector<1x128xf32>
    %180 = vector.broadcast %179 : vector<1x128xf32> to vector<64x128xf32>
    %181 = arith.addf %178, %180 : vector<64x128xf32>
    %cst_92 = arith.constant 0.000000e+00 : f32
    %182 = vector.broadcast %cst_92 : f32 to vector<8x128xf32>
    %cst_93 = arith.constant 0.000000e+00 : f32
    %183 = vector.broadcast %cst_93 : f32 to vector<8x128xf32>
    %184 = vector.extract_strided_slice %181 {offsets = [0, 0], sizes = [8, 128], strides = [1, 1]} : vector<64x128xf32> to vector<8x128xf32>
    %c0_94 = arith.constant 0 : index
    %c0_95 = arith.constant 0 : index
    %185 = vector.load %arg5[%c0_94, %c0_95] : memref<128x128xf32, #tpu.memory_space<vmem>>, vector<128x128xf32>
    %cst_96 = arith.constant dense<0.000000e+00> : vector<8x128xf32>
    %186 = tpu.matmul %182, %185, %cst_96 {dimension_numbers = #tpu.dot_dimension_numbers<[1], [0], [0], [1], [0, 0, 1, 1], [], []>} : vector<8x128xf32>, vector<128x128xf32>, vector<8x128xf32> -> vector<8x128xf32>
    %187 = arith.addf %184, %186 : vector<8x128xf32>
    %cst_97 = arith.constant 5.000000e-01 : f32
    %188 = vector.broadcast %cst_97 : f32 to vector<8x128xf32>
    %189 = arith.mulf %188, %187 : vector<8x128xf32>
    %190 = math.tanh %189 : vector<8x128xf32>
    %cst_98 = arith.constant 5.000000e-01 : f32
    %191 = vector.broadcast %cst_98 : f32 to vector<8x128xf32>
    %192 = arith.mulf %191, %190 : vector<8x128xf32>
    %cst_99 = arith.constant 5.000000e-01 : f32
    %193 = vector.broadcast %cst_99 : f32 to vector<8x128xf32>
    %194 = arith.addf %192, %193 : vector<8x128xf32>
    %195 = math.tanh %187 : vector<8x128xf32>
    %c96_i32_100 = arith.constant 96 : i32
    %196 = tpu.dynamic_rotate %194 by %c96_i32_100 dim 1 : vector<8x128xf32>, i32 -> vector<8x128xf32>
    %c64_i32_101 = arith.constant 64 : i32
    %197 = tpu.dynamic_rotate %195 by %c64_i32_101 dim 1 : vector<8x128xf32>, i32 -> vector<8x128xf32>
    %c32_i32_102 = arith.constant 32 : i32
    %198 = tpu.dynamic_rotate %194 by %c32_i32_102 dim 1 : vector<8x128xf32>, i32 -> vector<8x128xf32>
    %199 = arith.mulf %196, %183 : vector<8x128xf32>
    %200 = arith.mulf %194, %197 : vector<8x128xf32>
    %201 = arith.addf %199, %200 : vector<8x128xf32>
    %202 = math.tanh %201 : vector<8x128xf32>
    %203 = arith.mulf %198, %202 : vector<8x128xf32>
    %c0_103 = arith.constant 0 : index
    %c0_104 = arith.constant 0 : index
    %204 = vector.load %arg14[%c0_103, %c0_104] : memref<64x128xf32, #tpu.memory_space<vmem>>, vector<8x128xf32>
    tpu.vector_store %arg14[%c0_103, %c0_104], %203 {strides = array<i32>} : memref<64x128xf32, #tpu.memory_space<vmem>>, vector<8x128xf32>,
    %205 = vector.extract_strided_slice %181 {offsets = [8, 0], sizes = [8, 128], strides = [1, 1]} : vector<64x128xf32> to vector<8x128xf32>
    %c0_105 = arith.constant 0 : index
    %c0_106 = arith.constant 0 : index
    %206 = vector.load %arg5[%c0_105, %c0_106] : memref<128x128xf32, #tpu.memory_space<vmem>>, vector<128x128xf32>
    %cst_107 = arith.constant dense<0.000000e+00> : vector<8x128xf32>
    %207 = tpu.matmul %203, %206, %cst_107 {dimension_numbers = #tpu.dot_dimension_numbers<[1], [0], [0], [1], [0, 0, 1, 1], [], []>} : vector<8x128xf32>, vector<128x128xf32>, vector<8x128xf32> -> vector<8x128xf32>
    %208 = arith.addf %205, %207 : vector<8x128xf32>
    %cst_108 = arith.constant 5.000000e-01 : f32
    %209 = vector.broadcast %cst_108 : f32 to vector<8x128xf32>
    %210 = arith.mulf %209, %208 : vector<8x128xf32>
    %211 = math.tanh %210 : vector<8x128xf32>
    %cst_109 = arith.constant 5.000000e-01 : f32
    %212 = vector.broadcast %cst_109 : f32 to vector<8x128xf32>
    %213 = arith.mulf %212, %211 : vector<8x128xf32>
    %cst_110 = arith.constant 5.000000e-01 : f32
    %214 = vector.broadcast %cst_110 : f32 to vector<8x128xf32>
    %215 = arith.addf %213, %214 : vector<8x128xf32>
    %216 = math.tanh %208 : vector<8x128xf32>
    %c96_i32_111 = arith.constant 96 : i32
    %217 = tpu.dynamic_rotate %215 by %c96_i32_111 dim 1 : vector<8x128xf32>, i32 -> vector<8x128xf32>
    %c64_i32_112 = arith.constant 64 : i32
    %218 = tpu.dynamic_rotate %216 by %c64_i32_112 dim 1 : vector<8x128xf32>, i32 -> vector<8x128xf32>
    %c32_i32_113 = arith.constant 32 : i32
    %219 = tpu.dynamic_rotate %215 by %c32_i32_113 dim 1 : vector<8x128xf32>, i32 -> vector<8x128xf32>
    %220 = arith.mulf %217, %201 : vector<8x128xf32>
    %221 = arith.mulf %215, %218 : vector<8x128xf32>
    %222 = arith.addf %220, %221 : vector<8x128xf32>
    %223 = math.tanh %222 : vector<8x128xf32>
    %224 = arith.mulf %219, %223 : vector<8x128xf32>
    %c8_114 = arith.constant 8 : index
    %c0_115 = arith.constant 0 : index
    %225 = vector.load %arg14[%c8_114, %c0_115] : memref<64x128xf32, #tpu.memory_space<vmem>>, vector<8x128xf32>
    tpu.vector_store %arg14[%c8_114, %c0_115], %224 {strides = array<i32>} : memref<64x128xf32, #tpu.memory_space<vmem>>, vector<8x128xf32>,
    %226 = vector.extract_strided_slice %181 {offsets = [16, 0], sizes = [8, 128], strides = [1, 1]} : vector<64x128xf32> to vector<8x128xf32>
    %c0_116 = arith.constant 0 : index
    %c0_117 = arith.constant 0 : index
    %227 = vector.load %arg5[%c0_116, %c0_117] : memref<128x128xf32, #tpu.memory_space<vmem>>, vector<128x128xf32>
    %cst_118 = arith.constant dense<0.000000e+00> : vector<8x128xf32>
    %228 = tpu.matmul %224, %227, %cst_118 {dimension_numbers = #tpu.dot_dimension_numbers<[1], [0], [0], [1], [0, 0, 1, 1], [], []>} : vector<8x128xf32>, vector<128x128xf32>, vector<8x128xf32> -> vector<8x128xf32>
    %229 = arith.addf %226, %228 : vector<8x128xf32>
    %cst_119 = arith.constant 5.000000e-01 : f32
    %230 = vector.broadcast %cst_119 : f32 to vector<8x128xf32>
    %231 = arith.mulf %230, %229 : vector<8x128xf32>
    %232 = math.tanh %231 : vector<8x128xf32>
    %cst_120 = arith.constant 5.000000e-01 : f32
    %233 = vector.broadcast %cst_120 : f32 to vector<8x128xf32>
    %234 = arith.mulf %233, %232 : vector<8x128xf32>
    %cst_121 = arith.constant 5.000000e-01 : f32
    %235 = vector.broadcast %cst_121 : f32 to vector<8x128xf32>
    %236 = arith.addf %234, %235 : vector<8x128xf32>
    %237 = math.tanh %229 : vector<8x128xf32>
    %c96_i32_122 = arith.constant 96 : i32
    %238 = tpu.dynamic_rotate %236 by %c96_i32_122 dim 1 : vector<8x128xf32>, i32 -> vector<8x128xf32>
    %c64_i32_123 = arith.constant 64 : i32
    %239 = tpu.dynamic_rotate %237 by %c64_i32_123 dim 1 : vector<8x128xf32>, i32 -> vector<8x128xf32>
    %c32_i32_124 = arith.constant 32 : i32
    %240 = tpu.dynamic_rotate %236 by %c32_i32_124 dim 1 : vector<8x128xf32>, i32 -> vector<8x128xf32>
    %241 = arith.mulf %238, %222 : vector<8x128xf32>
    %242 = arith.mulf %236, %239 : vector<8x128xf32>
    %243 = arith.addf %241, %242 : vector<8x128xf32>
    %244 = math.tanh %243 : vector<8x128xf32>
    %245 = arith.mulf %240, %244 : vector<8x128xf32>
    %c16_125 = arith.constant 16 : index
    %c0_126 = arith.constant 0 : index
    %246 = vector.load %arg14[%c16_125, %c0_126] : memref<64x128xf32, #tpu.memory_space<vmem>>, vector<8x128xf32>
    tpu.vector_store %arg14[%c16_125, %c0_126], %245 {strides = array<i32>} : memref<64x128xf32, #tpu.memory_space<vmem>>, vector<8x128xf32>,
    %247 = vector.extract_strided_slice %181 {offsets = [24, 0], sizes = [8, 128], strides = [1, 1]} : vector<64x128xf32> to vector<8x128xf32>
    %c0_127 = arith.constant 0 : index
    %c0_128 = arith.constant 0 : index
    %248 = vector.load %arg5[%c0_127, %c0_128] : memref<128x128xf32, #tpu.memory_space<vmem>>, vector<128x128xf32>
    %cst_129 = arith.constant dense<0.000000e+00> : vector<8x128xf32>
    %249 = tpu.matmul %245, %248, %cst_129 {dimension_numbers = #tpu.dot_dimension_numbers<[1], [0], [0], [1], [0, 0, 1, 1], [], []>} : vector<8x128xf32>, vector<128x128xf32>, vector<8x128xf32> -> vector<8x128xf32>
    %250 = arith.addf %247, %249 : vector<8x128xf32>
    %cst_130 = arith.constant 5.000000e-01 : f32
    %251 = vector.broadcast %cst_130 : f32 to vector<8x128xf32>
    %252 = arith.mulf %251, %250 : vector<8x128xf32>
    %253 = math.tanh %252 : vector<8x128xf32>
    %cst_131 = arith.constant 5.000000e-01 : f32
    %254 = vector.broadcast %cst_131 : f32 to vector<8x128xf32>
    %255 = arith.mulf %254, %253 : vector<8x128xf32>
    %cst_132 = arith.constant 5.000000e-01 : f32
    %256 = vector.broadcast %cst_132 : f32 to vector<8x128xf32>
    %257 = arith.addf %255, %256 : vector<8x128xf32>
    %258 = math.tanh %250 : vector<8x128xf32>
    %c96_i32_133 = arith.constant 96 : i32
    %259 = tpu.dynamic_rotate %257 by %c96_i32_133 dim 1 : vector<8x128xf32>, i32 -> vector<8x128xf32>
    %c64_i32_134 = arith.constant 64 : i32
    %260 = tpu.dynamic_rotate %258 by %c64_i32_134 dim 1 : vector<8x128xf32>, i32 -> vector<8x128xf32>
    %c32_i32_135 = arith.constant 32 : i32
    %261 = tpu.dynamic_rotate %257 by %c32_i32_135 dim 1 : vector<8x128xf32>, i32 -> vector<8x128xf32>
    %262 = arith.mulf %259, %243 : vector<8x128xf32>
    %263 = arith.mulf %257, %260 : vector<8x128xf32>
    %264 = arith.addf %262, %263 : vector<8x128xf32>
    %265 = math.tanh %264 : vector<8x128xf32>
    %266 = arith.mulf %261, %265 : vector<8x128xf32>
    %c24_136 = arith.constant 24 : index
    %c0_137 = arith.constant 0 : index
    %267 = vector.load %arg14[%c24_136, %c0_137] : memref<64x128xf32, #tpu.memory_space<vmem>>, vector<8x128xf32>
    tpu.vector_store %arg14[%c24_136, %c0_137], %266 {strides = array<i32>} : memref<64x128xf32, #tpu.memory_space<vmem>>, vector<8x128xf32>,
    %268 = vector.extract_strided_slice %181 {offsets = [32, 0], sizes = [8, 128], strides = [1, 1]} : vector<64x128xf32> to vector<8x128xf32>
    %c0_138 = arith.constant 0 : index
    %c0_139 = arith.constant 0 : index
    %269 = vector.load %arg5[%c0_138, %c0_139] : memref<128x128xf32, #tpu.memory_space<vmem>>, vector<128x128xf32>
    %cst_140 = arith.constant dense<0.000000e+00> : vector<8x128xf32>
    %270 = tpu.matmul %266, %269, %cst_140 {dimension_numbers = #tpu.dot_dimension_numbers<[1], [0], [0], [1], [0, 0, 1, 1], [], []>} : vector<8x128xf32>, vector<128x128xf32>, vector<8x128xf32> -> vector<8x128xf32>
    %271 = arith.addf %268, %270 : vector<8x128xf32>
    %cst_141 = arith.constant 5.000000e-01 : f32
    %272 = vector.broadcast %cst_141 : f32 to vector<8x128xf32>
    %273 = arith.mulf %272, %271 : vector<8x128xf32>
    %274 = math.tanh %273 : vector<8x128xf32>
    %cst_142 = arith.constant 5.000000e-01 : f32
    %275 = vector.broadcast %cst_142 : f32 to vector<8x128xf32>
    %276 = arith.mulf %275, %274 : vector<8x128xf32>
    %cst_143 = arith.constant 5.000000e-01 : f32
    %277 = vector.broadcast %cst_143 : f32 to vector<8x128xf32>
    %278 = arith.addf %276, %277 : vector<8x128xf32>
    %279 = math.tanh %271 : vector<8x128xf32>
    %c96_i32_144 = arith.constant 96 : i32
    %280 = tpu.dynamic_rotate %278 by %c96_i32_144 dim 1 : vector<8x128xf32>, i32 -> vector<8x128xf32>
    %c64_i32_145 = arith.constant 64 : i32
    %281 = tpu.dynamic_rotate %279 by %c64_i32_145 dim 1 : vector<8x128xf32>, i32 -> vector<8x128xf32>
    %c32_i32_146 = arith.constant 32 : i32
    %282 = tpu.dynamic_rotate %278 by %c32_i32_146 dim 1 : vector<8x128xf32>, i32 -> vector<8x128xf32>
    %283 = arith.mulf %280, %264 : vector<8x128xf32>
    %284 = arith.mulf %278, %281 : vector<8x128xf32>
    %285 = arith.addf %283, %284 : vector<8x128xf32>
    %286 = math.tanh %285 : vector<8x128xf32>
    %287 = arith.mulf %282, %286 : vector<8x128xf32>
    %c32_147 = arith.constant 32 : index
    %c0_148 = arith.constant 0 : index
    %288 = vector.load %arg14[%c32_147, %c0_148] : memref<64x128xf32, #tpu.memory_space<vmem>>, vector<8x128xf32>
    tpu.vector_store %arg14[%c32_147, %c0_148], %287 {strides = array<i32>} : memref<64x128xf32, #tpu.memory_space<vmem>>, vector<8x128xf32>,
    %289 = vector.extract_strided_slice %181 {offsets = [40, 0], sizes = [8, 128], strides = [1, 1]} : vector<64x128xf32> to vector<8x128xf32>
    %c0_149 = arith.constant 0 : index
    %c0_150 = arith.constant 0 : index
    %290 = vector.load %arg5[%c0_149, %c0_150] : memref<128x128xf32, #tpu.memory_space<vmem>>, vector<128x128xf32>
    %cst_151 = arith.constant dense<0.000000e+00> : vector<8x128xf32>
    %291 = tpu.matmul %287, %290, %cst_151 {dimension_numbers = #tpu.dot_dimension_numbers<[1], [0], [0], [1], [0, 0, 1, 1], [], []>} : vector<8x128xf32>, vector<128x128xf32>, vector<8x128xf32> -> vector<8x128xf32>
    %292 = arith.addf %289, %291 : vector<8x128xf32>
    %cst_152 = arith.constant 5.000000e-01 : f32
    %293 = vector.broadcast %cst_152 : f32 to vector<8x128xf32>
    %294 = arith.mulf %293, %292 : vector<8x128xf32>
    %295 = math.tanh %294 : vector<8x128xf32>
    %cst_153 = arith.constant 5.000000e-01 : f32
    %296 = vector.broadcast %cst_153 : f32 to vector<8x128xf32>
    %297 = arith.mulf %296, %295 : vector<8x128xf32>
    %cst_154 = arith.constant 5.000000e-01 : f32
    %298 = vector.broadcast %cst_154 : f32 to vector<8x128xf32>
    %299 = arith.addf %297, %298 : vector<8x128xf32>
    %300 = math.tanh %292 : vector<8x128xf32>
    %c96_i32_155 = arith.constant 96 : i32
    %301 = tpu.dynamic_rotate %299 by %c96_i32_155 dim 1 : vector<8x128xf32>, i32 -> vector<8x128xf32>
    %c64_i32_156 = arith.constant 64 : i32
    %302 = tpu.dynamic_rotate %300 by %c64_i32_156 dim 1 : vector<8x128xf32>, i32 -> vector<8x128xf32>
    %c32_i32_157 = arith.constant 32 : i32
    %303 = tpu.dynamic_rotate %299 by %c32_i32_157 dim 1 : vector<8x128xf32>, i32 -> vector<8x128xf32>
    %304 = arith.mulf %301, %285 : vector<8x128xf32>
    %305 = arith.mulf %299, %302 : vector<8x128xf32>
    %306 = arith.addf %304, %305 : vector<8x128xf32>
    %307 = math.tanh %306 : vector<8x128xf32>
    %308 = arith.mulf %303, %307 : vector<8x128xf32>
    %c40_158 = arith.constant 40 : index
    %c0_159 = arith.constant 0 : index
    %309 = vector.load %arg14[%c40_158, %c0_159] : memref<64x128xf32, #tpu.memory_space<vmem>>, vector<8x128xf32>
    tpu.vector_store %arg14[%c40_158, %c0_159], %308 {strides = array<i32>} : memref<64x128xf32, #tpu.memory_space<vmem>>, vector<8x128xf32>,
    %310 = vector.extract_strided_slice %181 {offsets = [48, 0], sizes = [8, 128], strides = [1, 1]} : vector<64x128xf32> to vector<8x128xf32>
    %c0_160 = arith.constant 0 : index
    %c0_161 = arith.constant 0 : index
    %311 = vector.load %arg5[%c0_160, %c0_161] : memref<128x128xf32, #tpu.memory_space<vmem>>, vector<128x128xf32>
    %cst_162 = arith.constant dense<0.000000e+00> : vector<8x128xf32>
    %312 = tpu.matmul %308, %311, %cst_162 {dimension_numbers = #tpu.dot_dimension_numbers<[1], [0], [0], [1], [0, 0, 1, 1], [], []>} : vector<8x128xf32>, vector<128x128xf32>, vector<8x128xf32> -> vector<8x128xf32>
    %313 = arith.addf %310, %312 : vector<8x128xf32>
    %cst_163 = arith.constant 5.000000e-01 : f32
    %314 = vector.broadcast %cst_163 : f32 to vector<8x128xf32>
    %315 = arith.mulf %314, %313 : vector<8x128xf32>
    %316 = math.tanh %315 : vector<8x128xf32>
    %cst_164 = arith.constant 5.000000e-01 : f32
    %317 = vector.broadcast %cst_164 : f32 to vector<8x128xf32>
    %318 = arith.mulf %317, %316 : vector<8x128xf32>
    %cst_165 = arith.constant 5.000000e-01 : f32
    %319 = vector.broadcast %cst_165 : f32 to vector<8x128xf32>
    %320 = arith.addf %318, %319 : vector<8x128xf32>
    %321 = math.tanh %313 : vector<8x128xf32>
    %c96_i32_166 = arith.constant 96 : i32
    %322 = tpu.dynamic_rotate %320 by %c96_i32_166 dim 1 : vector<8x128xf32>, i32 -> vector<8x128xf32>
    %c64_i32_167 = arith.constant 64 : i32
    %323 = tpu.dynamic_rotate %321 by %c64_i32_167 dim 1 : vector<8x128xf32>, i32 -> vector<8x128xf32>
    %c32_i32_168 = arith.constant 32 : i32
    %324 = tpu.dynamic_rotate %320 by %c32_i32_168 dim 1 : vector<8x128xf32>, i32 -> vector<8x128xf32>
    %325 = arith.mulf %322, %306 : vector<8x128xf32>
    %326 = arith.mulf %320, %323 : vector<8x128xf32>
    %327 = arith.addf %325, %326 : vector<8x128xf32>
    %328 = math.tanh %327 : vector<8x128xf32>
    %329 = arith.mulf %324, %328 : vector<8x128xf32>
    %c48_169 = arith.constant 48 : index
    %c0_170 = arith.constant 0 : index
    %330 = vector.load %arg14[%c48_169, %c0_170] : memref<64x128xf32, #tpu.memory_space<vmem>>, vector<8x128xf32>
    tpu.vector_store %arg14[%c48_169, %c0_170], %329 {strides = array<i32>} : memref<64x128xf32, #tpu.memory_space<vmem>>, vector<8x128xf32>,
    %331 = vector.extract_strided_slice %181 {offsets = [56, 0], sizes = [8, 128], strides = [1, 1]} : vector<64x128xf32> to vector<8x128xf32>
    %c0_171 = arith.constant 0 : index
    %c0_172 = arith.constant 0 : index
    %332 = vector.load %arg5[%c0_171, %c0_172] : memref<128x128xf32, #tpu.memory_space<vmem>>, vector<128x128xf32>
    %cst_173 = arith.constant dense<0.000000e+00> : vector<8x128xf32>
    %333 = tpu.matmul %329, %332, %cst_173 {dimension_numbers = #tpu.dot_dimension_numbers<[1], [0], [0], [1], [0, 0, 1, 1], [], []>} : vector<8x128xf32>, vector<128x128xf32>, vector<8x128xf32> -> vector<8x128xf32>
    %334 = arith.addf %331, %333 : vector<8x128xf32>
    %cst_174 = arith.constant 5.000000e-01 : f32
    %335 = vector.broadcast %cst_174 : f32 to vector<8x128xf32>
    %336 = arith.mulf %335, %334 : vector<8x128xf32>
    %337 = math.tanh %336 : vector<8x128xf32>
    %cst_175 = arith.constant 5.000000e-01 : f32
    %338 = vector.broadcast %cst_175 : f32 to vector<8x128xf32>
    %339 = arith.mulf %338, %337 : vector<8x128xf32>
    %cst_176 = arith.constant 5.000000e-01 : f32
    %340 = vector.broadcast %cst_176 : f32 to vector<8x128xf32>
    %341 = arith.addf %339, %340 : vector<8x128xf32>
    %342 = math.tanh %334 : vector<8x128xf32>
    %c96_i32_177 = arith.constant 96 : i32
    %343 = tpu.dynamic_rotate %341 by %c96_i32_177 dim 1 : vector<8x128xf32>, i32 -> vector<8x128xf32>
    %c64_i32_178 = arith.constant 64 : i32
    %344 = tpu.dynamic_rotate %342 by %c64_i32_178 dim 1 : vector<8x128xf32>, i32 -> vector<8x128xf32>
    %c32_i32_179 = arith.constant 32 : i32
    %345 = tpu.dynamic_rotate %341 by %c32_i32_179 dim 1 : vector<8x128xf32>, i32 -> vector<8x128xf32>
    %346 = arith.mulf %343, %327 : vector<8x128xf32>
    %347 = arith.mulf %341, %344 : vector<8x128xf32>
    %348 = arith.addf %346, %347 : vector<8x128xf32>
    %349 = math.tanh %348 : vector<8x128xf32>
    %350 = arith.mulf %345, %349 : vector<8x128xf32>
    %c56_180 = arith.constant 56 : index
    %c0_181 = arith.constant 0 : index
    %351 = vector.load %arg14[%c56_180, %c0_181] : memref<64x128xf32, #tpu.memory_space<vmem>>, vector<8x128xf32>
    tpu.vector_store %arg14[%c56_180, %c0_181], %350 {strides = array<i32>} : memref<64x128xf32, #tpu.memory_space<vmem>>, vector<8x128xf32>,
    %c0_182 = arith.constant 0 : index
    %c0_183 = arith.constant 0 : index
    %352 = vector.load %arg14[%c0_182, %c0_183] : memref<64x128xf32, #tpu.memory_space<vmem>>, vector<64x128xf32>
    %cst_184 = arith.constant 0.000000e+00 : f32
    %353 = vector.broadcast %cst_184 : f32 to vector<64x128xf32>
    %354 = arith.maximumf %352, %353 : vector<64x128xf32>
    %c0_185 = arith.constant 0 : index
    %c0_186 = arith.constant 0 : index
    %355 = vector.load %arg7[%c0_185, %c0_186] : memref<128x128xf32, #tpu.memory_space<vmem>>, vector<128x128xf32>
    %cst_187 = arith.constant dense<0.000000e+00> : vector<64x128xf32>
    %356 = tpu.matmul %354, %355, %cst_187 {dimension_numbers = #tpu.dot_dimension_numbers<[1], [0], [0], [1], [0, 0, 1, 1], [], []>} : vector<64x128xf32>, vector<128x128xf32>, vector<64x128xf32> -> vector<64x128xf32>
    %c0_188 = arith.constant 0 : index
    %c0_189 = arith.constant 0 : index
    %357 = vector.load %arg8[%c0_188, %c0_189] : memref<1x128xf32, #tpu.memory_space<vmem>>, vector<1x128xf32>
    %358 = vector.broadcast %357 : vector<1x128xf32> to vector<64x128xf32>
    %359 = arith.addf %356, %358 : vector<64x128xf32>
    %cst_190 = arith.constant 0.000000e+00 : f32
    %360 = vector.broadcast %cst_190 : f32 to vector<64x128xf32>
    %361 = arith.maximumf %359, %360 : vector<64x128xf32>
    %c0_191 = arith.constant 0 : index
    %c0_192 = arith.constant 0 : index
    %362 = vector.load %arg9[%c0_191, %c0_192] : memref<128x128xf32, #tpu.memory_space<vmem>>, vector<128x128xf32>
    %cst_193 = arith.constant dense<0.000000e+00> : vector<64x128xf32>
    %363 = tpu.matmul %361, %362, %cst_193 {dimension_numbers = #tpu.dot_dimension_numbers<[1], [0], [0], [1], [0, 0, 1, 1], [], []>} : vector<64x128xf32>, vector<128x128xf32>, vector<64x128xf32> -> vector<64x128xf32>
    %c0_194 = arith.constant 0 : index
    %c0_195 = arith.constant 0 : index
    %364 = vector.load %arg10[%c0_194, %c0_195] : memref<1x128xf32, #tpu.memory_space<vmem>>, vector<1x128xf32>
    %365 = vector.broadcast %364 : vector<1x128xf32> to vector<64x128xf32>
    %366 = arith.addf %363, %365 : vector<64x128xf32>
    %cst_196 = arith.constant 0.000000e+00 : f32
    %367 = vector.broadcast %cst_196 : f32 to vector<64x128xf32>
    %368 = arith.maximumf %366, %367 : vector<64x128xf32>
    %c0_197 = arith.constant 0 : index
    %c0_198 = arith.constant 0 : index
    %369 = vector.load %arg11[%c0_197, %c0_198] : memref<128x128xf32, #tpu.memory_space<vmem>>, vector<128x128xf32>
    %cst_199 = arith.constant dense<0.000000e+00> : vector<64x128xf32>
    %370 = tpu.matmul %368, %369, %cst_199 {dimension_numbers = #tpu.dot_dimension_numbers<[1], [0], [0], [1], [0, 0, 1, 1], [], []>} : vector<64x128xf32>, vector<128x128xf32>, vector<64x128xf32> -> vector<64x128xf32>
    %c0_200 = arith.constant 0 : index
    %c0_201 = arith.constant 0 : index
    %371 = vector.load %arg12[%c0_200, %c0_201] : memref<1x128xf32, #tpu.memory_space<vmem>>, vector<1x128xf32>
    %372 = vector.broadcast %371 : vector<1x128xf32> to vector<64x128xf32>
    %373 = arith.addf %370, %372 : vector<64x128xf32>
    %c0_202 = arith.constant 0 : index
    %c0_203 = arith.constant 0 : index
    %374 = vector.load %arg13[%c0_202, %c0_203] : memref<64x128xf32, #tpu.memory_space<vmem>>, vector<64x128xf32>
    tpu.vector_store %arg13[%c0_202, %c0_203], %373 {strides = array<i32>} : memref<64x128xf32, #tpu.memory_space<vmem>>, vector<64x128xf32>,
    return
  }
}

</mosaic_0001>

<llo_original>
// kernel: forward.1
$region0: #{forward.1}
  #allocation0 [shape = 'u32[]', space=smem, size = 0x4, offset = 0x4, fixed_abs, tag = 'smem constant byte address 0x4 - core index']
  #allocation1 [shape = 'u32[144,128]{1,0:T(1,128)}', space=vmem, size = 0x12000, scoped, tag = 'internal scratch']
  #allocation2 [shape = 'f32[64,128]{1,0:T(8,128)}', space=vmem, size = 0x8000, scoped, tag = 'scratch operand']
  %s0 = inlined_call_operand.vmem [shape: f32[64,128], index: 0, kind: input, shape index: {}]
  %s1 = inlined_call_operand.hbm [shape: f32[128,128], index: 1, kind: input, shape index: {}]
  %s2 = inlined_call_operand.hbm [shape: f32[128,128], index: 2, kind: input, shape index: {}]
  %s3 = inlined_call_operand.vmem [shape: f32[1,128], index: 3, kind: input, shape index: {}]
  %s4 = inlined_call_operand.hbm [shape: f32[128,128], index: 4, kind: input, shape index: {}]
  %s5 = inlined_call_operand.hbm [shape: f32[128,128], index: 5, kind: input, shape index: {}]
  %s6 = inlined_call_operand.vmem [shape: f32[1,128], index: 6, kind: input, shape index: {}]
  %s7 = inlined_call_operand.vmem [shape: f32[128,128], index: 7, kind: input, shape index: {}]
  %s8 = inlined_call_operand.hbm [shape: f32[1,128], index: 8, kind: input, shape index: {}]
  %s9 = inlined_call_operand.hbm [shape: f32[128,128], index: 9, kind: input, shape index: {}]
  %s10 = inlined_call_operand.hbm [shape: f32[1,128], index: 10, kind: input, shape index: {}]
  %s11 = inlined_call_operand.hbm [shape: f32[128,128], index: 11, kind: input, shape index: {}]
  %s12 = inlined_call_operand.vmem [shape: f32[1,128], index: 12, kind: input, shape index: {}]
  %s13 = inlined_call_operand.vmem [shape: f32[64,128], index: 13, kind: output, shape index: {}]
  %s14 = sld [smem:[#allocation0]]
  $region94: #{forward.1} parent=0
    _
  %s16 = ssub.s32 1, %s14
  %s17 = scalar_select 0, %s16, %s14
  $region1: #{forward.1} parent=0
    #allocation3 [shape = 'u8[65536]{0}', space=vmem, size = 0x10000, scoped, tag = 'input window, operand 1, single buffered']
    #allocation4 [shape = 's32[1]{0}', space=sflag, size = 0x4, scoped, tag = 'scoped memory for forward.1']
    #allocation5 [shape = 'u8[65536]{0}', space=vmem, size = 0x10000, scoped, tag = 'input window, operand 2, single buffered']
    #allocation6 [shape = 's32[1]{0}', space=sflag, size = 0x4, scoped, tag = 'scoped memory for forward.1']
    #allocation7 [shape = 'u8[65536]{0}', space=vmem, size = 0x10000, scoped, tag = 'input window, operand 4, single buffered']
    #allocation8 [shape = 'u8[65536]{0}', space=vmem, size = 0x10000, scoped, tag = 'input window, operand 5, single buffered']
    #allocation9 [shape = 's32[1]{0}', space=sflag, size = 0x4, scoped, tag = 'scoped memory for forward.1']
    #allocation10 [shape = 'u8[512]{0}', space=vmem, size = 0x400, scoped, tag = 'input window, operand 8, single buffered']
    #allocation11 [shape = 'u8[65536]{0}', space=vmem, size = 0x10000, scoped, tag = 'input window, operand 9, single buffered']
    #allocation12 [shape = 's32[1]{0}', space=sflag, size = 0x4, scoped, tag = 'scoped memory for forward.1']
    #allocation13 [shape = 'u8[512]{0}', space=vmem, size = 0x400, scoped, tag = 'input window, operand 10, single buffered']
    #allocation14 [shape = 'u8[65536]{0}', space=vmem, size = 0x10000, scoped, tag = 'input window, operand 11, single buffered']
    #allocation15 [shape = 's32[1]{0}', space=sflag, size = 0x4, scoped, tag = 'scoped memory for forward.1']
    %18 = vsyncpa [#allocation4], 0
    %19 = vsyncpa [#allocation6], 0
    %20 = vsyncpa [#allocation9], 0
    %21 = vsyncpa [#allocation12], 0
    %22 = vsyncpa [#allocation15], 0
    // Predicated region
    $region2: #{forward.1} parent=1 // pred_check
      _
    $region3: #{forward.1} parent=1 // pred_check_branch
      %24 = sbr.rel (0) target = $region5
    $region4: #{forward.1} parent=1 // pred_region
      _
    $region5: #{forward.1} parent=1 // pred_fallthru
      _
    // Predicated region
    $region6: #{forward.1} parent=1 // pred_check
      _
    $region7: #{forward.1} parent=1 // pred_check_branch
      %26 = sbr.rel (0) target = $region9
    $region8: #{forward.1} parent=1 // pred_region
      %s28 = ssub.s32 2048, 2048
      %29 = vsyncadd [#allocation4], %s28
      %s30 = sshll.u32 [#allocation3], 4
      %s31 = int_to_ptr.vmem [resolvable:$true] %s30
      %36 = dma.hbm_to_vmem [thread:$0]  %s1, 2048, %s31, [#allocation4], 128, 128, 8
    $region9: #{forward.1} parent=1 // pred_fallthru
      _
    // Predicated region
    $region10: #{forward.1} parent=1 // pred_check
      _
    $region11: #{forward.1} parent=1 // pred_check_branch
      %38 = sbr.rel (0) target = $region13
    $region12: #{forward.1} parent=1 // pred_region
      %s40 = ssub.s32 2048, 2048
      %41 = vsyncadd [#allocation6], %s40
      %s42 = sshll.u32 [#allocation5], 4
      %s43 = int_to_ptr.vmem [resolvable:$true] %s42
      %48 = dma.hbm_to_vmem [thread:$0]  %s2, 2048, %s43, [#allocation6], 128, 128, 8
    $region13: #{forward.1} parent=1 // pred_fallthru
      _
    // Predicated region
    $region14: #{forward.1} parent=1 // pred_check
      _
    $region15: #{forward.1} parent=1 // pred_check_branch
      %50 = sbr.rel (0) target = $region17
    $region16: #{forward.1} parent=1 // pred_region
      _
    $region17: #{forward.1} parent=1 // pred_fallthru
      _
    // Predicated region
    $region18: #{forward.1} parent=1 // pred_check
      _
    $region19: #{forward.1} parent=1 // pred_check_branch
      %52 = sbr.rel (0) target = $region21
    $region20: #{forward.1} parent=1 // pred_region
      %s54 = ssub.s32 2048, 2048
      %55 = vsyncadd [#allocation6], %s54
      %s56 = sshll.u32 [#allocation7], 4
      %s57 = int_to_ptr.vmem [resolvable:$true] %s56
      %62 = dma.hbm_to_vmem [thread:$0]  %s4, 2048, %s57, [#allocation6], 128, 128, 8
    $region21: #{forward.1} parent=1 // pred_fallthru
      _
    // Predicated region
    $region22: #{forward.1} parent=1 // pred_check
      _
    $region23: #{forward.1} parent=1 // pred_check_branch
      %64 = sbr.rel (0) target = $region25
    $region24: #{forward.1} parent=1 // pred_region
      %s66 = ssub.s32 2048, 2048
      %67 = vsyncadd [#allocation9], %s66
      %s68 = sshll.u32 [#allocation8], 4
      %s69 = int_to_ptr.vmem [resolvable:$true] %s68
      %74 = dma.hbm_to_vmem [thread:$0]  %s5, 2048, %s69, [#allocation9], 128, 128, 8
    $region25: #{forward.1} parent=1 // pred_fallthru
      _
    // Predicated region
    $region26: #{forward.1} parent=1 // pred_check
      _
    $region27: #{forward.1} parent=1 // pred_check_branch
      %76 = sbr.rel (0) target = $region29
    $region28: #{forward.1} parent=1 // pred_region
      _
    $region29: #{forward.1} parent=1 // pred_fallthru
      _
    // Predicated region
    $region30: #{forward.1} parent=1 // pred_check
      _
    $region31: #{forward.1} parent=1 // pred_check_branch
      %78 = sbr.rel (0) target = $region33
    $region32: #{forward.1} parent=1 // pred_region
      _
    $region33: #{forward.1} parent=1 // pred_fallthru
      _
    // Predicated region
    $region34: #{forward.1} parent=1 // pred_check
      _
    $region35: #{forward.1} parent=1 // pred_check_branch
      %80 = sbr.rel (0) target = $region37
    $region36: #{forward.1} parent=1 // pred_region
      %s82 = ssub.s32 16, 16
      %83 = vsyncadd [#allocation9], %s82
      %s85 = sshll.u32 [#allocation10], 4
      %s86 = int_to_ptr.vmem [resolvable:$true] %s85
      %88 = dma.hbm_to_vmem [thread:$0]  %s8, 16, %s86, [#allocation9]
    $region37: #{forward.1} parent=1 // pred_fallthru
      _
    // Predicated region
    $region38: #{forward.1} parent=1 // pred_check
      _
    $region39: #{forward.1} parent=1 // pred_check_branch
      %90 = sbr.rel (0) target = $region41
    $region40: #{forward.1} parent=1 // pred_region
      %s92 = ssub.s32 2048, 2048
      %93 = vsyncadd [#allocation12], %s92
      %s94 = sshll.u32 [#allocation11], 4
      %s95 = int_to_ptr.vmem [resolvable:$true] %s94
      %100 = dma.hbm_to_vmem [thread:$0]  %s9, 2048, %s95, [#allocation12], 128, 128, 8
    $region41: #{forward.1} parent=1 // pred_fallthru
      _
    // Predicated region
    $region42: #{forward.1} parent=1 // pred_check
      _
    $region43: #{forward.1} parent=1 // pred_check_branch
      %102 = sbr.rel (0) target = $region45
    $region44: #{forward.1} parent=1 // pred_region
      %s104 = ssub.s32 16, 16
      %105 = vsyncadd [#allocation12], %s104
      %s107 = sshll.u32 [#allocation13], 4
      %s108 = int_to_ptr.vmem [resolvable:$true] %s107
      %110 = dma.hbm_to_vmem [thread:$0]  %s10, 16, %s108, [#allocation12]
    $region45: #{forward.1} parent=1 // pred_fallthru
      _
    // Predicated region
    $region46: #{forward.1} parent=1 // pred_check
      _
    $region47: #{forward.1} parent=1 // pred_check_branch
      %112 = sbr.rel (0) target = $region49
    $region48: #{forward.1} parent=1 // pred_region
      %s114 = ssub.s32 2048, 2048
      %115 = vsyncadd [#allocation15], %s114
      %s116 = sshll.u32 [#allocation14], 4
      %s117 = int_to_ptr.vmem [resolvable:$true] %s116
      %122 = dma.hbm_to_vmem [thread:$0]  %s11, 2048, %s117, [#allocation15], 128, 128, 8
    $region49: #{forward.1} parent=1 // pred_fallthru
      _
    // Predicated region
    $region50: #{forward.1} parent=1 // pred_check
      _
    $region51: #{forward.1} parent=1 // pred_check_branch
      %124 = sbr.rel (0) target = $region53
    $region52: #{forward.1} parent=1 // pred_region
      _
    $region53: #{forward.1} parent=1 // pred_fallthru
      _
    // Predicated region
    $region54: #{forward.1} parent=1 // pred_check
      _
    $region55: #{forward.1} parent=1 // pred_check_branch
      %126 = sbr.rel (0) target = $region57
    $region56: #{forward.1} parent=1 // pred_region
      %127 = dma.done [#allocation4], 2048
    $region57: #{forward.1} parent=1 // pred_fallthru
      _
    // Predicated region
    $region58: #{forward.1} parent=1 // pred_check
      _
    $region59: #{forward.1} parent=1 // pred_check_branch
      %129 = sbr.rel (0) target = $region61
    $region60: #{forward.1} parent=1 // pred_region
      %130 = dma.done [#allocation6], 2048
    $region61: #{forward.1} parent=1 // pred_fallthru
      _
    // Predicated region
    $region62: #{forward.1} parent=1 // pred_check
      _
    $region63: #{forward.1} parent=1 // pred_check_branch
      %132 = sbr.rel (0) target = $region65
    $region64: #{forward.1} parent=1 // pred_region
      %133 = dma.done [#allocation6], 2048
    $region65: #{forward.1} parent=1 // pred_fallthru
      _
    // Predicated region
    $region66: #{forward.1} parent=1 // pred_check
      _
    $region67: #{forward.1} parent=1 // pred_check_branch
      %135 = sbr.rel (0) target = $region69
    $region68: #{forward.1} parent=1 // pred_region
      %136 = dma.done [#allocation9], 2048
    $region69: #{forward.1} parent=1 // pred_fallthru
      _
    // Predicated region
    $region70: #{forward.1} parent=1 // pred_check
      _
    $region71: #{forward.1} parent=1 // pred_check_branch
      %138 = sbr.rel (0) target = $region73
    $region72: #{forward.1} parent=1 // pred_region
      %139 = dma.done [#allocation9], 16
    $region73: #{forward.1} parent=1 // pred_fallthru
      _
    // Predicated region
    $region74: #{forward.1} parent=1 // pred_check
      _
    $region75: #{forward.1} parent=1 // pred_check_branch
      %141 = sbr.rel (0) target = $region77
    $region76: #{forward.1} parent=1 // pred_region
      %142 = dma.done [#allocation12], 2048
    $region77: #{forward.1} parent=1 // pred_fallthru
      _
    // Predicated region
    $region78: #{forward.1} parent=1 // pred_check
      _
    $region79: #{forward.1} parent=1 // pred_check_branch
      %144 = sbr.rel (0) target = $region81
    $region80: #{forward.1} parent=1 // pred_region
      %145 = dma.done [#allocation12], 16
    $region81: #{forward.1} parent=1 // pred_fallthru
      _
    // Predicated region
    $region82: #{forward.1} parent=1 // pred_check
      _
    $region83: #{forward.1} parent=1 // pred_check_branch
      %147 = sbr.rel (0) target = $region85
    $region84: #{forward.1} parent=1 // pred_region
      %148 = dma.done [#allocation15], 2048
    $region85: #{forward.1} parent=1 // pred_fallthru
      _
    %v149 = vld [vmem:[%s0] sm:$0xff]
    %v150 = vld [vmem:[%s0 + $0x8] sm:$0xff]
    %v151 = vld [vmem:[%s0 + $0x10] sm:$0xff]
    %v152 = vld [vmem:[%s0 + $0x18] sm:$0xff]
    %v153 = vld [vmem:[%s0 + $0x20] sm:$0xff]
    %v154 = vld [vmem:[%s0 + $0x28] sm:$0xff]
    %v155 = vld [vmem:[%s0 + $0x30] sm:$0xff]
    %v156 = vld [vmem:[%s0 + $0x38] sm:$0xff]
    %v157 = vld [vmem:[#allocation3] sm:$0xff]
    %v158 = vld [vmem:[#allocation3 + $0x8] sm:$0xff]
    %v159 = vld [vmem:[#allocation3 + $0x10] sm:$0xff]
    %v160 = vld [vmem:[#allocation3 + $0x18] sm:$0xff]
    %v161 = vld [vmem:[#allocation3 + $0x20] sm:$0xff]
    %v162 = vld [vmem:[#allocation3 + $0x28] sm:$0xff]
    %v163 = vld [vmem:[#allocation3 + $0x30] sm:$0xff]
    %v164 = vld [vmem:[#allocation3 + $0x38] sm:$0xff]
    %v165 = vld [vmem:[#allocation3 + $0x40] sm:$0xff]
    %v166 = vld [vmem:[#allocation3 + $0x48] sm:$0xff]
    %v167 = vld [vmem:[#allocation3 + $0x50] sm:$0xff]
    %v168 = vld [vmem:[#allocation3 + $0x58] sm:$0xff]
    %v169 = vld [vmem:[#allocation3 + $0x60] sm:$0xff]
    %v170 = vld [vmem:[#allocation3 + $0x68] sm:$0xff]
    %v171 = vld [vmem:[#allocation3 + $0x70] sm:$0xff]
    %v172 = vld [vmem:[#allocation3 + $0x78] sm:$0xff]
    %v173 = vld [vmem:[%s3] sm:$0x1]
    %v175 = vlaneseq
    %v176 = vshrl.u32 %v175, 7
    %v177 = vsub.s32 0, %v176
    %v178 = vrot.slane %v173, %v177
    %180 = vmatprep.subr.mxu0 0.0
    %181 = vmatpush1.msra.mxu0 %v157
    %182 = vmatprep.subr.mxu0 0.0
    %183 = vmatpush1.msra.mxu0 %v158
    %184 = vmatprep.subr.mxu0 0.0
    %185 = vmatpush1.msra.mxu0 %v159
    %186 = vmatprep.subr.mxu0 0.0
    %187 = vmatpush1.msra.mxu0 %v160
    %188 = vmatprep.subr.mxu0 0.0
    %189 = vmatpush1.msra.mxu0 %v161
    %190 = vmatprep.subr.mxu0 0.0
    %191 = vmatpush1.msra.mxu0 %v162
    %192 = vmatprep.subr.mxu0 0.0
    %193 = vmatpush1.msra.mxu0 %v163
    %194 = vmatprep.subr.mxu0 0.0
    %195 = vmatpush1.msra.mxu0 %v164
    %196 = vmatprep.subr.mxu0 0.0
    %197 = vmatpush1.msra.mxu0 %v165
    %198 = vmatprep.subr.mxu0 0.0
    %199 = vmatpush1.msra.mxu0 %v166
    %200 = vmatprep.subr.mxu0 0.0
    %201 = vmatpush1.msra.mxu0 %v167
    %202 = vmatprep.subr.mxu0 0.0
    %203 = vmatpush1.msra.mxu0 %v168
    %204 = vmatprep.subr.mxu0 0.0
    %205 = vmatpush1.msra.mxu0 %v169
    %206 = vmatprep.subr.mxu0 0.0
    %207 = vmatpush1.msra.mxu0 %v170
    %208 = vmatprep.subr.mxu0 0.0
    %209 = vmatpush1.msra.mxu0 %v171
    %210 = vmatprep.subr.mxu0 0.0
    %211 = vmatpush1.msra.mxu0 %v172
    %212 = vmatprep.subr.mxu0 0.0
    %213 = vmatpush1.msra.mxu0 0.0
    %214 = vmatprep.subr.mxu0 0.0
    %215 = vmatpush1.msra.mxu0 0.0
    %216 = vmatprep.subr.mxu0 0.0
    %217 = vmatpush1.msra.mxu0 0.0
    %218 = vmatprep.subr.mxu0 0.0
    %219 = vmatpush1.msra.mxu0 0.0
    %220 = vmatprep.subr.mxu0 0.0
    %221 = vmatpush1.msra.mxu0 0.0
    %222 = vmatprep.subr.mxu0 0.0
    %223 = vmatpush1.msra.mxu0 0.0
    %224 = vmatprep.subr.mxu0 0.0
    %225 = vmatpush1.msra.mxu0 0.0
    %226 = vmatprep.subr.mxu0 0.0
    %227 = vmatpush1.msra.mxu0 0.0
    %228 = vmatprep.subr.mxu0 0.0
    %229 = vmatpush1.msra.mxu0 0.0
    %230 = vmatprep.subr.mxu0 0.0
    %231 = vmatpush1.msra.mxu0 0.0
    %232 = vmatprep.subr.mxu0 0.0
    %233 = vmatpush1.msra.mxu0 0.0
    %234 = vmatprep.subr.mxu0 0.0
    %235 = vmatpush1.msra.mxu0 0.0
    %236 = vmatprep.subr.mxu0 0.0
    %237 = vmatpush1.msra.mxu0 0.0
    %238 = vmatprep.subr.mxu0 0.0
    %239 = vmatpush1.msra.mxu0 0.0
    %240 = vmatprep.subr.mxu0 0.0
    %241 = vmatpush1.msra.mxu0 0.0
    %242 = vmatprep.subr.mxu0 0.0
    %243 = vmatpush1.msra.mxu0 0.0
    %244 = vmatprep.mubr.f32.mxu0 0.0
    %245 = vmatmul.mubr.f32.gmra.mrb[0].mxu0 %v149
    %v246 = vpop.f32.mrb[0].mxu0
    %v247 = vadd.f32 %v178, %v246
    %v248 = vpop.f32.mrb[0].mxu0
    %249 = vmatprep.mubr.f32.mxu0 0.0
    %250 = vmatmul.mubr.f32.gmra.mrb[0].mxu0 %v150
    %v251 = vpop.f32.mrb[0].mxu0
    %v252 = vadd.f32 %v178, %v251
    %v253 = vpop.f32.mrb[0].mxu0
    %254 = vmatprep.mubr.f32.mxu0 0.0
    %255 = vmatmul.mubr.f32.gmra.mrb[0].mxu0 %v151
    %v256 = vpop.f32.mrb[0].mxu0
    %v257 = vadd.f32 %v178, %v256
    %v258 = vpop.f32.mrb[0].mxu0
    %259 = vmatprep.mubr.f32.mxu0 0.0
    %260 = vmatmul.mubr.f32.gmra.mrb[0].mxu0 %v152
    %v261 = vpop.f32.mrb[0].mxu0
    %v262 = vadd.f32 %v178, %v261
    %v263 = vpop.f32.mrb[0].mxu0
    %264 = vmatprep.mubr.f32.mxu0 0.0
    %265 = vmatmul.mubr.f32.gmra.mrb[0].mxu0 %v153
    %v266 = vpop.f32.mrb[0].mxu0
    %v267 = vadd.f32 %v178, %v266
    %v268 = vpop.f32.mrb[0].mxu0
    %269 = vmatprep.mubr.f32.mxu0 0.0
    %270 = vmatmul.mubr.f32.gmra.mrb[0].mxu0 %v154
    %v271 = vpop.f32.mrb[0].mxu0
    %v272 = vadd.f32 %v178, %v271
    %v273 = vpop.f32.mrb[0].mxu0
    %274 = vmatprep.mubr.f32.mxu0 0.0
    %275 = vmatmul.mubr.f32.gmra.mrb[0].mxu0 %v155
    %v276 = vpop.f32.mrb[0].mxu0
    %v277 = vadd.f32 %v178, %v276
    %v278 = vpop.f32.mrb[0].mxu0
    %279 = vmatprep.mubr.f32.mxu0 0.0
    %280 = vmatmul.mubr.f32.gmra.mrb[0].mxu0 %v156
    %v281 = vpop.f32.mrb[0].mxu0
    %v282 = vadd.f32 %v178, %v281
    %v283 = vpop.f32.mrb[0].mxu0
    %284 = vdwg.mxu0
    %v285 = vld [vmem:[#allocation5] sm:$0xff]
    %v286 = vld [vmem:[#allocation5 + $0x8] sm:$0xff]
    %v287 = vld [vmem:[#allocation5 + $0x10] sm:$0xff]
    %v288 = vld [vmem:[#allocation5 + $0x18] sm:$0xff]
    %v289 = vld [vmem:[#allocation5 + $0x20] sm:$0xff]
    %v290 = vld [vmem:[#allocation5 + $0x28] sm:$0xff]
    %v291 = vld [vmem:[#allocation5 + $0x30] sm:$0xff]
    %v292 = vld [vmem:[#allocation5 + $0x38] sm:$0xff]
    %v293 = vld [vmem:[#allocation5 + $0x40] sm:$0xff]
    %v294 = vld [vmem:[#allocation5 + $0x48] sm:$0xff]
    %v295 = vld [vmem:[#allocation5 + $0x50] sm:$0xff]
    %v296 = vld [vmem:[#allocation5 + $0x58] sm:$0xff]
    %v297 = vld [vmem:[#allocation5 + $0x60] sm:$0xff]
    %v298 = vld [vmem:[#allocation5 + $0x68] sm:$0xff]
    %v299 = vld [vmem:[#allocation5 + $0x70] sm:$0xff]
    %v300 = vld [vmem:[#allocation5 + $0x78] sm:$0xff]
    %301 = vmatprep.subr.mxu0 0.0
    %302 = vmatpush1.msra.mxu0 %v285
    %303 = vmatprep.subr.mxu0 0.0
    %304 = vmatpush1.msra.mxu0 %v286
    %305 = vmatprep.subr.mxu0 0.0
    %306 = vmatpush1.msra.mxu0 %v287
    %307 = vmatprep.subr.mxu0 0.0
    %308 = vmatpush1.msra.mxu0 %v288
    %309 = vmatprep.subr.mxu0 0.0
    %310 = vmatpush1.msra.mxu0 %v289
    %311 = vmatprep.subr.mxu0 0.0
    %312 = vmatpush1.msra.mxu0 %v290
    %313 = vmatprep.subr.mxu0 0.0
    %314 = vmatpush1.msra.mxu0 %v291
    %315 = vmatprep.subr.mxu0 0.0
    %316 = vmatpush1.msra.mxu0 %v292
    %317 = vmatprep.subr.mxu0 0.0
    %318 = vmatpush1.msra.mxu0 %v293
    %319 = vmatprep.subr.mxu0 0.0
    %320 = vmatpush1.msra.mxu0 %v294
    %321 = vmatprep.subr.mxu0 0.0
    %322 = vmatpush1.msra.mxu0 %v295
    %323 = vmatprep.subr.mxu0 0.0
    %324 = vmatpush1.msra.mxu0 %v296
    %325 = vmatprep.subr.mxu0 0.0
    %326 = vmatpush1.msra.mxu0 %v297
    %327 = vmatprep.subr.mxu0 0.0
    %328 = vmatpush1.msra.mxu0 %v298
    %329 = vmatprep.subr.mxu0 0.0
    %330 = vmatpush1.msra.mxu0 %v299
    %331 = vmatprep.subr.mxu0 0.0
    %332 = vmatpush1.msra.mxu0 %v300
    %333 = vmatprep.subr.mxu0 0.0
    %334 = vmatpush1.msra.mxu0 0.0
    %335 = vmatprep.subr.mxu0 0.0
    %336 = vmatpush1.msra.mxu0 0.0
    %337 = vmatprep.subr.mxu0 0.0
    %338 = vmatpush1.msra.mxu0 0.0
    %339 = vmatprep.subr.mxu0 0.0
    %340 = vmatpush1.msra.mxu0 0.0
    %341 = vmatprep.subr.mxu0 0.0
    %342 = vmatpush1.msra.mxu0 0.0
    %343 = vmatprep.subr.mxu0 0.0
    %344 = vmatpush1.msra.mxu0 0.0
    %345 = vmatprep.subr.mxu0 0.0
    %346 = vmatpush1.msra.mxu0 0.0
    %347 = vmatprep.subr.mxu0 0.0
    %348 = vmatpush1.msra.mxu0 0.0
    %349 = vmatprep.subr.mxu0 0.0
    %350 = vmatpush1.msra.mxu0 0.0
    %351 = vmatprep.subr.mxu0 0.0
    %352 = vmatpush1.msra.mxu0 0.0
    %353 = vmatprep.subr.mxu0 0.0
    %354 = vmatpush1.msra.mxu0 0.0
    %355 = vmatprep.subr.mxu0 0.0
    %356 = vmatpush1.msra.mxu0 0.0
    %357 = vmatprep.subr.mxu0 0.0
    %358 = vmatpush1.msra.mxu0 0.0
    %359 = vmatprep.subr.mxu0 0.0
    %360 = vmatpush1.msra.mxu0 0.0
    %361 = vmatprep.subr.mxu0 0.0
    %362 = vmatpush1.msra.mxu0 0.0
    %363 = vmatprep.subr.mxu0 0.0
    %364 = vmatpush1.msra.mxu0 0.0
    %365 = vmatprep.mubr.f32.mxu0 0.0
    %366 = vmatmul.mubr.f32.gmra.mrb[0].mxu0 0.0
    %v367 = vpop.f32.mrb[0].mxu0
    %v368 = vadd.f32 0.0, %v367
    %v369 = vpop.f32.mrb[0].mxu0
    %370 = vdwg.mxu0
    %v371 = vadd.f32 %v247, %v368
    %v372 = vmul.f32 %v371, 0.5
    %v373 = vtanh.pop %v372
    %v374 = vmul.f32 %v373, 0.5
    %v375 = vadd.f32 %v374, 0.5
    %v376 = vtanh.pop %v371
    %377 = vrot.lane.b32.xlu0 %v375, 96
    %v378 = vpop.permute.xlu0 %377
    %379 = vrot.lane.b32.xlu0 %v376, 64
    %v380 = vpop.permute.xlu0 %379
    %381 = vrot.lane.b32.xlu0 %v375, 32
    %v382 = vpop.permute.xlu0 %381
    %v383 = vmul.f32 %v378, 0.0
    %v384 = vmul.f32 %v375, %v380
    %v385 = vadd.f32 %v383, %v384
    %v386 = vtanh.pop %v385
    %v387 = vmul.f32 %v382, %v386
    %388 = vst [vmem:[#allocation2] sm:$0xff] %v387
    %v389 = vld [vmem:[#allocation5] sm:$0xff]
    %v390 = vld [vmem:[#allocation5 + $0x8] sm:$0xff]
    %v391 = vld [vmem:[#allocation5 + $0x10] sm:$0xff]
    %v392 = vld [vmem:[#allocation5 + $0x18] sm:$0xff]
    %v393 = vld [vmem:[#allocation5 + $0x20] sm:$0xff]
    %v394 = vld [vmem:[#allocation5 + $0x28] sm:$0xff]
    %v395 = vld [vmem:[#allocation5 + $0x30] sm:$0xff]
    %v396 = vld [vmem:[#allocation5 + $0x38] sm:$0xff]
    %v397 = vld [vmem:[#allocation5 + $0x40] sm:$0xff]
    %v398 = vld [vmem:[#allocation5 + $0x48] sm:$0xff]
    %v399 = vld [vmem:[#allocation5 + $0x50] sm:$0xff]
    %v400 = vld [vmem:[#allocation5 + $0x58] sm:$0xff]
    %v401 = vld [vmem:[#allocation5 + $0x60] sm:$0xff]
    %v402 = vld [vmem:[#allocation5 + $0x68] sm:$0xff]
    %v403 = vld [vmem:[#allocation5 + $0x70] sm:$0xff]
    %v404 = vld [vmem:[#allocation5 + $0x78] sm:$0xff]
    %405 = vmatprep.subr.mxu0 0.0
    %406 = vmatpush1.msra.mxu0 %v389
    %407 = vmatprep.subr.mxu0 0.0
    %408 = vmatpush1.msra.mxu0 %v390
    %409 = vmatprep.subr.mxu0 0.0
    %410 = vmatpush1.msra.mxu0 %v391
    %411 = vmatprep.subr.mxu0 0.0
    %412 = vmatpush1.msra.mxu0 %v392
    %413 = vmatprep.subr.mxu0 0.0
    %414 = vmatpush1.msra.mxu0 %v393
    %415 = vmatprep.subr.mxu0 0.0
    %416 = vmatpush1.msra.mxu0 %v394
    %417 = vmatprep.subr.mxu0 0.0
    %418 = vmatpush1.msra.mxu0 %v395
    %419 = vmatprep.subr.mxu0 0.0
    %420 = vmatpush1.msra.mxu0 %v396
    %421 = vmatprep.subr.mxu0 0.0
    %422 = vmatpush1.msra.mxu0 %v397
    %423 = vmatprep.subr.mxu0 0.0
    %424 = vmatpush1.msra.mxu0 %v398
    %425 = vmatprep.subr.mxu0 0.0
    %426 = vmatpush1.msra.mxu0 %v399
    %427 = vmatprep.subr.mxu0 0.0
    %428 = vmatpush1.msra.mxu0 %v400
    %429 = vmatprep.subr.mxu0 0.0
    %430 = vmatpush1.msra.mxu0 %v401
    %431 = vmatprep.subr.mxu0 0.0
    %432 = vmatpush1.msra.mxu0 %v402
    %433 = vmatprep.subr.mxu0 0.0
    %434 = vmatpush1.msra.mxu0 %v403
    %435 = vmatprep.subr.mxu0 0.0
    %436 = vmatpush1.msra.mxu0 %v404
    %437 = vmatprep.subr.mxu0 0.0
    %438 = vmatpush1.msra.mxu0 0.0
    %439 = vmatprep.subr.mxu0 0.0
    %440 = vmatpush1.msra.mxu0 0.0
    %441 = vmatprep.subr.mxu0 0.0
    %442 = vmatpush1.msra.mxu0 0.0
    %443 = vmatprep.subr.mxu0 0.0
    %444 = vmatpush1.msra.mxu0 0.0
    %445 = vmatprep.subr.mxu0 0.0
    %446 = vmatpush1.msra.mxu0 0.0
    %447 = vmatprep.subr.mxu0 0.0
    %448 = vmatpush1.msra.mxu0 0.0
    %449 = vmatprep.subr.mxu0 0.0
    %450 = vmatpush1.msra.mxu0 0.0
    %451 = vmatprep.subr.mxu0 0.0
    %452 = vmatpush1.msra.mxu0 0.0
    %453 = vmatprep.subr.mxu0 0.0
    %454 = vmatpush1.msra.mxu0 0.0
    %455 = vmatprep.subr.mxu0 0.0
    %456 = vmatpush1.msra.mxu0 0.0
    %457 = vmatprep.subr.mxu0 0.0
    %458 = vmatpush1.msra.mxu0 0.0
    %459 = vmatprep.subr.mxu0 0.0
    %460 = vmatpush1.msra.mxu0 0.0
    %461 = vmatprep.subr.mxu0 0.0
    %462 = vmatpush1.msra.mxu0 0.0
    %463 = vmatprep.subr.mxu0 0.0
    %464 = vmatpush1.msra.mxu0 0.0
    %465 = vmatprep.subr.mxu0 0.0
    %466 = vmatpush1.msra.mxu0 0.0
    %467 = vmatprep.subr.mxu0 0.0
    %468 = vmatpush1.msra.mxu0 0.0
    %469 = vmatprep.mubr.f32.mxu0 0.0
    %470 = vmatmul.mubr.f32.gmra.mrb[0].mxu0 %v387
    %v471 = vpop.f32.mrb[0].mxu0
    %v472 = vadd.f32 0.0, %v471
    %v473 = vpop.f32.mrb[0].mxu0
    %474 = vdwg.mxu0
    %v475 = vadd.f32 %v252, %v472
    %v476 = vmul.f32 %v475, 0.5
    %v477 = vtanh.pop %v476
    %v478 = vmul.f32 %v477, 0.5
    %v479 = vadd.f32 %v478, 0.5
    %v480 = vtanh.pop %v475
    %481 = vrot.lane.b32.xlu0 %v479, 96
    %v482 = vpop.permute.xlu0 %481
    %483 = vrot.lane.b32.xlu0 %v480, 64
    %v484 = vpop.permute.xlu0 %483
    %485 = vrot.lane.b32.xlu0 %v479, 32
    %v486 = vpop.permute.xlu0 %485
    %v487 = vmul.f32 %v482, %v385
    %v488 = vmul.f32 %v479, %v484
    %v489 = vadd.f32 %v487, %v488
    %v490 = vtanh.pop %v489
    %v491 = vmul.f32 %v486, %v490
    %492 = vst [vmem:[#allocation2 + $0x8] sm:$0xff] %v491
    %v493 = vld [vmem:[#allocation5] sm:$0xff]
    %v494 = vld [vmem:[#allocation5 + $0x8] sm:$0xff]
    %v495 = vld [vmem:[#allocation5 + $0x10] sm:$0xff]
    %v496 = vld [vmem:[#allocation5 + $0x18] sm:$0xff]
    %v497 = vld [vmem:[#allocation5 + $0x20] sm:$0xff]
    %v498 = vld [vmem:[#allocation5 + $0x28] sm:$0xff]
    %v499 = vld [vmem:[#allocation5 + $0x30] sm:$0xff]
    %v500 = vld [vmem:[#allocation5 + $0x38] sm:$0xff]
    %v501 = vld [vmem:[#allocation5 + $0x40] sm:$0xff]
    %v502 = vld [vmem:[#allocation5 + $0x48] sm:$0xff]
    %v503 = vld [vmem:[#allocation5 + $0x50] sm:$0xff]
    %v504 = vld [vmem:[#allocation5 + $0x58] sm:$0xff]
    %v505 = vld [vmem:[#allocation5 + $0x60] sm:$0xff]
    %v506 = vld [vmem:[#allocation5 + $0x68] sm:$0xff]
    %v507 = vld [vmem:[#allocation5 + $0x70] sm:$0xff]
    %v508 = vld [vmem:[#allocation5 + $0x78] sm:$0xff]
    %509 = vmatprep.subr.mxu0 0.0
    %510 = vmatpush1.msra.mxu0 %v493
    %511 = vmatprep.subr.mxu0 0.0
    %512 = vmatpush1.msra.mxu0 %v494
    %513 = vmatprep.subr.mxu0 0.0
    %514 = vmatpush1.msra.mxu0 %v495
    %515 = vmatprep.subr.mxu0 0.0
    %516 = vmatpush1.msra.mxu0 %v496
    %517 = vmatprep.subr.mxu0 0.0
    %518 = vmatpush1.msra.mxu0 %v497
    %519 = vmatprep.subr.mxu0 0.0
    %520 = vmatpush1.msra.mxu0 %v498
    %521 = vmatprep.subr.mxu0 0.0
    %522 = vmatpush1.msra.mxu0 %v499
    %523 = vmatprep.subr.mxu0 0.0
    %524 = vmatpush1.msra.mxu0 %v500
    %525 = vmatprep.subr.mxu0 0.0
    %526 = vmatpush1.msra.mxu0 %v501
    %527 = vmatprep.subr.mxu0 0.0
    %528 = vmatpush1.msra.mxu0 %v502
    %529 = vmatprep.subr.mxu0 0.0
    %530 = vmatpush1.msra.mxu0 %v503
    %531 = vmatprep.subr.mxu0 0.0
    %532 = vmatpush1.msra.mxu0 %v504
    %533 = vmatprep.subr.mxu0 0.0
    %534 = vmatpush1.msra.mxu0 %v505
    %535 = vmatprep.subr.mxu0 0.0
    %536 = vmatpush1.msra.mxu0 %v506
    %537 = vmatprep.subr.mxu0 0.0
    %538 = vmatpush1.msra.mxu0 %v507
    %539 = vmatprep.subr.mxu0 0.0
    %540 = vmatpush1.msra.mxu0 %v508
    %541 = vmatprep.subr.mxu0 0.0
    %542 = vmatpush1.msra.mxu0 0.0
    %543 = vmatprep.subr.mxu0 0.0
    %544 = vmatpush1.msra.mxu0 0.0
    %545 = vmatprep.subr.mxu0 0.0
    %546 = vmatpush1.msra.mxu0 0.0
    %547 = vmatprep.subr.mxu0 0.0
    %548 = vmatpush1.msra.mxu0 0.0
    %549 = vmatprep.subr.mxu0 0.0
    %550 = vmatpush1.msra.mxu0 0.0
    %551 = vmatprep.subr.mxu0 0.0
    %552 = vmatpush1.msra.mxu0 0.0
    %553 = vmatprep.subr.mxu0 0.0
    %554 = vmatpush1.msra.mxu0 0.0
    %555 = vmatprep.subr.mxu0 0.0
    %556 = vmatpush1.msra.mxu0 0.0
    %557 = vmatprep.subr.mxu0 0.0
    %558 = vmatpush1.msra.mxu0 0.0
    %559 = vmatprep.subr.mxu0 0.0
    %560 = vmatpush1.msra.mxu0 0.0
    %561 = vmatprep.subr.mxu0 0.0
    %562 = vmatpush1.msra.mxu0 0.0
    %563 = vmatprep.subr.mxu0 0.0
    %564 = vmatpush1.msra.mxu0 0.0
    %565 = vmatprep.subr.mxu0 0.0
    %566 = vmatpush1.msra.mxu0 0.0
    %567 = vmatprep.subr.mxu0 0.0
    %568 = vmatpush1.msra.mxu0 0.0
    %569 = vmatprep.subr.mxu0 0.0
    %570 = vmatpush1.msra.mxu0 0.0
    %571 = vmatprep.subr.mxu0 0.0
    %572 = vmatpush1.msra.mxu0 0.0
    %573 = vmatprep.mubr.f32.mxu0 0.0
    %574 = vmatmul.mubr.f32.gmra.mrb[0].mxu0 %v491
    %v575 = vpop.f32.mrb[0].mxu0
    %v576 = vadd.f32 0.0, %v575
    %v577 = vpop.f32.mrb[0].mxu0
    %578 = vdwg.mxu0
    %v579 = vadd.f32 %v257, %v576
    %v580 = vmul.f32 %v579, 0.5
    %v581 = vtanh.pop %v580
    %v582 = vmul.f32 %v581, 0.5
    %v583 = vadd.f32 %v582, 0.5
    %v584 = vtanh.pop %v579
    %585 = vrot.lane.b32.xlu0 %v583, 96
    %v586 = vpop.permute.xlu0 %585
    %587 = vrot.lane.b32.xlu0 %v584, 64
    %v588 = vpop.permute.xlu0 %587
    %589 = vrot.lane.b32.xlu0 %v583, 32
    %v590 = vpop.permute.xlu0 %589
    %v591 = vmul.f32 %v586, %v489
    %v592 = vmul.f32 %v583, %v588
    %v593 = vadd.f32 %v591, %v592
    %v594 = vtanh.pop %v593
    %v595 = vmul.f32 %v590, %v594
    %596 = vst [vmem:[#allocation2 + $0x10] sm:$0xff] %v595
    %v597 = vld [vmem:[#allocation5] sm:$0xff]
    %v598 = vld [vmem:[#allocation5 + $0x8] sm:$0xff]
    %v599 = vld [vmem:[#allocation5 + $0x10] sm:$0xff]
    %v600 = vld [vmem:[#allocation5 + $0x18] sm:$0xff]
    %v601 = vld [vmem:[#allocation5 + $0x20] sm:$0xff]
    %v602 = vld [vmem:[#allocation5 + $0x28] sm:$0xff]
    %v603 = vld [vmem:[#allocation5 + $0x30] sm:$0xff]
    %v604 = vld [vmem:[#allocation5 + $0x38] sm:$0xff]
    %v605 = vld [vmem:[#allocation5 + $0x40] sm:$0xff]
    %v606 = vld [vmem:[#allocation5 + $0x48] sm:$0xff]
    %v607 = vld [vmem:[#allocation5 + $0x50] sm:$0xff]
    %v608 = vld [vmem:[#allocation5 + $0x58] sm:$0xff]
    %v609 = vld [vmem:[#allocation5 + $0x60] sm:$0xff]
    %v610 = vld [vmem:[#allocation5 + $0x68] sm:$0xff]
    %v611 = vld [vmem:[#allocation5 + $0x70] sm:$0xff]
    %v612 = vld [vmem:[#allocation5 + $0x78] sm:$0xff]
    %613 = vmatprep.subr.mxu0 0.0
    %614 = vmatpush1.msra.mxu0 %v597
    %615 = vmatprep.subr.mxu0 0.0
    %616 = vmatpush1.msra.mxu0 %v598
    %617 = vmatprep.subr.mxu0 0.0
    %618 = vmatpush1.msra.mxu0 %v599
    %619 = vmatprep.subr.mxu0 0.0
    %620 = vmatpush1.msra.mxu0 %v600
    %621 = vmatprep.subr.mxu0 0.0
    %622 = vmatpush1.msra.mxu0 %v601
    %623 = vmatprep.subr.mxu0 0.0
    %624 = vmatpush1.msra.mxu0 %v602
    %625 = vmatprep.subr.mxu0 0.0
    %626 = vmatpush1.msra.mxu0 %v603
    %627 = vmatprep.subr.mxu0 0.0
    %628 = vmatpush1.msra.mxu0 %v604
    %629 = vmatprep.subr.mxu0 0.0
    %630 = vmatpush1.msra.mxu0 %v605
    %631 = vmatprep.subr.mxu0 0.0
    %632 = vmatpush1.msra.mxu0 %v606
    %633 = vmatprep.subr.mxu0 0.0
    %634 = vmatpush1.msra.mxu0 %v607
    %635 = vmatprep.subr.mxu0 0.0
    %636 = vmatpush1.msra.mxu0 %v608
    %637 = vmatprep.subr.mxu0 0.0
    %638 = vmatpush1.msra.mxu0 %v609
    %639 = vmatprep.subr.mxu0 0.0
    %640 = vmatpush1.msra.mxu0 %v610
    %641 = vmatprep.subr.mxu0 0.0
    %642 = vmatpush1.msra.mxu0 %v611
    %643 = vmatprep.subr.mxu0 0.0
    %644 = vmatpush1.msra.mxu0 %v612
    %645 = vmatprep.subr.mxu0 0.0
    %646 = vmatpush1.msra.mxu0 0.0
    %647 = vmatprep.subr.mxu0 0.0
    %648 = vmatpush1.msra.mxu0 0.0
    %649 = vmatprep.subr.mxu0 0.0
    %650 = vmatpush1.msra.mxu0 0.0
    %651 = vmatprep.subr.mxu0 0.0
    %652 = vmatpush1.msra.mxu0 0.0
    %653 = vmatprep.subr.mxu0 0.0
    %654 = vmatpush1.msra.mxu0 0.0
    %655 = vmatprep.subr.mxu0 0.0
    %656 = vmatpush1.msra.mxu0 0.0
    %657 = vmatprep.subr.mxu0 0.0
    %658 = vmatpush1.msra.mxu0 0.0
    %659 = vmatprep.subr.mxu0 0.0
    %660 = vmatpush1.msra.mxu0 0.0
    %661 = vmatprep.subr.mxu0 0.0
    %662 = vmatpush1.msra.mxu0 0.0
    %663 = vmatprep.subr.mxu0 0.0
    %664 = vmatpush1.msra.mxu0 0.0
    %665 = vmatprep.subr.mxu0 0.0
    %666 = vmatpush1.msra.mxu0 0.0
    %667 = vmatprep.subr.mxu0 0.0
    %668 = vmatpush1.msra.mxu0 0.0
    %669 = vmatprep.subr.mxu0 0.0
    %670 = vmatpush1.msra.mxu0 0.0
    %671 = vmatprep.subr.mxu0 0.0
    %672 = vmatpush1.msra.mxu0 0.0
    %673 = vmatprep.subr.mxu0 0.0
    %674 = vmatpush1.msra.mxu0 0.0
    %675 = vmatprep.subr.mxu0 0.0
    %676 = vmatpush1.msra.mxu0 0.0
    %677 = vmatprep.mubr.f32.mxu0 0.0
    %678 = vmatmul.mubr.f32.gmra.mrb[0].mxu0 %v595
    %v679 = vpop.f32.mrb[0].mxu0
    %v680 = vadd.f32 0.0, %v679
    %v681 = vpop.f32.mrb[0].mxu0
    %682 = vdwg.mxu0
    %v683 = vadd.f32 %v262, %v680
    %v684 = vmul.f32 %v683, 0.5
    %v685 = vtanh.pop %v684
    %v686 = vmul.f32 %v685, 0.5
    %v687 = vadd.f32 %v686, 0.5
    %v688 = vtanh.pop %v683
    %689 = vrot.lane.b32.xlu0 %v687, 96
    %v690 = vpop.permute.xlu0 %689
    %691 = vrot.lane.b32.xlu0 %v688, 64
    %v692 = vpop.permute.xlu0 %691
    %693 = vrot.lane.b32.xlu0 %v687, 32
    %v694 = vpop.permute.xlu0 %693
    %v695 = vmul.f32 %v690, %v593
    %v696 = vmul.f32 %v687, %v692
    %v697 = vadd.f32 %v695, %v696
    %v698 = vtanh.pop %v697
    %v699 = vmul.f32 %v694, %v698
    %700 = vst [vmem:[#allocation2 + $0x18] sm:$0xff] %v699
    %v701 = vld [vmem:[#allocation5] sm:$0xff]
    %v702 = vld [vmem:[#allocation5 + $0x8] sm:$0xff]
    %v703 = vld [vmem:[#allocation5 + $0x10] sm:$0xff]
    %v704 = vld [vmem:[#allocation5 + $0x18] sm:$0xff]
    %v705 = vld [vmem:[#allocation5 + $0x20] sm:$0xff]
    %v706 = vld [vmem:[#allocation5 + $0x28] sm:$0xff]
    %v707 = vld [vmem:[#allocation5 + $0x30] sm:$0xff]
    %v708 = vld [vmem:[#allocation5 + $0x38] sm:$0xff]
    %v709 = vld [vmem:[#allocation5 + $0x40] sm:$0xff]
    %v710 = vld [vmem:[#allocation5 + $0x48] sm:$0xff]
    %v711 = vld [vmem:[#allocation5 + $0x50] sm:$0xff]
    %v712 = vld [vmem:[#allocation5 + $0x58] sm:$0xff]
    %v713 = vld [vmem:[#allocation5 + $0x60] sm:$0xff]
    %v714 = vld [vmem:[#allocation5 + $0x68] sm:$0xff]
    %v715 = vld [vmem:[#allocation5 + $0x70] sm:$0xff]
    %v716 = vld [vmem:[#allocation5 + $0x78] sm:$0xff]
    %717 = vmatprep.subr.mxu0 0.0
    %718 = vmatpush1.msra.mxu0 %v701
    %719 = vmatprep.subr.mxu0 0.0
    %720 = vmatpush1.msra.mxu0 %v702
    %721 = vmatprep.subr.mxu0 0.0
    %722 = vmatpush1.msra.mxu0 %v703
    %723 = vmatprep.subr.mxu0 0.0
    %724 = vmatpush1.msra.mxu0 %v704
    %725 = vmatprep.subr.mxu0 0.0
    %726 = vmatpush1.msra.mxu0 %v705
    %727 = vmatprep.subr.mxu0 0.0
    %728 = vmatpush1.msra.mxu0 %v706
    %729 = vmatprep.subr.mxu0 0.0
    %730 = vmatpush1.msra.mxu0 %v707
    %731 = vmatprep.subr.mxu0 0.0
    %732 = vmatpush1.msra.mxu0 %v708
    %733 = vmatprep.subr.mxu0 0.0
    %734 = vmatpush1.msra.mxu0 %v709
    %735 = vmatprep.subr.mxu0 0.0
    %736 = vmatpush1.msra.mxu0 %v710
    %737 = vmatprep.subr.mxu0 0.0
    %738 = vmatpush1.msra.mxu0 %v711
    %739 = vmatprep.subr.mxu0 0.0
    %740 = vmatpush1.msra.mxu0 %v712
    %741 = vmatprep.subr.mxu0 0.0
    %742 = vmatpush1.msra.mxu0 %v713
    %743 = vmatprep.subr.mxu0 0.0
    %744 = vmatpush1.msra.mxu0 %v714
    %745 = vmatprep.subr.mxu0 0.0
    %746 = vmatpush1.msra.mxu0 %v715
    %747 = vmatprep.subr.mxu0 0.0
    %748 = vmatpush1.msra.mxu0 %v716
    %749 = vmatprep.subr.mxu0 0.0
    %750 = vmatpush1.msra.mxu0 0.0
    %751 = vmatprep.subr.mxu0 0.0
    %752 = vmatpush1.msra.mxu0 0.0
    %753 = vmatprep.subr.mxu0 0.0
    %754 = vmatpush1.msra.mxu0 0.0
    %755 = vmatprep.subr.mxu0 0.0
    %756 = vmatpush1.msra.mxu0 0.0
    %757 = vmatprep.subr.mxu0 0.0
    %758 = vmatpush1.msra.mxu0 0.0
    %759 = vmatprep.subr.mxu0 0.0
    %760 = vmatpush1.msra.mxu0 0.0
    %761 = vmatprep.subr.mxu0 0.0
    %762 = vmatpush1.msra.mxu0 0.0
    %763 = vmatprep.subr.mxu0 0.0
    %764 = vmatpush1.msra.mxu0 0.0
    %765 = vmatprep.subr.mxu0 0.0
    %766 = vmatpush1.msra.mxu0 0.0
    %767 = vmatprep.subr.mxu0 0.0
    %768 = vmatpush1.msra.mxu0 0.0
    %769 = vmatprep.subr.mxu0 0.0
    %770 = vmatpush1.msra.mxu0 0.0
    %771 = vmatprep.subr.mxu0 0.0
    %772 = vmatpush1.msra.mxu0 0.0
    %773 = vmatprep.subr.mxu0 0.0
    %774 = vmatpush1.msra.mxu0 0.0
    %775 = vmatprep.subr.mxu0 0.0
    %776 = vmatpush1.msra.mxu0 0.0
    %777 = vmatprep.subr.mxu0 0.0
    %778 = vmatpush1.msra.mxu0 0.0
    %779 = vmatprep.subr.mxu0 0.0
    %780 = vmatpush1.msra.mxu0 0.0
    %781 = vmatprep.mubr.f32.mxu0 0.0
    %782 = vmatmul.mubr.f32.gmra.mrb[0].mxu0 %v699
    %v783 = vpop.f32.mrb[0].mxu0
    %v784 = vadd.f32 0.0, %v783
    %v785 = vpop.f32.mrb[0].mxu0
    %786 = vdwg.mxu0
    %v787 = vadd.f32 %v267, %v784
    %v788 = vmul.f32 %v787, 0.5
    %v789 = vtanh.pop %v788
    %v790 = vmul.f32 %v789, 0.5
    %v791 = vadd.f32 %v790, 0.5
    %v792 = vtanh.pop %v787
    %793 = vrot.lane.b32.xlu0 %v791, 96
    %v794 = vpop.permute.xlu0 %793
    %795 = vrot.lane.b32.xlu0 %v792, 64
    %v796 = vpop.permute.xlu0 %795
    %797 = vrot.lane.b32.xlu0 %v791, 32
    %v798 = vpop.permute.xlu0 %797
    %v799 = vmul.f32 %v794, %v697
    %v800 = vmul.f32 %v791, %v796
    %v801 = vadd.f32 %v799, %v800
    %v802 = vtanh.pop %v801
    %v803 = vmul.f32 %v798, %v802
    %804 = vst [vmem:[#allocation2 + $0x20] sm:$0xff] %v803
    %v805 = vld [vmem:[#allocation5] sm:$0xff]
    %v806 = vld [vmem:[#allocation5 + $0x8] sm:$0xff]
    %v807 = vld [vmem:[#allocation5 + $0x10] sm:$0xff]
    %v808 = vld [vmem:[#allocation5 + $0x18] sm:$0xff]
    %v809 = vld [vmem:[#allocation5 + $0x20] sm:$0xff]
    %v810 = vld [vmem:[#allocation5 + $0x28] sm:$0xff]
    %v811 = vld [vmem:[#allocation5 + $0x30] sm:$0xff]
    %v812 = vld [vmem:[#allocation5 + $0x38] sm:$0xff]
    %v813 = vld [vmem:[#allocation5 + $0x40] sm:$0xff]
    %v814 = vld [vmem:[#allocation5 + $0x48] sm:$0xff]
    %v815 = vld [vmem:[#allocation5 + $0x50] sm:$0xff]
    %v816 = vld [vmem:[#allocation5 + $0x58] sm:$0xff]
    %v817 = vld [vmem:[#allocation5 + $0x60] sm:$0xff]
    %v818 = vld [vmem:[#allocation5 + $0x68] sm:$0xff]
    %v819 = vld [vmem:[#allocation5 + $0x70] sm:$0xff]
    %v820 = vld [vmem:[#allocation5 + $0x78] sm:$0xff]
    %821 = vmatprep.subr.mxu0 0.0
    %822 = vmatpush1.msra.mxu0 %v805
    %823 = vmatprep.subr.mxu0 0.0
    %824 = vmatpush1.msra.mxu0 %v806
    %825 = vmatprep.subr.mxu0 0.0
    %826 = vmatpush1.msra.mxu0 %v807
    %827 = vmatprep.subr.mxu0 0.0
    %828 = vmatpush1.msra.mxu0 %v808
    %829 = vmatprep.subr.mxu0 0.0
    %830 = vmatpush1.msra.mxu0 %v809
    %831 = vmatprep.subr.mxu0 0.0
    %832 = vmatpush1.msra.mxu0 %v810
    %833 = vmatprep.subr.mxu0 0.0
    %834 = vmatpush1.msra.mxu0 %v811
    %835 = vmatprep.subr.mxu0 0.0
    %836 = vmatpush1.msra.mxu0 %v812
    %837 = vmatprep.subr.mxu0 0.0
    %838 = vmatpush1.msra.mxu0 %v813
    %839 = vmatprep.subr.mxu0 0.0
    %840 = vmatpush1.msra.mxu0 %v814
    %841 = vmatprep.subr.mxu0 0.0
    %842 = vmatpush1.msra.mxu0 %v815
    %843 = vmatprep.subr.mxu0 0.0
    %844 = vmatpush1.msra.mxu0 %v816
    %845 = vmatprep.subr.mxu0 0.0
    %846 = vmatpush1.msra.mxu0 %v817
    %847 = vmatprep.subr.mxu0 0.0
    %848 = vmatpush1.msra.mxu0 %v818
    %849 = vmatprep.subr.mxu0 0.0
    %850 = vmatpush1.msra.mxu0 %v819
    %851 = vmatprep.subr.mxu0 0.0
    %852 = vmatpush1.msra.mxu0 %v820
    %853 = vmatprep.subr.mxu0 0.0
    %854 = vmatpush1.msra.mxu0 0.0
    %855 = vmatprep.subr.mxu0 0.0
    %856 = vmatpush1.msra.mxu0 0.0
    %857 = vmatprep.subr.mxu0 0.0
    %858 = vmatpush1.msra.mxu0 0.0
    %859 = vmatprep.subr.mxu0 0.0
    %860 = vmatpush1.msra.mxu0 0.0
    %861 = vmatprep.subr.mxu0 0.0
    %862 = vmatpush1.msra.mxu0 0.0
    %863 = vmatprep.subr.mxu0 0.0
    %864 = vmatpush1.msra.mxu0 0.0
    %865 = vmatprep.subr.mxu0 0.0
    %866 = vmatpush1.msra.mxu0 0.0
    %867 = vmatprep.subr.mxu0 0.0
    %868 = vmatpush1.msra.mxu0 0.0
    %869 = vmatprep.subr.mxu0 0.0
    %870 = vmatpush1.msra.mxu0 0.0
    %871 = vmatprep.subr.mxu0 0.0
    %872 = vmatpush1.msra.mxu0 0.0
    %873 = vmatprep.subr.mxu0 0.0
    %874 = vmatpush1.msra.mxu0 0.0
    %875 = vmatprep.subr.mxu0 0.0
    %876 = vmatpush1.msra.mxu0 0.0
    %877 = vmatprep.subr.mxu0 0.0
    %878 = vmatpush1.msra.mxu0 0.0
    %879 = vmatprep.subr.mxu0 0.0
    %880 = vmatpush1.msra.mxu0 0.0
    %881 = vmatprep.subr.mxu0 0.0
    %882 = vmatpush1.msra.mxu0 0.0
    %883 = vmatprep.subr.mxu0 0.0
    %884 = vmatpush1.msra.mxu0 0.0
    %885 = vmatprep.mubr.f32.mxu0 0.0
    %886 = vmatmul.mubr.f32.gmra.mrb[0].mxu0 %v803
    %v887 = vpop.f32.mrb[0].mxu0
    %v888 = vadd.f32 0.0, %v887
    %v889 = vpop.f32.mrb[0].mxu0
    %890 = vdwg.mxu0
    %v891 = vadd.f32 %v272, %v888
    %v892 = vmul.f32 %v891, 0.5
    %v893 = vtanh.pop %v892
    %v894 = vmul.f32 %v893, 0.5
    %v895 = vadd.f32 %v894, 0.5
    %v896 = vtanh.pop %v891
    %897 = vrot.lane.b32.xlu0 %v895, 96
    %v898 = vpop.permute.xlu0 %897
    %899 = vrot.lane.b32.xlu0 %v896, 64
    %v900 = vpop.permute.xlu0 %899
    %901 = vrot.lane.b32.xlu0 %v895, 32
    %v902 = vpop.permute.xlu0 %901
    %v903 = vmul.f32 %v898, %v801
    %v904 = vmul.f32 %v895, %v900
    %v905 = vadd.f32 %v903, %v904
    %v906 = vtanh.pop %v905
    %v907 = vmul.f32 %v902, %v906
    %908 = vst [vmem:[#allocation2 + $0x28] sm:$0xff] %v907
    %v909 = vld [vmem:[#allocation5] sm:$0xff]
    %v910 = vld [vmem:[#allocation5 + $0x8] sm:$0xff]
    %v911 = vld [vmem:[#allocation5 + $0x10] sm:$0xff]
    %v912 = vld [vmem:[#allocation5 + $0x18] sm:$0xff]
    %v913 = vld [vmem:[#allocation5 + $0x20] sm:$0xff]
    %v914 = vld [vmem:[#allocation5 + $0x28] sm:$0xff]
    %v915 = vld [vmem:[#allocation5 + $0x30] sm:$0xff]
    %v916 = vld [vmem:[#allocation5 + $0x38] sm:$0xff]
    %v917 = vld [vmem:[#allocation5 + $0x40] sm:$0xff]
    %v918 = vld [vmem:[#allocation5 + $0x48] sm:$0xff]
    %v919 = vld [vmem:[#allocation5 + $0x50] sm:$0xff]
    %v920 = vld [vmem:[#allocation5 + $0x58] sm:$0xff]
    %v921 = vld [vmem:[#allocation5 + $0x60] sm:$0xff]
    %v922 = vld [vmem:[#allocation5 + $0x68] sm:$0xff]
    %v923 = vld [vmem:[#allocation5 + $0x70] sm:$0xff]
    %v924 = vld [vmem:[#allocation5 + $0x78] sm:$0xff]
    %925 = vmatprep.subr.mxu0 0.0
    %926 = vmatpush1.msra.mxu0 %v909
    %927 = vmatprep.subr.mxu0 0.0
    %928 = vmatpush1.msra.mxu0 %v910
    %929 = vmatprep.subr.mxu0 0.0
    %930 = vmatpush1.msra.mxu0 %v911
    %931 = vmatprep.subr.mxu0 0.0
    %932 = vmatpush1.msra.mxu0 %v912
    %933 = vmatprep.subr.mxu0 0.0
    %934 = vmatpush1.msra.mxu0 %v913
    %935 = vmatprep.subr.mxu0 0.0
    %936 = vmatpush1.msra.mxu0 %v914
    %937 = vmatprep.subr.mxu0 0.0
    %938 = vmatpush1.msra.mxu0 %v915
    %939 = vmatprep.subr.mxu0 0.0
    %940 = vmatpush1.msra.mxu0 %v916
    %941 = vmatprep.subr.mxu0 0.0
    %942 = vmatpush1.msra.mxu0 %v917
    %943 = vmatprep.subr.mxu0 0.0
    %944 = vmatpush1.msra.mxu0 %v918
    %945 = vmatprep.subr.mxu0 0.0
    %946 = vmatpush1.msra.mxu0 %v919
    %947 = vmatprep.subr.mxu0 0.0
    %948 = vmatpush1.msra.mxu0 %v920
    %949 = vmatprep.subr.mxu0 0.0
    %950 = vmatpush1.msra.mxu0 %v921
    %951 = vmatprep.subr.mxu0 0.0
    %952 = vmatpush1.msra.mxu0 %v922
    %953 = vmatprep.subr.mxu0 0.0
    %954 = vmatpush1.msra.mxu0 %v923
    %955 = vmatprep.subr.mxu0 0.0
    %956 = vmatpush1.msra.mxu0 %v924
    %957 = vmatprep.subr.mxu0 0.0
    %958 = vmatpush1.msra.mxu0 0.0
    %959 = vmatprep.subr.mxu0 0.0
    %960 = vmatpush1.msra.mxu0 0.0
    %961 = vmatprep.subr.mxu0 0.0
    %962 = vmatpush1.msra.mxu0 0.0
    %963 = vmatprep.subr.mxu0 0.0
    %964 = vmatpush1.msra.mxu0 0.0
    %965 = vmatprep.subr.mxu0 0.0
    %966 = vmatpush1.msra.mxu0 0.0
    %967 = vmatprep.subr.mxu0 0.0
    %968 = vmatpush1.msra.mxu0 0.0
    %969 = vmatprep.subr.mxu0 0.0
    %970 = vmatpush1.msra.mxu0 0.0
    %971 = vmatprep.subr.mxu0 0.0
    %972 = vmatpush1.msra.mxu0 0.0
    %973 = vmatprep.subr.mxu0 0.0
    %974 = vmatpush1.msra.mxu0 0.0
    %975 = vmatprep.subr.mxu0 0.0
    %976 = vmatpush1.msra.mxu0 0.0
    %977 = vmatprep.subr.mxu0 0.0
    %978 = vmatpush1.msra.mxu0 0.0
    %979 = vmatprep.subr.mxu0 0.0
    %980 = vmatpush1.msra.mxu0 0.0
    %981 = vmatprep.subr.mxu0 0.0
    %982 = vmatpush1.msra.mxu0 0.0
    %983 = vmatprep.subr.mxu0 0.0
    %984 = vmatpush1.msra.mxu0 0.0
    %985 = vmatprep.subr.mxu0 0.0
    %986 = vmatpush1.msra.mxu0 0.0
    %987 = vmatprep.subr.mxu0 0.0
    %988 = vmatpush1.msra.mxu0 0.0
    %989 = vmatprep.mubr.f32.mxu0 0.0
    %990 = vmatmul.mubr.f32.gmra.mrb[0].mxu0 %v907
    %v991 = vpop.f32.mrb[0].mxu0
    %v992 = vadd.f32 0.0, %v991
    %v993 = vpop.f32.mrb[0].mxu0
    %994 = vdwg.mxu0
    %v995 = vadd.f32 %v277, %v992
    %v996 = vmul.f32 %v995, 0.5
    %v997 = vtanh.pop %v996
    %v998 = vmul.f32 %v997, 0.5
    %v999 = vadd.f32 %v998, 0.5
    %v1000 = vtanh.pop %v995
    %1001 = vrot.lane.b32.xlu0 %v999, 96
    %v1002 = vpop.permute.xlu0 %1001
    %1003 = vrot.lane.b32.xlu0 %v1000, 64
    %v1004 = vpop.permute.xlu0 %1003
    %1005 = vrot.lane.b32.xlu0 %v999, 32
    %v1006 = vpop.permute.xlu0 %1005
    %v1007 = vmul.f32 %v1002, %v905
    %v1008 = vmul.f32 %v999, %v1004
    %v1009 = vadd.f32 %v1007, %v1008
    %v1010 = vtanh.pop %v1009
    %v1011 = vmul.f32 %v1006, %v1010
    %1012 = vst [vmem:[#allocation2 + $0x30] sm:$0xff] %v1011
    %v1013 = vld [vmem:[#allocation5] sm:$0xff]
    %v1014 = vld [vmem:[#allocation5 + $0x8] sm:$0xff]
    %v1015 = vld [vmem:[#allocation5 + $0x10] sm:$0xff]
    %v1016 = vld [vmem:[#allocation5 + $0x18] sm:$0xff]
    %v1017 = vld [vmem:[#allocation5 + $0x20] sm:$0xff]
    %v1018 = vld [vmem:[#allocation5 + $0x28] sm:$0xff]
    %v1019 = vld [vmem:[#allocation5 + $0x30] sm:$0xff]
    %v1020 = vld [vmem:[#allocation5 + $0x38] sm:$0xff]
    %v1021 = vld [vmem:[#allocation5 + $0x40] sm:$0xff]
    %v1022 = vld [vmem:[#allocation5 + $0x48] sm:$0xff]
    %v1023 = vld [vmem:[#allocation5 + $0x50] sm:$0xff]
    %v1024 = vld [vmem:[#allocation5 + $0x58] sm:$0xff]
    %v1025 = vld [vmem:[#allocation5 + $0x60] sm:$0xff]
    %v1026 = vld [vmem:[#allocation5 + $0x68] sm:$0xff]
    %v1027 = vld [vmem:[#allocation5 + $0x70] sm:$0xff]
    %v1028 = vld [vmem:[#allocation5 + $0x78] sm:$0xff]
    %1029 = vmatprep.subr.mxu0 0.0
    %1030 = vmatpush1.msra.mxu0 %v1013
    %1031 = vmatprep.subr.mxu0 0.0
    %1032 = vmatpush1.msra.mxu0 %v1014
    %1033 = vmatprep.subr.mxu0 0.0
    %1034 = vmatpush1.msra.mxu0 %v1015
    %1035 = vmatprep.subr.mxu0 0.0
    %1036 = vmatpush1.msra.mxu0 %v1016
    %1037 = vmatprep.subr.mxu0 0.0
    %1038 = vmatpush1.msra.mxu0 %v1017
    %1039 = vmatprep.subr.mxu0 0.0
    %1040 = vmatpush1.msra.mxu0 %v1018
    %1041 = vmatprep.subr.mxu0 0.0
    %1042 = vmatpush1.msra.mxu0 %v1019
    %1043 = vmatprep.subr.mxu0 0.0
    %1044 = vmatpush1.msra.mxu0 %v1020
    %1045 = vmatprep.subr.mxu0 0.0
    %1046 = vmatpush1.msra.mxu0 %v1021
    %1047 = vmatprep.subr.mxu0 0.0
    %1048 = vmatpush1.msra.mxu0 %v1022
    %1049 = vmatprep.subr.mxu0 0.0
    %1050 = vmatpush1.msra.mxu0 %v1023
    %1051 = vmatprep.subr.mxu0 0.0
    %1052 = vmatpush1.msra.mxu0 %v1024
    %1053 = vmatprep.subr.mxu0 0.0
    %1054 = vmatpush1.msra.mxu0 %v1025
    %1055 = vmatprep.subr.mxu0 0.0
    %1056 = vmatpush1.msra.mxu0 %v1026
    %1057 = vmatprep.subr.mxu0 0.0
    %1058 = vmatpush1.msra.mxu0 %v1027
    %1059 = vmatprep.subr.mxu0 0.0
    %1060 = vmatpush1.msra.mxu0 %v1028
    %1061 = vmatprep.subr.mxu0 0.0
    %1062 = vmatpush1.msra.mxu0 0.0
    %1063 = vmatprep.subr.mxu0 0.0
    %1064 = vmatpush1.msra.mxu0 0.0
    %1065 = vmatprep.subr.mxu0 0.0
    %1066 = vmatpush1.msra.mxu0 0.0
    %1067 = vmatprep.subr.mxu0 0.0
    %1068 = vmatpush1.msra.mxu0 0.0
    %1069 = vmatprep.subr.mxu0 0.0
    %1070 = vmatpush1.msra.mxu0 0.0
    %1071 = vmatprep.subr.mxu0 0.0
    %1072 = vmatpush1.msra.mxu0 0.0
    %1073 = vmatprep.subr.mxu0 0.0
    %1074 = vmatpush1.msra.mxu0 0.0
    %1075 = vmatprep.subr.mxu0 0.0
    %1076 = vmatpush1.msra.mxu0 0.0
    %1077 = vmatprep.subr.mxu0 0.0
    %1078 = vmatpush1.msra.mxu0 0.0
    %1079 = vmatprep.subr.mxu0 0.0
    %1080 = vmatpush1.msra.mxu0 0.0
    %1081 = vmatprep.subr.mxu0 0.0
    %1082 = vmatpush1.msra.mxu0 0.0
    %1083 = vmatprep.subr.mxu0 0.0
    %1084 = vmatpush1.msra.mxu0 0.0
    %1085 = vmatprep.subr.mxu0 0.0
    %1086 = vmatpush1.msra.mxu0 0.0
    %1087 = vmatprep.subr.mxu0 0.0
    %1088 = vmatpush1.msra.mxu0 0.0
    %1089 = vmatprep.subr.mxu0 0.0
    %1090 = vmatpush1.msra.mxu0 0.0
    %1091 = vmatprep.subr.mxu0 0.0
    %1092 = vmatpush1.msra.mxu0 0.0
    %1093 = vmatprep.mubr.f32.mxu0 0.0
    %1094 = vmatmul.mubr.f32.gmra.mrb[0].mxu0 %v1011
    %v1095 = vpop.f32.mrb[0].mxu0
    %v1096 = vadd.f32 0.0, %v1095
    %v1097 = vpop.f32.mrb[0].mxu0
    %1098 = vdwg.mxu0
    %v1099 = vadd.f32 %v282, %v1096
    %v1100 = vmul.f32 %v1099, 0.5
    %v1101 = vtanh.pop %v1100
    %v1102 = vmul.f32 %v1101, 0.5
    %v1103 = vadd.f32 %v1102, 0.5
    %v1104 = vtanh.pop %v1099
    %1105 = vrot.lane.b32.xlu0 %v1103, 96
    %v1106 = vpop.permute.xlu0 %1105
    %1107 = vrot.lane.b32.xlu0 %v1104, 64
    %v1108 = vpop.permute.xlu0 %1107
    %1109 = vrot.lane.b32.xlu0 %v1103, 32
    %v1110 = vpop.permute.xlu0 %1109
    %v1111 = vmul.f32 %v1106, %v1009
    %v1112 = vmul.f32 %v1103, %v1108
    %v1113 = vadd.f32 %v1111, %v1112
    %v1114 = vtanh.pop %v1113
    %v1115 = vmul.f32 %v1110, %v1114
    %1116 = vst [vmem:[#allocation2 + $0x38] sm:$0xff] %v1115
    %v1117 = vld [vmem:[#allocation2] sm:$0xff]
    %v1118 = vld [vmem:[#allocation2 + $0x8] sm:$0xff]
    %v1119 = vld [vmem:[#allocation2 + $0x10] sm:$0xff]
    %v1120 = vld [vmem:[#allocation2 + $0x18] sm:$0xff]
    %v1121 = vld [vmem:[#allocation2 + $0x20] sm:$0xff]
    %v1122 = vld [vmem:[#allocation2 + $0x28] sm:$0xff]
    %v1123 = vld [vmem:[#allocation2 + $0x30] sm:$0xff]
    %v1124 = vld [vmem:[#allocation2 + $0x38] sm:$0xff]
    %v1125 = vld [vmem:[#allocation7] sm:$0xff]
    %v1126 = vld [vmem:[#allocation7 + $0x8] sm:$0xff]
    %v1127 = vld [vmem:[#allocation7 + $0x10] sm:$0xff]
    %v1128 = vld [vmem:[#allocation7 + $0x18] sm:$0xff]
    %v1129 = vld [vmem:[#allocation7 + $0x20] sm:$0xff]
    %v1130 = vld [vmem:[#allocation7 + $0x28] sm:$0xff]
    %v1131 = vld [vmem:[#allocation7 + $0x30] sm:$0xff]
    %v1132 = vld [vmem:[#allocation7 + $0x38] sm:$0xff]
    %v1133 = vld [vmem:[#allocation7 + $0x40] sm:$0xff]
    %v1134 = vld [vmem:[#allocation7 + $0x48] sm:$0xff]
    %v1135 = vld [vmem:[#allocation7 + $0x50] sm:$0xff]
    %v1136 = vld [vmem:[#allocation7 + $0x58] sm:$0xff]
    %v1137 = vld [vmem:[#allocation7 + $0x60] sm:$0xff]
    %v1138 = vld [vmem:[#allocation7 + $0x68] sm:$0xff]
    %v1139 = vld [vmem:[#allocation7 + $0x70] sm:$0xff]
    %v1140 = vld [vmem:[#allocation7 + $0x78] sm:$0xff]
    %v1141 = vld [vmem:[%s6] sm:$0x1]
    %v1143 = vlaneseq
    %v1144 = vshrl.u32 %v1143, 7
    %v1145 = vsub.s32 0, %v1144
    %v1146 = vrot.slane %v1141, %v1145
    %1148 = vmatprep.subr.mxu0 0.0
    %1149 = vmatpush1.msra.mxu0 %v1125
    %1150 = vmatprep.subr.mxu0 0.0
    %1151 = vmatpush1.msra.mxu0 %v1126
    %1152 = vmatprep.subr.mxu0 0.0
    %1153 = vmatpush1.msra.mxu0 %v1127
    %1154 = vmatprep.subr.mxu0 0.0
    %1155 = vmatpush1.msra.mxu0 %v1128
    %1156 = vmatprep.subr.mxu0 0.0
    %1157 = vmatpush1.msra.mxu0 %v1129
    %1158 = vmatprep.subr.mxu0 0.0
    %1159 = vmatpush1.msra.mxu0 %v1130
    %1160 = vmatprep.subr.mxu0 0.0
    %1161 = vmatpush1.msra.mxu0 %v1131
    %1162 = vmatprep.subr.mxu0 0.0
    %1163 = vmatpush1.msra.mxu0 %v1132
    %1164 = vmatprep.subr.mxu0 0.0
    %1165 = vmatpush1.msra.mxu0 %v1133
    %1166 = vmatprep.subr.mxu0 0.0
    %1167 = vmatpush1.msra.mxu0 %v1134
    %1168 = vmatprep.subr.mxu0 0.0
    %1169 = vmatpush1.msra.mxu0 %v1135
    %1170 = vmatprep.subr.mxu0 0.0
    %1171 = vmatpush1.msra.mxu0 %v1136
    %1172 = vmatprep.subr.mxu0 0.0
    %1173 = vmatpush1.msra.mxu0 %v1137
    %1174 = vmatprep.subr.mxu0 0.0
    %1175 = vmatpush1.msra.mxu0 %v1138
    %1176 = vmatprep.subr.mxu0 0.0
    %1177 = vmatpush1.msra.mxu0 %v1139
    %1178 = vmatprep.subr.mxu0 0.0
    %1179 = vmatpush1.msra.mxu0 %v1140
    %1180 = vmatprep.subr.mxu0 0.0
    %1181 = vmatpush1.msra.mxu0 0.0
    %1182 = vmatprep.subr.mxu0 0.0
    %1183 = vmatpush1.msra.mxu0 0.0
    %1184 = vmatprep.subr.mxu0 0.0
    %1185 = vmatpush1.msra.mxu0 0.0
    %1186 = vmatprep.subr.mxu0 0.0
    %1187 = vmatpush1.msra.mxu0 0.0
    %1188 = vmatprep.subr.mxu0 0.0
    %1189 = vmatpush1.msra.mxu0 0.0
    %1190 = vmatprep.subr.mxu0 0.0
    %1191 = vmatpush1.msra.mxu0 0.0
    %1192 = vmatprep.subr.mxu0 0.0
    %1193 = vmatpush1.msra.mxu0 0.0
    %1194 = vmatprep.subr.mxu0 0.0
    %1195 = vmatpush1.msra.mxu0 0.0
    %1196 = vmatprep.subr.mxu0 0.0
    %1197 = vmatpush1.msra.mxu0 0.0
    %1198 = vmatprep.subr.mxu0 0.0
    %1199 = vmatpush1.msra.mxu0 0.0
    %1200 = vmatprep.subr.mxu0 0.0
    %1201 = vmatpush1.msra.mxu0 0.0
    %1202 = vmatprep.subr.mxu0 0.0
    %1203 = vmatpush1.msra.mxu0 0.0
    %1204 = vmatprep.subr.mxu0 0.0
    %1205 = vmatpush1.msra.mxu0 0.0
    %1206 = vmatprep.subr.mxu0 0.0
    %1207 = vmatpush1.msra.mxu0 0.0
    %1208 = vmatprep.subr.mxu0 0.0
    %1209 = vmatpush1.msra.mxu0 0.0
    %1210 = vmatprep.subr.mxu0 0.0
    %1211 = vmatpush1.msra.mxu0 0.0
    %1212 = vmatprep.mubr.f32.mxu0 0.0
    %1213 = vmatmul.mubr.f32.gmra.mrb[0].mxu0 %v1117
    %v1214 = vpop.f32.mrb[0].mxu0
    %v1215 = vadd.f32 %v1146, %v1214
    %v1216 = vpop.f32.mrb[0].mxu0
    %1217 = vmatprep.mubr.f32.mxu0 0.0
    %1218 = vmatmul.mubr.f32.gmra.mrb[0].mxu0 %v1118
    %v1219 = vpop.f32.mrb[0].mxu0
    %v1220 = vadd.f32 %v1146, %v1219
    %v1221 = vpop.f32.mrb[0].mxu0
    %1222 = vmatprep.mubr.f32.mxu0 0.0
    %1223 = vmatmul.mubr.f32.gmra.mrb[0].mxu0 %v1119
    %v1224 = vpop.f32.mrb[0].mxu0
    %v1225 = vadd.f32 %v1146, %v1224
    %v1226 = vpop.f32.mrb[0].mxu0
    %1227 = vmatprep.mubr.f32.mxu0 0.0
    %1228 = vmatmul.mubr.f32.gmra.mrb[0].mxu0 %v1120
    %v1229 = vpop.f32.mrb[0].mxu0
    %v1230 = vadd.f32 %v1146, %v1229
    %v1231 = vpop.f32.mrb[0].mxu0
    %1232 = vmatprep.mubr.f32.mxu0 0.0
    %1233 = vmatmul.mubr.f32.gmra.mrb[0].mxu0 %v1121
    %v1234 = vpop.f32.mrb[0].mxu0
    %v1235 = vadd.f32 %v1146, %v1234
    %v1236 = vpop.f32.mrb[0].mxu0
    %1237 = vmatprep.mubr.f32.mxu0 0.0
    %1238 = vmatmul.mubr.f32.gmra.mrb[0].mxu0 %v1122
    %v1239 = vpop.f32.mrb[0].mxu0
    %v1240 = vadd.f32 %v1146, %v1239
    %v1241 = vpop.f32.mrb[0].mxu0
    %1242 = vmatprep.mubr.f32.mxu0 0.0
    %1243 = vmatmul.mubr.f32.gmra.mrb[0].mxu0 %v1123
    %v1244 = vpop.f32.mrb[0].mxu0
    %v1245 = vadd.f32 %v1146, %v1244
    %v1246 = vpop.f32.mrb[0].mxu0
    %1247 = vmatprep.mubr.f32.mxu0 0.0
    %1248 = vmatmul.mubr.f32.gmra.mrb[0].mxu0 %v1124
    %v1249 = vpop.f32.mrb[0].mxu0
    %v1250 = vadd.f32 %v1146, %v1249
    %v1251 = vpop.f32.mrb[0].mxu0
    %1252 = vdwg.mxu0
    %v1253 = vld [vmem:[#allocation8] sm:$0xff]
    %v1254 = vld [vmem:[#allocation8 + $0x8] sm:$0xff]
    %v1255 = vld [vmem:[#allocation8 + $0x10] sm:$0xff]
    %v1256 = vld [vmem:[#allocation8 + $0x18] sm:$0xff]
    %v1257 = vld [vmem:[#allocation8 + $0x20] sm:$0xff]
    %v1258 = vld [vmem:[#allocation8 + $0x28] sm:$0xff]
    %v1259 = vld [vmem:[#allocation8 + $0x30] sm:$0xff]
    %v1260 = vld [vmem:[#allocation8 + $0x38] sm:$0xff]
    %v1261 = vld [vmem:[#allocation8 + $0x40] sm:$0xff]
    %v1262 = vld [vmem:[#allocation8 + $0x48] sm:$0xff]
    %v1263 = vld [vmem:[#allocation8 + $0x50] sm:$0xff]
    %v1264 = vld [vmem:[#allocation8 + $0x58] sm:$0xff]
    %v1265 = vld [vmem:[#allocation8 + $0x60] sm:$0xff]
    %v1266 = vld [vmem:[#allocation8 + $0x68] sm:$0xff]
    %v1267 = vld [vmem:[#allocation8 + $0x70] sm:$0xff]
    %v1268 = vld [vmem:[#allocation8 + $0x78] sm:$0xff]
    %1269 = vmatprep.subr.mxu0 0.0
    %1270 = vmatpush1.msra.mxu0 %v1253
    %1271 = vmatprep.subr.mxu0 0.0
    %1272 = vmatpush1.msra.mxu0 %v1254
    %1273 = vmatprep.subr.mxu0 0.0
    %1274 = vmatpush1.msra.mxu0 %v1255
    %1275 = vmatprep.subr.mxu0 0.0
    %1276 = vmatpush1.msra.mxu0 %v1256
    %1277 = vmatprep.subr.mxu0 0.0
    %1278 = vmatpush1.msra.mxu0 %v1257
    %1279 = vmatprep.subr.mxu0 0.0
    %1280 = vmatpush1.msra.mxu0 %v1258
    %1281 = vmatprep.subr.mxu0 0.0
    %1282 = vmatpush1.msra.mxu0 %v1259
    %1283 = vmatprep.subr.mxu0 0.0
    %1284 = vmatpush1.msra.mxu0 %v1260
    %1285 = vmatprep.subr.mxu0 0.0
    %1286 = vmatpush1.msra.mxu0 %v1261
    %1287 = vmatprep.subr.mxu0 0.0
    %1288 = vmatpush1.msra.mxu0 %v1262
    %1289 = vmatprep.subr.mxu0 0.0
    %1290 = vmatpush1.msra.mxu0 %v1263
    %1291 = vmatprep.subr.mxu0 0.0
    %1292 = vmatpush1.msra.mxu0 %v1264
    %1293 = vmatprep.subr.mxu0 0.0
    %1294 = vmatpush1.msra.mxu0 %v1265
    %1295 = vmatprep.subr.mxu0 0.0
    %1296 = vmatpush1.msra.mxu0 %v1266
    %1297 = vmatprep.subr.mxu0 0.0
    %1298 = vmatpush1.msra.mxu0 %v1267
    %1299 = vmatprep.subr.mxu0 0.0
    %1300 = vmatpush1.msra.mxu0 %v1268
    %1301 = vmatprep.subr.mxu0 0.0
    %1302 = vmatpush1.msra.mxu0 0.0
    %1303 = vmatprep.subr.mxu0 0.0
    %1304 = vmatpush1.msra.mxu0 0.0
    %1305 = vmatprep.subr.mxu0 0.0
    %1306 = vmatpush1.msra.mxu0 0.0
    %1307 = vmatprep.subr.mxu0 0.0
    %1308 = vmatpush1.msra.mxu0 0.0
    %1309 = vmatprep.subr.mxu0 0.0
    %1310 = vmatpush1.msra.mxu0 0.0
    %1311 = vmatprep.subr.mxu0 0.0
    %1312 = vmatpush1.msra.mxu0 0.0
    %1313 = vmatprep.subr.mxu0 0.0
    %1314 = vmatpush1.msra.mxu0 0.0
    %1315 = vmatprep.subr.mxu0 0.0
    %1316 = vmatpush1.msra.mxu0 0.0
    %1317 = vmatprep.subr.mxu0 0.0
    %1318 = vmatpush1.msra.mxu0 0.0
    %1319 = vmatprep.subr.mxu0 0.0
    %1320 = vmatpush1.msra.mxu0 0.0
    %1321 = vmatprep.subr.mxu0 0.0
    %1322 = vmatpush1.msra.mxu0 0.0
    %1323 = vmatprep.subr.mxu0 0.0
    %1324 = vmatpush1.msra.mxu0 0.0
    %1325 = vmatprep.subr.mxu0 0.0
    %1326 = vmatpush1.msra.mxu0 0.0
    %1327 = vmatprep.subr.mxu0 0.0
    %1328 = vmatpush1.msra.mxu0 0.0
    %1329 = vmatprep.subr.mxu0 0.0
    %1330 = vmatpush1.msra.mxu0 0.0
    %1331 = vmatprep.subr.mxu0 0.0
    %1332 = vmatpush1.msra.mxu0 0.0
    %1333 = vmatprep.mubr.f32.mxu0 0.0
    %1334 = vmatmul.mubr.f32.gmra.mrb[0].mxu0 0.0
    %v1335 = vpop.f32.mrb[0].mxu0
    %v1336 = vadd.f32 0.0, %v1335
    %v1337 = vpop.f32.mrb[0].mxu0
    %1338 = vdwg.mxu0
    %v1339 = vadd.f32 %v1215, %v1336
    %v1340 = vmul.f32 %v1339, 0.5
    %v1341 = vtanh.pop %v1340
    %v1342 = vmul.f32 %v1341, 0.5
    %v1343 = vadd.f32 %v1342, 0.5
    %v1344 = vtanh.pop %v1339
    %1345 = vrot.lane.b32.xlu0 %v1343, 96
    %v1346 = vpop.permute.xlu0 %1345
    %1347 = vrot.lane.b32.xlu0 %v1344, 64
    %v1348 = vpop.permute.xlu0 %1347
    %1349 = vrot.lane.b32.xlu0 %v1343, 32
    %v1350 = vpop.permute.xlu0 %1349
    %v1351 = vmul.f32 %v1346, 0.0
    %v1352 = vmul.f32 %v1343, %v1348
    %v1353 = vadd.f32 %v1351, %v1352
    %v1354 = vtanh.pop %v1353
    %v1355 = vmul.f32 %v1350, %v1354
    %1356 = vst [vmem:[#allocation2] sm:$0xff] %v1355
    %v1357 = vld [vmem:[#allocation8] sm:$0xff]
    %v1358 = vld [vmem:[#allocation8 + $0x8] sm:$0xff]
    %v1359 = vld [vmem:[#allocation8 + $0x10] sm:$0xff]
    %v1360 = vld [vmem:[#allocation8 + $0x18] sm:$0xff]
    %v1361 = vld [vmem:[#allocation8 + $0x20] sm:$0xff]
    %v1362 = vld [vmem:[#allocation8 + $0x28] sm:$0xff]
    %v1363 = vld [vmem:[#allocation8 + $0x30] sm:$0xff]
    %v1364 = vld [vmem:[#allocation8 + $0x38] sm:$0xff]
    %v1365 = vld [vmem:[#allocation8 + $0x40] sm:$0xff]
    %v1366 = vld [vmem:[#allocation8 + $0x48] sm:$0xff]
    %v1367 = vld [vmem:[#allocation8 + $0x50] sm:$0xff]
    %v1368 = vld [vmem:[#allocation8 + $0x58] sm:$0xff]
    %v1369 = vld [vmem:[#allocation8 + $0x60] sm:$0xff]
    %v1370 = vld [vmem:[#allocation8 + $0x68] sm:$0xff]
    %v1371 = vld [vmem:[#allocation8 + $0x70] sm:$0xff]
    %v1372 = vld [vmem:[#allocation8 + $0x78] sm:$0xff]
    %1373 = vmatprep.subr.mxu0 0.0
    %1374 = vmatpush1.msra.mxu0 %v1357
    %1375 = vmatprep.subr.mxu0 0.0
    %1376 = vmatpush1.msra.mxu0 %v1358
    %1377 = vmatprep.subr.mxu0 0.0
    %1378 = vmatpush1.msra.mxu0 %v1359
    %1379 = vmatprep.subr.mxu0 0.0
    %1380 = vmatpush1.msra.mxu0 %v1360
    %1381 = vmatprep.subr.mxu0 0.0
    %1382 = vmatpush1.msra.mxu0 %v1361
    %1383 = vmatprep.subr.mxu0 0.0
    %1384 = vmatpush1.msra.mxu0 %v1362
    %1385 = vmatprep.subr.mxu0 0.0
    %1386 = vmatpush1.msra.mxu0 %v1363
    %1387 = vmatprep.subr.mxu0 0.0
    %1388 = vmatpush1.msra.mxu0 %v1364
    %1389 = vmatprep.subr.mxu0 0.0
    %1390 = vmatpush1.msra.mxu0 %v1365
    %1391 = vmatprep.subr.mxu0 0.0
    %1392 = vmatpush1.msra.mxu0 %v1366
    %1393 = vmatprep.subr.mxu0 0.0
    %1394 = vmatpush1.msra.mxu0 %v1367
    %1395 = vmatprep.subr.mxu0 0.0
    %1396 = vmatpush1.msra.mxu0 %v1368
    %1397 = vmatprep.subr.mxu0 0.0
    %1398 = vmatpush1.msra.mxu0 %v1369
    %1399 = vmatprep.subr.mxu0 0.0
    %1400 = vmatpush1.msra.mxu0 %v1370
    %1401 = vmatprep.subr.mxu0 0.0
    %1402 = vmatpush1.msra.mxu0 %v1371
    %1403 = vmatprep.subr.mxu0 0.0
    %1404 = vmatpush1.msra.mxu0 %v1372
    %1405 = vmatprep.subr.mxu0 0.0
    %1406 = vmatpush1.msra.mxu0 0.0
    %1407 = vmatprep.subr.mxu0 0.0
    %1408 = vmatpush1.msra.mxu0 0.0
    %1409 = vmatprep.subr.mxu0 0.0
    %1410 = vmatpush1.msra.mxu0 0.0
    %1411 = vmatprep.subr.mxu0 0.0
    %1412 = vmatpush1.msra.mxu0 0.0
    %1413 = vmatprep.subr.mxu0 0.0
    %1414 = vmatpush1.msra.mxu0 0.0
    %1415 = vmatprep.subr.mxu0 0.0
    %1416 = vmatpush1.msra.mxu0 0.0
    %1417 = vmatprep.subr.mxu0 0.0
    %1418 = vmatpush1.msra.mxu0 0.0
    %1419 = vmatprep.subr.mxu0 0.0
    %1420 = vmatpush1.msra.mxu0 0.0
    %1421 = vmatprep.subr.mxu0 0.0
    %1422 = vmatpush1.msra.mxu0 0.0
    %1423 = vmatprep.subr.mxu0 0.0
    %1424 = vmatpush1.msra.mxu0 0.0
    %1425 = vmatprep.subr.mxu0 0.0
    %1426 = vmatpush1.msra.mxu0 0.0
    %1427 = vmatprep.subr.mxu0 0.0
    %1428 = vmatpush1.msra.mxu0 0.0
    %1429 = vmatprep.subr.mxu0 0.0
    %1430 = vmatpush1.msra.mxu0 0.0
    %1431 = vmatprep.subr.mxu0 0.0
    %1432 = vmatpush1.msra.mxu0 0.0
    %1433 = vmatprep.subr.mxu0 0.0
    %1434 = vmatpush1.msra.mxu0 0.0
    %1435 = vmatprep.subr.mxu0 0.0
    %1436 = vmatpush1.msra.mxu0 0.0
    %1437 = vmatprep.mubr.f32.mxu0 0.0
    %1438 = vmatmul.mubr.f32.gmra.mrb[0].mxu0 %v1355
    %v1439 = vpop.f32.mrb[0].mxu0
    %v1440 = vadd.f32 0.0, %v1439
    %v1441 = vpop.f32.mrb[0].mxu0
    %1442 = vdwg.mxu0
    %v1443 = vadd.f32 %v1220, %v1440
    %v1444 = vmul.f32 %v1443, 0.5
    %v1445 = vtanh.pop %v1444
    %v1446 = vmul.f32 %v1445, 0.5
    %v1447 = vadd.f32 %v1446, 0.5
    %v1448 = vtanh.pop %v1443
    %1449 = vrot.lane.b32.xlu0 %v1447, 96
    %v1450 = vpop.permute.xlu0 %1449
    %1451 = vrot.lane.b32.xlu0 %v1448, 64
    %v1452 = vpop.permute.xlu0 %1451
    %1453 = vrot.lane.b32.xlu0 %v1447, 32
    %v1454 = vpop.permute.xlu0 %1453
    %v1455 = vmul.f32 %v1450, %v1353
    %v1456 = vmul.f32 %v1447, %v1452
    %v1457 = vadd.f32 %v1455, %v1456
    %v1458 = vtanh.pop %v1457
    %v1459 = vmul.f32 %v1454, %v1458
    %1460 = vst [vmem:[#allocation2 + $0x8] sm:$0xff] %v1459
    %v1461 = vld [vmem:[#allocation8] sm:$0xff]
    %v1462 = vld [vmem:[#allocation8 + $0x8] sm:$0xff]
    %v1463 = vld [vmem:[#allocation8 + $0x10] sm:$0xff]
    %v1464 = vld [vmem:[#allocation8 + $0x18] sm:$0xff]
    %v1465 = vld [vmem:[#allocation8 + $0x20] sm:$0xff]
    %v1466 = vld [vmem:[#allocation8 + $0x28] sm:$0xff]
    %v1467 = vld [vmem:[#allocation8 + $0x30] sm:$0xff]
    %v1468 = vld [vmem:[#allocation8 + $0x38] sm:$0xff]
    %v1469 = vld [vmem:[#allocation8 + $0x40] sm:$0xff]
    %v1470 = vld [vmem:[#allocation8 + $0x48] sm:$0xff]
    %v1471 = vld [vmem:[#allocation8 + $0x50] sm:$0xff]
    %v1472 = vld [vmem:[#allocation8 + $0x58] sm:$0xff]
    %v1473 = vld [vmem:[#allocation8 + $0x60] sm:$0xff]
    %v1474 = vld [vmem:[#allocation8 + $0x68] sm:$0xff]
    %v1475 = vld [vmem:[#allocation8 + $0x70] sm:$0xff]
    %v1476 = vld [vmem:[#allocation8 + $0x78] sm:$0xff]
    %1477 = vmatprep.subr.mxu0 0.0
    %1478 = vmatpush1.msra.mxu0 %v1461
    %1479 = vmatprep.subr.mxu0 0.0
    %1480 = vmatpush1.msra.mxu0 %v1462
    %1481 = vmatprep.subr.mxu0 0.0
    %1482 = vmatpush1.msra.mxu0 %v1463
    %1483 = vmatprep.subr.mxu0 0.0
    %1484 = vmatpush1.msra.mxu0 %v1464
    %1485 = vmatprep.subr.mxu0 0.0
    %1486 = vmatpush1.msra.mxu0 %v1465
    %1487 = vmatprep.subr.mxu0 0.0
    %1488 = vmatpush1.msra.mxu0 %v1466
    %1489 = vmatprep.subr.mxu0 0.0
    %1490 = vmatpush1.msra.mxu0 %v1467
    %1491 = vmatprep.subr.mxu0 0.0
    %1492 = vmatpush1.msra.mxu0 %v1468
    %1493 = vmatprep.subr.mxu0 0.0
    %1494 = vmatpush1.msra.mxu0 %v1469
    %1495 = vmatprep.subr.mxu0 0.0
    %1496 = vmatpush1.msra.mxu0 %v1470
    %1497 = vmatprep.subr.mxu0 0.0
    %1498 = vmatpush1.msra.mxu0 %v1471
    %1499 = vmatprep.subr.mxu0 0.0
    %1500 = vmatpush1.msra.mxu0 %v1472
    %1501 = vmatprep.subr.mxu0 0.0
    %1502 = vmatpush1.msra.mxu0 %v1473
    %1503 = vmatprep.subr.mxu0 0.0
    %1504 = vmatpush1.msra.mxu0 %v1474
    %1505 = vmatprep.subr.mxu0 0.0
    %1506 = vmatpush1.msra.mxu0 %v1475
    %1507 = vmatprep.subr.mxu0 0.0
    %1508 = vmatpush1.msra.mxu0 %v1476
    %1509 = vmatprep.subr.mxu0 0.0
    %1510 = vmatpush1.msra.mxu0 0.0
    %1511 = vmatprep.subr.mxu0 0.0
    %1512 = vmatpush1.msra.mxu0 0.0
    %1513 = vmatprep.subr.mxu0 0.0
    %1514 = vmatpush1.msra.mxu0 0.0
    %1515 = vmatprep.subr.mxu0 0.0
    %1516 = vmatpush1.msra.mxu0 0.0
    %1517 = vmatprep.subr.mxu0 0.0
    %1518 = vmatpush1.msra.mxu0 0.0
    %1519 = vmatprep.subr.mxu0 0.0
    %1520 = vmatpush1.msra.mxu0 0.0
    %1521 = vmatprep.subr.mxu0 0.0
    %1522 = vmatpush1.msra.mxu0 0.0
    %1523 = vmatprep.subr.mxu0 0.0
    %1524 = vmatpush1.msra.mxu0 0.0
    %1525 = vmatprep.subr.mxu0 0.0
    %1526 = vmatpush1.msra.mxu0 0.0
    %1527 = vmatprep.subr.mxu0 0.0
    %1528 = vmatpush1.msra.mxu0 0.0
    %1529 = vmatprep.subr.mxu0 0.0
    %1530 = vmatpush1.msra.mxu0 0.0
    %1531 = vmatprep.subr.mxu0 0.0
    %1532 = vmatpush1.msra.mxu0 0.0
    %1533 = vmatprep.subr.mxu0 0.0
    %1534 = vmatpush1.msra.mxu0 0.0
    %1535 = vmatprep.subr.mxu0 0.0
    %1536 = vmatpush1.msra.mxu0 0.0
    %1537 = vmatprep.subr.mxu0 0.0
    %1538 = vmatpush1.msra.mxu0 0.0
    %1539 = vmatprep.subr.mxu0 0.0
    %1540 = vmatpush1.msra.mxu0 0.0
    %1541 = vmatprep.mubr.f32.mxu0 0.0
    %1542 = vmatmul.mubr.f32.gmra.mrb[0].mxu0 %v1459
    %v1543 = vpop.f32.mrb[0].mxu0
    %v1544 = vadd.f32 0.0, %v1543
    %v1545 = vpop.f32.mrb[0].mxu0
    %1546 = vdwg.mxu0
    %v1547 = vadd.f32 %v1225, %v1544
    %v1548 = vmul.f32 %v1547, 0.5
    %v1549 = vtanh.pop %v1548
    %v1550 = vmul.f32 %v1549, 0.5
    %v1551 = vadd.f32 %v1550, 0.5
    %v1552 = vtanh.pop %v1547
    %1553 = vrot.lane.b32.xlu0 %v1551, 96
    %v1554 = vpop.permute.xlu0 %1553
    %1555 = vrot.lane.b32.xlu0 %v1552, 64
    %v1556 = vpop.permute.xlu0 %1555
    %1557 = vrot.lane.b32.xlu0 %v1551, 32
    %v1558 = vpop.permute.xlu0 %1557
    %v1559 = vmul.f32 %v1554, %v1457
    %v1560 = vmul.f32 %v1551, %v1556
    %v1561 = vadd.f32 %v1559, %v1560
    %v1562 = vtanh.pop %v1561
    %v1563 = vmul.f32 %v1558, %v1562
    %1564 = vst [vmem:[#allocation2 + $0x10] sm:$0xff] %v1563
    %v1565 = vld [vmem:[#allocation8] sm:$0xff]
    %v1566 = vld [vmem:[#allocation8 + $0x8] sm:$0xff]
    %v1567 = vld [vmem:[#allocation8 + $0x10] sm:$0xff]
    %v1568 = vld [vmem:[#allocation8 + $0x18] sm:$0xff]
    %v1569 = vld [vmem:[#allocation8 + $0x20] sm:$0xff]
    %v1570 = vld [vmem:[#allocation8 + $0x28] sm:$0xff]
    %v1571 = vld [vmem:[#allocation8 + $0x30] sm:$0xff]
    %v1572 = vld [vmem:[#allocation8 + $0x38] sm:$0xff]
    %v1573 = vld [vmem:[#allocation8 + $0x40] sm:$0xff]
    %v1574 = vld [vmem:[#allocation8 + $0x48] sm:$0xff]
    %v1575 = vld [vmem:[#allocation8 + $0x50] sm:$0xff]
    %v1576 = vld [vmem:[#allocation8 + $0x58] sm:$0xff]
    %v1577 = vld [vmem:[#allocation8 + $0x60] sm:$0xff]
    %v1578 = vld [vmem:[#allocation8 + $0x68] sm:$0xff]
    %v1579 = vld [vmem:[#allocation8 + $0x70] sm:$0xff]
    %v1580 = vld [vmem:[#allocation8 + $0x78] sm:$0xff]
    %1581 = vmatprep.subr.mxu0 0.0
    %1582 = vmatpush1.msra.mxu0 %v1565
    %1583 = vmatprep.subr.mxu0 0.0
    %1584 = vmatpush1.msra.mxu0 %v1566
    %1585 = vmatprep.subr.mxu0 0.0
    %1586 = vmatpush1.msra.mxu0 %v1567
    %1587 = vmatprep.subr.mxu0 0.0
    %1588 = vmatpush1.msra.mxu0 %v1568
    %1589 = vmatprep.subr.mxu0 0.0
    %1590 = vmatpush1.msra.mxu0 %v1569
    %1591 = vmatprep.subr.mxu0 0.0
    %1592 = vmatpush1.msra.mxu0 %v1570
    %1593 = vmatprep.subr.mxu0 0.0
    %1594 = vmatpush1.msra.mxu0 %v1571
    %1595 = vmatprep.subr.mxu0 0.0
    %1596 = vmatpush1.msra.mxu0 %v1572
    %1597 = vmatprep.subr.mxu0 0.0
    %1598 = vmatpush1.msra.mxu0 %v1573
    %1599 = vmatprep.subr.mxu0 0.0
    %1600 = vmatpush1.msra.mxu0 %v1574
    %1601 = vmatprep.subr.mxu0 0.0
    %1602 = vmatpush1.msra.mxu0 %v1575
    %1603 = vmatprep.subr.mxu0 0.0
    %1604 = vmatpush1.msra.mxu0 %v1576
    %1605 = vmatprep.subr.mxu0 0.0
    %1606 = vmatpush1.msra.mxu0 %v1577
    %1607 = vmatprep.subr.mxu0 0.0
    %1608 = vmatpush1.msra.mxu0 %v1578
    %1609 = vmatprep.subr.mxu0 0.0
    %1610 = vmatpush1.msra.mxu0 %v1579
    %1611 = vmatprep.subr.mxu0 0.0
    %1612 = vmatpush1.msra.mxu0 %v1580
    %1613 = vmatprep.subr.mxu0 0.0
    %1614 = vmatpush1.msra.mxu0 0.0
    %1615 = vmatprep.subr.mxu0 0.0
    %1616 = vmatpush1.msra.mxu0 0.0
    %1617 = vmatprep.subr.mxu0 0.0
    %1618 = vmatpush1.msra.mxu0 0.0
    %1619 = vmatprep.subr.mxu0 0.0
    %1620 = vmatpush1.msra.mxu0 0.0
    %1621 = vmatprep.subr.mxu0 0.0
    %1622 = vmatpush1.msra.mxu0 0.0
    %1623 = vmatprep.subr.mxu0 0.0
    %1624 = vmatpush1.msra.mxu0 0.0
    %1625 = vmatprep.subr.mxu0 0.0
    %1626 = vmatpush1.msra.mxu0 0.0
    %1627 = vmatprep.subr.mxu0 0.0
    %1628 = vmatpush1.msra.mxu0 0.0
    %1629 = vmatprep.subr.mxu0 0.0
    %1630 = vmatpush1.msra.mxu0 0.0
    %1631 = vmatprep.subr.mxu0 0.0
    %1632 = vmatpush1.msra.mxu0 0.0
    %1633 = vmatprep.subr.mxu0 0.0
    %1634 = vmatpush1.msra.mxu0 0.0
    %1635 = vmatprep.subr.mxu0 0.0
    %1636 = vmatpush1.msra.mxu0 0.0
    %1637 = vmatprep.subr.mxu0 0.0
    %1638 = vmatpush1.msra.mxu0 0.0
    %1639 = vmatprep.subr.mxu0 0.0
    %1640 = vmatpush1.msra.mxu0 0.0
    %1641 = vmatprep.subr.mxu0 0.0
    %1642 = vmatpush1.msra.mxu0 0.0
    %1643 = vmatprep.subr.mxu0 0.0
    %1644 = vmatpush1.msra.mxu0 0.0
    %1645 = vmatprep.mubr.f32.mxu0 0.0
    %1646 = vmatmul.mubr.f32.gmra.mrb[0].mxu0 %v1563
    %v1647 = vpop.f32.mrb[0].mxu0
    %v1648 = vadd.f32 0.0, %v1647
    %v1649 = vpop.f32.mrb[0].mxu0
    %1650 = vdwg.mxu0
    %v1651 = vadd.f32 %v1230, %v1648
    %v1652 = vmul.f32 %v1651, 0.5
    %v1653 = vtanh.pop %v1652
    %v1654 = vmul.f32 %v1653, 0.5
    %v1655 = vadd.f32 %v1654, 0.5
    %v1656 = vtanh.pop %v1651
    %1657 = vrot.lane.b32.xlu0 %v1655, 96
    %v1658 = vpop.permute.xlu0 %1657
    %1659 = vrot.lane.b32.xlu0 %v1656, 64
    %v1660 = vpop.permute.xlu0 %1659
    %1661 = vrot.lane.b32.xlu0 %v1655, 32
    %v1662 = vpop.permute.xlu0 %1661
    %v1663 = vmul.f32 %v1658, %v1561
    %v1664 = vmul.f32 %v1655, %v1660
    %v1665 = vadd.f32 %v1663, %v1664
    %v1666 = vtanh.pop %v1665
    %v1667 = vmul.f32 %v1662, %v1666
    %1668 = vst [vmem:[#allocation2 + $0x18] sm:$0xff] %v1667
    %v1669 = vld [vmem:[#allocation8] sm:$0xff]
    %v1670 = vld [vmem:[#allocation8 + $0x8] sm:$0xff]
    %v1671 = vld [vmem:[#allocation8 + $0x10] sm:$0xff]
    %v1672 = vld [vmem:[#allocation8 + $0x18] sm:$0xff]
    %v1673 = vld [vmem:[#allocation8 + $0x20] sm:$0xff]
    %v1674 = vld [vmem:[#allocation8 + $0x28] sm:$0xff]
    %v1675 = vld [vmem:[#allocation8 + $0x30] sm:$0xff]
    %v1676 = vld [vmem:[#allocation8 + $0x38] sm:$0xff]
    %v1677 = vld [vmem:[#allocation8 + $0x40] sm:$0xff]
    %v1678 = vld [vmem:[#allocation8 + $0x48] sm:$0xff]
    %v1679 = vld [vmem:[#allocation8 + $0x50] sm:$0xff]
    %v1680 = vld [vmem:[#allocation8 + $0x58] sm:$0xff]
    %v1681 = vld [vmem:[#allocation8 + $0x60] sm:$0xff]
    %v1682 = vld [vmem:[#allocation8 + $0x68] sm:$0xff]
    %v1683 = vld [vmem:[#allocation8 + $0x70] sm:$0xff]
    %v1684 = vld [vmem:[#allocation8 + $0x78] sm:$0xff]
    %1685 = vmatprep.subr.mxu0 0.0
    %1686 = vmatpush1.msra.mxu0 %v1669
    %1687 = vmatprep.subr.mxu0 0.0
    %1688 = vmatpush1.msra.mxu0 %v1670
    %1689 = vmatprep.subr.mxu0 0.0
    %1690 = vmatpush1.msra.mxu0 %v1671
    %1691 = vmatprep.subr.mxu0 0.0
    %1692 = vmatpush1.msra.mxu0 %v1672
    %1693 = vmatprep.subr.mxu0 0.0
    %1694 = vmatpush1.msra.mxu0 %v1673
    %1695 = vmatprep.subr.mxu0 0.0
    %1696 = vmatpush1.msra.mxu0 %v1674
    %1697 = vmatprep.subr.mxu0 0.0
    %1698 = vmatpush1.msra.mxu0 %v1675
    %1699 = vmatprep.subr.mxu0 0.0
    %1700 = vmatpush1.msra.mxu0 %v1676
    %1701 = vmatprep.subr.mxu0 0.0
    %1702 = vmatpush1.msra.mxu0 %v1677
    %1703 = vmatprep.subr.mxu0 0.0
    %1704 = vmatpush1.msra.mxu0 %v1678
    %1705 = vmatprep.subr.mxu0 0.0
    %1706 = vmatpush1.msra.mxu0 %v1679
    %1707 = vmatprep.subr.mxu0 0.0
    %1708 = vmatpush1.msra.mxu0 %v1680
    %1709 = vmatprep.subr.mxu0 0.0
    %1710 = vmatpush1.msra.mxu0 %v1681
    %1711 = vmatprep.subr.mxu0 0.0
    %1712 = vmatpush1.msra.mxu0 %v1682
    %1713 = vmatprep.subr.mxu0 0.0
    %1714 = vmatpush1.msra.mxu0 %v1683
    %1715 = vmatprep.subr.mxu0 0.0
    %1716 = vmatpush1.msra.mxu0 %v1684
    %1717 = vmatprep.subr.mxu0 0.0
    %1718 = vmatpush1.msra.mxu0 0.0
    %1719 = vmatprep.subr.mxu0 0.0
    %1720 = vmatpush1.msra.mxu0 0.0
    %1721 = vmatprep.subr.mxu0 0.0
    %1722 = vmatpush1.msra.mxu0 0.0
    %1723 = vmatprep.subr.mxu0 0.0
    %1724 = vmatpush1.msra.mxu0 0.0
    %1725 = vmatprep.subr.mxu0 0.0
    %1726 = vmatpush1.msra.mxu0 0.0
    %1727 = vmatprep.subr.mxu0 0.0
    %1728 = vmatpush1.msra.mxu0 0.0
    %1729 = vmatprep.subr.mxu0 0.0
    %1730 = vmatpush1.msra.mxu0 0.0
    %1731 = vmatprep.subr.mxu0 0.0
    %1732 = vmatpush1.msra.mxu0 0.0
    %1733 = vmatprep.subr.mxu0 0.0
    %1734 = vmatpush1.msra.mxu0 0.0
    %1735 = vmatprep.subr.mxu0 0.0
    %1736 = vmatpush1.msra.mxu0 0.0
    %1737 = vmatprep.subr.mxu0 0.0
    %1738 = vmatpush1.msra.mxu0 0.0
    %1739 = vmatprep.subr.mxu0 0.0
    %1740 = vmatpush1.msra.mxu0 0.0
    %1741 = vmatprep.subr.mxu0 0.0
    %1742 = vmatpush1.msra.mxu0 0.0
    %1743 = vmatprep.subr.mxu0 0.0
    %1744 = vmatpush1.msra.mxu0 0.0
    %1745 = vmatprep.subr.mxu0 0.0
    %1746 = vmatpush1.msra.mxu0 0.0
    %1747 = vmatprep.subr.mxu0 0.0
    %1748 = vmatpush1.msra.mxu0 0.0
    %1749 = vmatprep.mubr.f32.mxu0 0.0
    %1750 = vmatmul.mubr.f32.gmra.mrb[0].mxu0 %v1667
    %v1751 = vpop.f32.mrb[0].mxu0
    %v1752 = vadd.f32 0.0, %v1751
    %v1753 = vpop.f32.mrb[0].mxu0
    %1754 = vdwg.mxu0
    %v1755 = vadd.f32 %v1235, %v1752
    %v1756 = vmul.f32 %v1755, 0.5
    %v1757 = vtanh.pop %v1756
    %v1758 = vmul.f32 %v1757, 0.5
    %v1759 = vadd.f32 %v1758, 0.5
    %v1760 = vtanh.pop %v1755
    %1761 = vrot.lane.b32.xlu0 %v1759, 96
    %v1762 = vpop.permute.xlu0 %1761
    %1763 = vrot.lane.b32.xlu0 %v1760, 64
    %v1764 = vpop.permute.xlu0 %1763
    %1765 = vrot.lane.b32.xlu0 %v1759, 32
    %v1766 = vpop.permute.xlu0 %1765
    %v1767 = vmul.f32 %v1762, %v1665
    %v1768 = vmul.f32 %v1759, %v1764
    %v1769 = vadd.f32 %v1767, %v1768
    %v1770 = vtanh.pop %v1769
    %v1771 = vmul.f32 %v1766, %v1770
    %1772 = vst [vmem:[#allocation2 + $0x20] sm:$0xff] %v1771
    %v1773 = vld [vmem:[#allocation8] sm:$0xff]
    %v1774 = vld [vmem:[#allocation8 + $0x8] sm:$0xff]
    %v1775 = vld [vmem:[#allocation8 + $0x10] sm:$0xff]
    %v1776 = vld [vmem:[#allocation8 + $0x18] sm:$0xff]
    %v1777 = vld [vmem:[#allocation8 + $0x20] sm:$0xff]
    %v1778 = vld [vmem:[#allocation8 + $0x28] sm:$0xff]
    %v1779 = vld [vmem:[#allocation8 + $0x30] sm:$0xff]
    %v1780 = vld [vmem:[#allocation8 + $0x38] sm:$0xff]
    %v1781 = vld [vmem:[#allocation8 + $0x40] sm:$0xff]
    %v1782 = vld [vmem:[#allocation8 + $0x48] sm:$0xff]
    %v1783 = vld [vmem:[#allocation8 + $0x50] sm:$0xff]
    %v1784 = vld [vmem:[#allocation8 + $0x58] sm:$0xff]
    %v1785 = vld [vmem:[#allocation8 + $0x60] sm:$0xff]
    %v1786 = vld [vmem:[#allocation8 + $0x68] sm:$0xff]
    %v1787 = vld [vmem:[#allocation8 + $0x70] sm:$0xff]
    %v1788 = vld [vmem:[#allocation8 + $0x78] sm:$0xff]
    %1789 = vmatprep.subr.mxu0 0.0
    %1790 = vmatpush1.msra.mxu0 %v1773
    %1791 = vmatprep.subr.mxu0 0.0
    %1792 = vmatpush1.msra.mxu0 %v1774
    %1793 = vmatprep.subr.mxu0 0.0
    %1794 = vmatpush1.msra.mxu0 %v1775
    %1795 = vmatprep.subr.mxu0 0.0
    %1796 = vmatpush1.msra.mxu0 %v1776
    %1797 = vmatprep.subr.mxu0 0.0
    %1798 = vmatpush1.msra.mxu0 %v1777
    %1799 = vmatprep.subr.mxu0 0.0
    %1800 = vmatpush1.msra.mxu0 %v1778
    %1801 = vmatprep.subr.mxu0 0.0
    %1802 = vmatpush1.msra.mxu0 %v1779
    %1803 = vmatprep.subr.mxu0 0.0
    %1804 = vmatpush1.msra.mxu0 %v1780
    %1805 = vmatprep.subr.mxu0 0.0
    %1806 = vmatpush1.msra.mxu0 %v1781
    %1807 = vmatprep.subr.mxu0 0.0
    %1808 = vmatpush1.msra.mxu0 %v1782
    %1809 = vmatprep.subr.mxu0 0.0
    %1810 = vmatpush1.msra.mxu0 %v1783
    %1811 = vmatprep.subr.mxu0 0.0
    %1812 = vmatpush1.msra.mxu0 %v1784
    %1813 = vmatprep.subr.mxu0 0.0
    %1814 = vmatpush1.msra.mxu0 %v1785
    %1815 = vmatprep.subr.mxu0 0.0
    %1816 = vmatpush1.msra.mxu0 %v1786
    %1817 = vmatprep.subr.mxu0 0.0
    %1818 = vmatpush1.msra.mxu0 %v1787
    %1819 = vmatprep.subr.mxu0 0.0
    %1820 = vmatpush1.msra.mxu0 %v1788
    %1821 = vmatprep.subr.mxu0 0.0
    %1822 = vmatpush1.msra.mxu0 0.0
    %1823 = vmatprep.subr.mxu0 0.0
    %1824 = vmatpush1.msra.mxu0 0.0
    %1825 = vmatprep.subr.mxu0 0.0
    %1826 = vmatpush1.msra.mxu0 0.0
    %1827 = vmatprep.subr.mxu0 0.0
    %1828 = vmatpush1.msra.mxu0 0.0
    %1829 = vmatprep.subr.mxu0 0.0
    %1830 = vmatpush1.msra.mxu0 0.0
    %1831 = vmatprep.subr.mxu0 0.0
    %1832 = vmatpush1.msra.mxu0 0.0
    %1833 = vmatprep.subr.mxu0 0.0
    %1834 = vmatpush1.msra.mxu0 0.0
    %1835 = vmatprep.subr.mxu0 0.0
    %1836 = vmatpush1.msra.mxu0 0.0
    %1837 = vmatprep.subr.mxu0 0.0
    %1838 = vmatpush1.msra.mxu0 0.0
    %1839 = vmatprep.subr.mxu0 0.0
    %1840 = vmatpush1.msra.mxu0 0.0
    %1841 = vmatprep.subr.mxu0 0.0
    %1842 = vmatpush1.msra.mxu0 0.0
    %1843 = vmatprep.subr.mxu0 0.0
    %1844 = vmatpush1.msra.mxu0 0.0
    %1845 = vmatprep.subr.mxu0 0.0
    %1846 = vmatpush1.msra.mxu0 0.0
    %1847 = vmatprep.subr.mxu0 0.0
    %1848 = vmatpush1.msra.mxu0 0.0
    %1849 = vmatprep.subr.mxu0 0.0
    %1850 = vmatpush1.msra.mxu0 0.0
    %1851 = vmatprep.subr.mxu0 0.0
    %1852 = vmatpush1.msra.mxu0 0.0
    %1853 = vmatprep.mubr.f32.mxu0 0.0
    %1854 = vmatmul.mubr.f32.gmra.mrb[0].mxu0 %v1771
    %v1855 = vpop.f32.mrb[0].mxu0
    %v1856 = vadd.f32 0.0, %v1855
    %v1857 = vpop.f32.mrb[0].mxu0
    %1858 = vdwg.mxu0
    %v1859 = vadd.f32 %v1240, %v1856
    %v1860 = vmul.f32 %v1859, 0.5
    %v1861 = vtanh.pop %v1860
    %v1862 = vmul.f32 %v1861, 0.5
    %v1863 = vadd.f32 %v1862, 0.5
    %v1864 = vtanh.pop %v1859
    %1865 = vrot.lane.b32.xlu0 %v1863, 96
    %v1866 = vpop.permute.xlu0 %1865
    %1867 = vrot.lane.b32.xlu0 %v1864, 64
    %v1868 = vpop.permute.xlu0 %1867
    %1869 = vrot.lane.b32.xlu0 %v1863, 32
    %v1870 = vpop.permute.xlu0 %1869
    %v1871 = vmul.f32 %v1866, %v1769
    %v1872 = vmul.f32 %v1863, %v1868
    %v1873 = vadd.f32 %v1871, %v1872
    %v1874 = vtanh.pop %v1873
    %v1875 = vmul.f32 %v1870, %v1874
    %1876 = vst [vmem:[#allocation2 + $0x28] sm:$0xff] %v1875
    %v1877 = vld [vmem:[#allocation8] sm:$0xff]
    %v1878 = vld [vmem:[#allocation8 + $0x8] sm:$0xff]
    %v1879 = vld [vmem:[#allocation8 + $0x10] sm:$0xff]
    %v1880 = vld [vmem:[#allocation8 + $0x18] sm:$0xff]
    %v1881 = vld [vmem:[#allocation8 + $0x20] sm:$0xff]
    %v1882 = vld [vmem:[#allocation8 + $0x28] sm:$0xff]
    %v1883 = vld [vmem:[#allocation8 + $0x30] sm:$0xff]
    %v1884 = vld [vmem:[#allocation8 + $0x38] sm:$0xff]
    %v1885 = vld [vmem:[#allocation8 + $0x40] sm:$0xff]
    %v1886 = vld [vmem:[#allocation8 + $0x48] sm:$0xff]
    %v1887 = vld [vmem:[#allocation8 + $0x50] sm:$0xff]
    %v1888 = vld [vmem:[#allocation8 + $0x58] sm:$0xff]
    %v1889 = vld [vmem:[#allocation8 + $0x60] sm:$0xff]
    %v1890 = vld [vmem:[#allocation8 + $0x68] sm:$0xff]
    %v1891 = vld [vmem:[#allocation8 + $0x70] sm:$0xff]
    %v1892 = vld [vmem:[#allocation8 + $0x78] sm:$0xff]
    %1893 = vmatprep.subr.mxu0 0.0
    %1894 = vmatpush1.msra.mxu0 %v1877
    %1895 = vmatprep.subr.mxu0 0.0
    %1896 = vmatpush1.msra.mxu0 %v1878
    %1897 = vmatprep.subr.mxu0 0.0
    %1898 = vmatpush1.msra.mxu0 %v1879
    %1899 = vmatprep.subr.mxu0 0.0
    %1900 = vmatpush1.msra.mxu0 %v1880
    %1901 = vmatprep.subr.mxu0 0.0
    %1902 = vmatpush1.msra.mxu0 %v1881
    %1903 = vmatprep.subr.mxu0 0.0
    %1904 = vmatpush1.msra.mxu0 %v1882
    %1905 = vmatprep.subr.mxu0 0.0
    %1906 = vmatpush1.msra.mxu0 %v1883
    %1907 = vmatprep.subr.mxu0 0.0
    %1908 = vmatpush1.msra.mxu0 %v1884
    %1909 = vmatprep.subr.mxu0 0.0
    %1910 = vmatpush1.msra.mxu0 %v1885
    %1911 = vmatprep.subr.mxu0 0.0
    %1912 = vmatpush1.msra.mxu0 %v1886
    %1913 = vmatprep.subr.mxu0 0.0
    %1914 = vmatpush1.msra.mxu0 %v1887
    %1915 = vmatprep.subr.mxu0 0.0
    %1916 = vmatpush1.msra.mxu0 %v1888
    %1917 = vmatprep.subr.mxu0 0.0
    %1918 = vmatpush1.msra.mxu0 %v1889
    %1919 = vmatprep.subr.mxu0 0.0
    %1920 = vmatpush1.msra.mxu0 %v1890
    %1921 = vmatprep.subr.mxu0 0.0
    %1922 = vmatpush1.msra.mxu0 %v1891
    %1923 = vmatprep.subr.mxu0 0.0
    %1924 = vmatpush1.msra.mxu0 %v1892
    %1925 = vmatprep.subr.mxu0 0.0
    %1926 = vmatpush1.msra.mxu0 0.0
    %1927 = vmatprep.subr.mxu0 0.0
    %1928 = vmatpush1.msra.mxu0 0.0
    %1929 = vmatprep.subr.mxu0 0.0
    %1930 = vmatpush1.msra.mxu0 0.0
    %1931 = vmatprep.subr.mxu0 0.0
    %1932 = vmatpush1.msra.mxu0 0.0
    %1933 = vmatprep.subr.mxu0 0.0
    %1934 = vmatpush1.msra.mxu0 0.0
    %1935 = vmatprep.subr.mxu0 0.0
    %1936 = vmatpush1.msra.mxu0 0.0
    %1937 = vmatprep.subr.mxu0 0.0
    %1938 = vmatpush1.msra.mxu0 0.0
    %1939 = vmatprep.subr.mxu0 0.0
    %1940 = vmatpush1.msra.mxu0 0.0
    %1941 = vmatprep.subr.mxu0 0.0
    %1942 = vmatpush1.msra.mxu0 0.0
    %1943 = vmatprep.subr.mxu0 0.0
    %1944 = vmatpush1.msra.mxu0 0.0
    %1945 = vmatprep.subr.mxu0 0.0
    %1946 = vmatpush1.msra.mxu0 0.0
    %1947 = vmatprep.subr.mxu0 0.0
    %1948 = vmatpush1.msra.mxu0 0.0
    %1949 = vmatprep.subr.mxu0 0.0
    %1950 = vmatpush1.msra.mxu0 0.0
    %1951 = vmatprep.subr.mxu0 0.0
    %1952 = vmatpush1.msra.mxu0 0.0
    %1953 = vmatprep.subr.mxu0 0.0
    %1954 = vmatpush1.msra.mxu0 0.0
    %1955 = vmatprep.subr.mxu0 0.0
    %1956 = vmatpush1.msra.mxu0 0.0
    %1957 = vmatprep.mubr.f32.mxu0 0.0
    %1958 = vmatmul.mubr.f32.gmra.mrb[0].mxu0 %v1875
    %v1959 = vpop.f32.mrb[0].mxu0
    %v1960 = vadd.f32 0.0, %v1959
    %v1961 = vpop.f32.mrb[0].mxu0
    %1962 = vdwg.mxu0
    %v1963 = vadd.f32 %v1245, %v1960
    %v1964 = vmul.f32 %v1963, 0.5
    %v1965 = vtanh.pop %v1964
    %v1966 = vmul.f32 %v1965, 0.5
    %v1967 = vadd.f32 %v1966, 0.5
    %v1968 = vtanh.pop %v1963
    %1969 = vrot.lane.b32.xlu0 %v1967, 96
    %v1970 = vpop.permute.xlu0 %1969
    %1971 = vrot.lane.b32.xlu0 %v1968, 64
    %v1972 = vpop.permute.xlu0 %1971
    %1973 = vrot.lane.b32.xlu0 %v1967, 32
    %v1974 = vpop.permute.xlu0 %1973
    %v1975 = vmul.f32 %v1970, %v1873
    %v1976 = vmul.f32 %v1967, %v1972
    %v1977 = vadd.f32 %v1975, %v1976
    %v1978 = vtanh.pop %v1977
    %v1979 = vmul.f32 %v1974, %v1978
    %1980 = vst [vmem:[#allocation2 + $0x30] sm:$0xff] %v1979
    %v1981 = vld [vmem:[#allocation8] sm:$0xff]
    %v1982 = vld [vmem:[#allocation8 + $0x8] sm:$0xff]
    %v1983 = vld [vmem:[#allocation8 + $0x10] sm:$0xff]
    %v1984 = vld [vmem:[#allocation8 + $0x18] sm:$0xff]
    %v1985 = vld [vmem:[#allocation8 + $0x20] sm:$0xff]
    %v1986 = vld [vmem:[#allocation8 + $0x28] sm:$0xff]
    %v1987 = vld [vmem:[#allocation8 + $0x30] sm:$0xff]
    %v1988 = vld [vmem:[#allocation8 + $0x38] sm:$0xff]
    %v1989 = vld [vmem:[#allocation8 + $0x40] sm:$0xff]
    %v1990 = vld [vmem:[#allocation8 + $0x48] sm:$0xff]
    %v1991 = vld [vmem:[#allocation8 + $0x50] sm:$0xff]
    %v1992 = vld [vmem:[#allocation8 + $0x58] sm:$0xff]
    %v1993 = vld [vmem:[#allocation8 + $0x60] sm:$0xff]
    %v1994 = vld [vmem:[#allocation8 + $0x68] sm:$0xff]
    %v1995 = vld [vmem:[#allocation8 + $0x70] sm:$0xff]
    %v1996 = vld [vmem:[#allocation8 + $0x78] sm:$0xff]
    %1997 = vmatprep.subr.mxu0 0.0
    %1998 = vmatpush1.msra.mxu0 %v1981
    %1999 = vmatprep.subr.mxu0 0.0
    %2000 = vmatpush1.msra.mxu0 %v1982
    %2001 = vmatprep.subr.mxu0 0.0
    %2002 = vmatpush1.msra.mxu0 %v1983
    %2003 = vmatprep.subr.mxu0 0.0
    %2004 = vmatpush1.msra.mxu0 %v1984
    %2005 = vmatprep.subr.mxu0 0.0
    %2006 = vmatpush1.msra.mxu0 %v1985
    %2007 = vmatprep.subr.mxu0 0.0
    %2008 = vmatpush1.msra.mxu0 %v1986
    %2009 = vmatprep.subr.mxu0 0.0
    %2010 = vmatpush1.msra.mxu0 %v1987
    %2011 = vmatprep.subr.mxu0 0.0
    %2012 = vmatpush1.msra.mxu0 %v1988
    %2013 = vmatprep.subr.mxu0 0.0
    %2014 = vmatpush1.msra.mxu0 %v1989
    %2015 = vmatprep.subr.mxu0 0.0
    %2016 = vmatpush1.msra.mxu0 %v1990
    %2017 = vmatprep.subr.mxu0 0.0
    %2018 = vmatpush1.msra.mxu0 %v1991
    %2019 = vmatprep.subr.mxu0 0.0
    %2020 = vmatpush1.msra.mxu0 %v1992
    %2021 = vmatprep.subr.mxu0 0.0
    %2022 = vmatpush1.msra.mxu0 %v1993
    %2023 = vmatprep.subr.mxu0 0.0
    %2024 = vmatpush1.msra.mxu0 %v1994
    %2025 = vmatprep.subr.mxu0 0.0
    %2026 = vmatpush1.msra.mxu0 %v1995
    %2027 = vmatprep.subr.mxu0 0.0
    %2028 = vmatpush1.msra.mxu0 %v1996
    %2029 = vmatprep.subr.mxu0 0.0
    %2030 = vmatpush1.msra.mxu0 0.0
    %2031 = vmatprep.subr.mxu0 0.0
    %2032 = vmatpush1.msra.mxu0 0.0
    %2033 = vmatprep.subr.mxu0 0.0
    %2034 = vmatpush1.msra.mxu0 0.0
    %2035 = vmatprep.subr.mxu0 0.0
    %2036 = vmatpush1.msra.mxu0 0.0
    %2037 = vmatprep.subr.mxu0 0.0
    %2038 = vmatpush1.msra.mxu0 0.0
    %2039 = vmatprep.subr.mxu0 0.0
    %2040 = vmatpush1.msra.mxu0 0.0
    %2041 = vmatprep.subr.mxu0 0.0
    %2042 = vmatpush1.msra.mxu0 0.0
    %2043 = vmatprep.subr.mxu0 0.0
    %2044 = vmatpush1.msra.mxu0 0.0
    %2045 = vmatprep.subr.mxu0 0.0
    %2046 = vmatpush1.msra.mxu0 0.0
    %2047 = vmatprep.subr.mxu0 0.0
    %2048 = vmatpush1.msra.mxu0 0.0
    %2049 = vmatprep.subr.mxu0 0.0
    %2050 = vmatpush1.msra.mxu0 0.0
    %2051 = vmatprep.subr.mxu0 0.0
    %2052 = vmatpush1.msra.mxu0 0.0
    %2053 = vmatprep.subr.mxu0 0.0
    %2054 = vmatpush1.msra.mxu0 0.0
    %2055 = vmatprep.subr.mxu0 0.0
    %2056 = vmatpush1.msra.mxu0 0.0
    %2057 = vmatprep.subr.mxu0 0.0
    %2058 = vmatpush1.msra.mxu0 0.0
    %2059 = vmatprep.subr.mxu0 0.0
    %2060 = vmatpush1.msra.mxu0 0.0
    %2061 = vmatprep.mubr.f32.mxu0 0.0
    %2062 = vmatmul.mubr.f32.gmra.mrb[0].mxu0 %v1979
    %v2063 = vpop.f32.mrb[0].mxu0
    %v2064 = vadd.f32 0.0, %v2063
    %v2065 = vpop.f32.mrb[0].mxu0
    %2066 = vdwg.mxu0
    %v2067 = vadd.f32 %v1250, %v2064
    %v2068 = vmul.f32 %v2067, 0.5
    %v2069 = vtanh.pop %v2068
    %v2070 = vmul.f32 %v2069, 0.5
    %v2071 = vadd.f32 %v2070, 0.5
    %v2072 = vtanh.pop %v2067
    %2073 = vrot.lane.b32.xlu0 %v2071, 96
    %v2074 = vpop.permute.xlu0 %2073
    %2075 = vrot.lane.b32.xlu0 %v2072, 64
    %v2076 = vpop.permute.xlu0 %2075
    %2077 = vrot.lane.b32.xlu0 %v2071, 32
    %v2078 = vpop.permute.xlu0 %2077
    %v2079 = vmul.f32 %v2074, %v1977
    %v2080 = vmul.f32 %v2071, %v2076
    %v2081 = vadd.f32 %v2079, %v2080
    %v2082 = vtanh.pop %v2081
    %v2083 = vmul.f32 %v2078, %v2082
    %2084 = vst [vmem:[#allocation2 + $0x38] sm:$0xff] %v2083
    %v2085 = vld [vmem:[#allocation2] sm:$0xff]
    %v2086 = vld [vmem:[#allocation2 + $0x8] sm:$0xff]
    %v2087 = vld [vmem:[#allocation2 + $0x10] sm:$0xff]
    %v2088 = vld [vmem:[#allocation2 + $0x18] sm:$0xff]
    %v2089 = vld [vmem:[#allocation2 + $0x20] sm:$0xff]
    %v2090 = vld [vmem:[#allocation2 + $0x28] sm:$0xff]
    %v2091 = vld [vmem:[#allocation2 + $0x30] sm:$0xff]
    %v2092 = vld [vmem:[#allocation2 + $0x38] sm:$0xff]
    %v2093 = vmax.f32 %v2085, 0.0
    %v2094 = vmax.f32 %v2086, 0.0
    %v2095 = vmax.f32 %v2087, 0.0
    %v2096 = vmax.f32 %v2088, 0.0
    %v2097 = vmax.f32 %v2089, 0.0
    %v2098 = vmax.f32 %v2090, 0.0
    %v2099 = vmax.f32 %v2091, 0.0
    %v2100 = vmax.f32 %v2092, 0.0
    %v2101 = vld [vmem:[%s7] sm:$0xff]
    %v2102 = vld [vmem:[%s7 + $0x8] sm:$0xff]
    %v2103 = vld [vmem:[%s7 + $0x10] sm:$0xff]
    %v2104 = vld [vmem:[%s7 + $0x18] sm:$0xff]
    %v2105 = vld [vmem:[%s7 + $0x20] sm:$0xff]
    %v2106 = vld [vmem:[%s7 + $0x28] sm:$0xff]
    %v2107 = vld [vmem:[%s7 + $0x30] sm:$0xff]
    %v2108 = vld [vmem:[%s7 + $0x38] sm:$0xff]
    %v2109 = vld [vmem:[%s7 + $0x40] sm:$0xff]
    %v2110 = vld [vmem:[%s7 + $0x48] sm:$0xff]
    %v2111 = vld [vmem:[%s7 + $0x50] sm:$0xff]
    %v2112 = vld [vmem:[%s7 + $0x58] sm:$0xff]
    %v2113 = vld [vmem:[%s7 + $0x60] sm:$0xff]
    %v2114 = vld [vmem:[%s7 + $0x68] sm:$0xff]
    %v2115 = vld [vmem:[%s7 + $0x70] sm:$0xff]
    %v2116 = vld [vmem:[%s7 + $0x78] sm:$0xff]
    %v2117 = vld [vmem:[#allocation10] sm:$0x1]
    %v2119 = vlaneseq
    %v2120 = vshrl.u32 %v2119, 7
    %v2121 = vsub.s32 0, %v2120
    %v2122 = vrot.slane %v2117, %v2121
    %2124 = vmatprep.subr.mxu0 0.0
    %2125 = vmatpush1.msra.mxu0 %v2101
    %2126 = vmatprep.subr.mxu0 0.0
    %2127 = vmatpush1.msra.mxu0 %v2102
    %2128 = vmatprep.subr.mxu0 0.0
    %2129 = vmatpush1.msra.mxu0 %v2103
    %2130 = vmatprep.subr.mxu0 0.0
    %2131 = vmatpush1.msra.mxu0 %v2104
    %2132 = vmatprep.subr.mxu0 0.0
    %2133 = vmatpush1.msra.mxu0 %v2105
    %2134 = vmatprep.subr.mxu0 0.0
    %2135 = vmatpush1.msra.mxu0 %v2106
    %2136 = vmatprep.subr.mxu0 0.0
    %2137 = vmatpush1.msra.mxu0 %v2107
    %2138 = vmatprep.subr.mxu0 0.0
    %2139 = vmatpush1.msra.mxu0 %v2108
    %2140 = vmatprep.subr.mxu0 0.0
    %2141 = vmatpush1.msra.mxu0 %v2109
    %2142 = vmatprep.subr.mxu0 0.0
    %2143 = vmatpush1.msra.mxu0 %v2110
    %2144 = vmatprep.subr.mxu0 0.0
    %2145 = vmatpush1.msra.mxu0 %v2111
    %2146 = vmatprep.subr.mxu0 0.0
    %2147 = vmatpush1.msra.mxu0 %v2112
    %2148 = vmatprep.subr.mxu0 0.0
    %2149 = vmatpush1.msra.mxu0 %v2113
    %2150 = vmatprep.subr.mxu0 0.0
    %2151 = vmatpush1.msra.mxu0 %v2114
    %2152 = vmatprep.subr.mxu0 0.0
    %2153 = vmatpush1.msra.mxu0 %v2115
    %2154 = vmatprep.subr.mxu0 0.0
    %2155 = vmatpush1.msra.mxu0 %v2116
    %2156 = vmatprep.subr.mxu0 0.0
    %2157 = vmatpush1.msra.mxu0 0.0
    %2158 = vmatprep.subr.mxu0 0.0
    %2159 = vmatpush1.msra.mxu0 0.0
    %2160 = vmatprep.subr.mxu0 0.0
    %2161 = vmatpush1.msra.mxu0 0.0
    %2162 = vmatprep.subr.mxu0 0.0
    %2163 = vmatpush1.msra.mxu0 0.0
    %2164 = vmatprep.subr.mxu0 0.0
    %2165 = vmatpush1.msra.mxu0 0.0
    %2166 = vmatprep.subr.mxu0 0.0
    %2167 = vmatpush1.msra.mxu0 0.0
    %2168 = vmatprep.subr.mxu0 0.0
    %2169 = vmatpush1.msra.mxu0 0.0
    %2170 = vmatprep.subr.mxu0 0.0
    %2171 = vmatpush1.msra.mxu0 0.0
    %2172 = vmatprep.subr.mxu0 0.0
    %2173 = vmatpush1.msra.mxu0 0.0
    %2174 = vmatprep.subr.mxu0 0.0
    %2175 = vmatpush1.msra.mxu0 0.0
    %2176 = vmatprep.subr.mxu0 0.0
    %2177 = vmatpush1.msra.mxu0 0.0
    %2178 = vmatprep.subr.mxu0 0.0
    %2179 = vmatpush1.msra.mxu0 0.0
    %2180 = vmatprep.subr.mxu0 0.0
    %2181 = vmatpush1.msra.mxu0 0.0
    %2182 = vmatprep.subr.mxu0 0.0
    %2183 = vmatpush1.msra.mxu0 0.0
    %2184 = vmatprep.subr.mxu0 0.0
    %2185 = vmatpush1.msra.mxu0 0.0
    %2186 = vmatprep.subr.mxu0 0.0
    %2187 = vmatpush1.msra.mxu0 0.0
    %2188 = vmatprep.mubr.f32.mxu0 0.0
    %2189 = vmatmul.mubr.f32.gmra.mrb[0].mxu0 %v2093
    %v2190 = vpop.f32.mrb[0].mxu0
    %v2191 = vadd.f32 %v2122, %v2190
    %v2192 = vpop.f32.mrb[0].mxu0
    %2193 = vmatprep.mubr.f32.mxu0 0.0
    %2194 = vmatmul.mubr.f32.gmra.mrb[0].mxu0 %v2094
    %v2195 = vpop.f32.mrb[0].mxu0
    %v2196 = vadd.f32 %v2122, %v2195
    %v2197 = vpop.f32.mrb[0].mxu0
    %2198 = vmatprep.mubr.f32.mxu0 0.0
    %2199 = vmatmul.mubr.f32.gmra.mrb[0].mxu0 %v2095
    %v2200 = vpop.f32.mrb[0].mxu0
    %v2201 = vadd.f32 %v2122, %v2200
    %v2202 = vpop.f32.mrb[0].mxu0
    %2203 = vmatprep.mubr.f32.mxu0 0.0
    %2204 = vmatmul.mubr.f32.gmra.mrb[0].mxu0 %v2096
    %v2205 = vpop.f32.mrb[0].mxu0
    %v2206 = vadd.f32 %v2122, %v2205
    %v2207 = vpop.f32.mrb[0].mxu0
    %2208 = vmatprep.mubr.f32.mxu0 0.0
    %2209 = vmatmul.mubr.f32.gmra.mrb[0].mxu0 %v2097
    %v2210 = vpop.f32.mrb[0].mxu0
    %v2211 = vadd.f32 %v2122, %v2210
    %v2212 = vpop.f32.mrb[0].mxu0
    %2213 = vmatprep.mubr.f32.mxu0 0.0
    %2214 = vmatmul.mubr.f32.gmra.mrb[0].mxu0 %v2098
    %v2215 = vpop.f32.mrb[0].mxu0
    %v2216 = vadd.f32 %v2122, %v2215
    %v2217 = vpop.f32.mrb[0].mxu0
    %2218 = vmatprep.mubr.f32.mxu0 0.0
    %2219 = vmatmul.mubr.f32.gmra.mrb[0].mxu0 %v2099
    %v2220 = vpop.f32.mrb[0].mxu0
    %v2221 = vadd.f32 %v2122, %v2220
    %v2222 = vpop.f32.mrb[0].mxu0
    %2223 = vmatprep.mubr.f32.mxu0 0.0
    %2224 = vmatmul.mubr.f32.gmra.mrb[0].mxu0 %v2100
    %v2225 = vpop.f32.mrb[0].mxu0
    %v2226 = vadd.f32 %v2122, %v2225
    %v2227 = vpop.f32.mrb[0].mxu0
    %2228 = vdwg.mxu0
    %v2229 = vmax.f32 %v2191, 0.0
    %v2230 = vmax.f32 %v2196, 0.0
    %v2231 = vmax.f32 %v2201, 0.0
    %v2232 = vmax.f32 %v2206, 0.0
    %v2233 = vmax.f32 %v2211, 0.0
    %v2234 = vmax.f32 %v2216, 0.0
    %v2235 = vmax.f32 %v2221, 0.0
    %v2236 = vmax.f32 %v2226, 0.0
    %v2237 = vld [vmem:[#allocation11] sm:$0xff]
    %v2238 = vld [vmem:[#allocation11 + $0x8] sm:$0xff]
    %v2239 = vld [vmem:[#allocation11 + $0x10] sm:$0xff]
    %v2240 = vld [vmem:[#allocation11 + $0x18] sm:$0xff]
    %v2241 = vld [vmem:[#allocation11 + $0x20] sm:$0xff]
    %v2242 = vld [vmem:[#allocation11 + $0x28] sm:$0xff]
    %v2243 = vld [vmem:[#allocation11 + $0x30] sm:$0xff]
    %v2244 = vld [vmem:[#allocation11 + $0x38] sm:$0xff]
    %v2245 = vld [vmem:[#allocation11 + $0x40] sm:$0xff]
    %v2246 = vld [vmem:[#allocation11 + $0x48] sm:$0xff]
    %v2247 = vld [vmem:[#allocation11 + $0x50] sm:$0xff]
    %v2248 = vld [vmem:[#allocation11 + $0x58] sm:$0xff]
    %v2249 = vld [vmem:[#allocation11 + $0x60] sm:$0xff]
    %v2250 = vld [vmem:[#allocation11 + $0x68] sm:$0xff]
    %v2251 = vld [vmem:[#allocation11 + $0x70] sm:$0xff]
    %v2252 = vld [vmem:[#allocation11 + $0x78] sm:$0xff]
    %v2253 = vld [vmem:[#allocation13] sm:$0x1]
    %v2255 = vlaneseq
    %v2256 = vshrl.u32 %v2255, 7
    %v2257 = vsub.s32 0, %v2256
    %v2258 = vrot.slane %v2253, %v2257
    %2260 = vmatprep.subr.mxu0 0.0
    %2261 = vmatpush1.msra.mxu0 %v2237
    %2262 = vmatprep.subr.mxu0 0.0
    %2263 = vmatpush1.msra.mxu0 %v2238
    %2264 = vmatprep.subr.mxu0 0.0
    %2265 = vmatpush1.msra.mxu0 %v2239
    %2266 = vmatprep.subr.mxu0 0.0
    %2267 = vmatpush1.msra.mxu0 %v2240
    %2268 = vmatprep.subr.mxu0 0.0
    %2269 = vmatpush1.msra.mxu0 %v2241
    %2270 = vmatprep.subr.mxu0 0.0
    %2271 = vmatpush1.msra.mxu0 %v2242
    %2272 = vmatprep.subr.mxu0 0.0
    %2273 = vmatpush1.msra.mxu0 %v2243
    %2274 = vmatprep.subr.mxu0 0.0
    %2275 = vmatpush1.msra.mxu0 %v2244
    %2276 = vmatprep.subr.mxu0 0.0
    %2277 = vmatpush1.msra.mxu0 %v2245
    %2278 = vmatprep.subr.mxu0 0.0
    %2279 = vmatpush1.msra.mxu0 %v2246
    %2280 = vmatprep.subr.mxu0 0.0
    %2281 = vmatpush1.msra.mxu0 %v2247
    %2282 = vmatprep.subr.mxu0 0.0
    %2283 = vmatpush1.msra.mxu0 %v2248
    %2284 = vmatprep.subr.mxu0 0.0
    %2285 = vmatpush1.msra.mxu0 %v2249
    %2286 = vmatprep.subr.mxu0 0.0
    %2287 = vmatpush1.msra.mxu0 %v2250
    %2288 = vmatprep.subr.mxu0 0.0
    %2289 = vmatpush1.msra.mxu0 %v2251
    %2290 = vmatprep.subr.mxu0 0.0
    %2291 = vmatpush1.msra.mxu0 %v2252
    %2292 = vmatprep.subr.mxu0 0.0
    %2293 = vmatpush1.msra.mxu0 0.0
    %2294 = vmatprep.subr.mxu0 0.0
    %2295 = vmatpush1.msra.mxu0 0.0
    %2296 = vmatprep.subr.mxu0 0.0
    %2297 = vmatpush1.msra.mxu0 0.0
    %2298 = vmatprep.subr.mxu0 0.0
    %2299 = vmatpush1.msra.mxu0 0.0
    %2300 = vmatprep.subr.mxu0 0.0
    %2301 = vmatpush1.msra.mxu0 0.0
    %2302 = vmatprep.subr.mxu0 0.0
    %2303 = vmatpush1.msra.mxu0 0.0
    %2304 = vmatprep.subr.mxu0 0.0
    %2305 = vmatpush1.msra.mxu0 0.0
    %2306 = vmatprep.subr.mxu0 0.0
    %2307 = vmatpush1.msra.mxu0 0.0
    %2308 = vmatprep.subr.mxu0 0.0
    %2309 = vmatpush1.msra.mxu0 0.0
    %2310 = vmatprep.subr.mxu0 0.0
    %2311 = vmatpush1.msra.mxu0 0.0
    %2312 = vmatprep.subr.mxu0 0.0
    %2313 = vmatpush1.msra.mxu0 0.0
    %2314 = vmatprep.subr.mxu0 0.0
    %2315 = vmatpush1.msra.mxu0 0.0
    %2316 = vmatprep.subr.mxu0 0.0
    %2317 = vmatpush1.msra.mxu0 0.0
    %2318 = vmatprep.subr.mxu0 0.0
    %2319 = vmatpush1.msra.mxu0 0.0
    %2320 = vmatprep.subr.mxu0 0.0
    %2321 = vmatpush1.msra.mxu0 0.0
    %2322 = vmatprep.subr.mxu0 0.0
    %2323 = vmatpush1.msra.mxu0 0.0
    %2324 = vmatprep.mubr.f32.mxu0 0.0
    %2325 = vmatmul.mubr.f32.gmra.mrb[0].mxu0 %v2229
    %v2326 = vpop.f32.mrb[0].mxu0
    %v2327 = vadd.f32 %v2258, %v2326
    %v2328 = vpop.f32.mrb[0].mxu0
    %2329 = vmatprep.mubr.f32.mxu0 0.0
    %2330 = vmatmul.mubr.f32.gmra.mrb[0].mxu0 %v2230
    %v2331 = vpop.f32.mrb[0].mxu0
    %v2332 = vadd.f32 %v2258, %v2331
    %v2333 = vpop.f32.mrb[0].mxu0
    %2334 = vmatprep.mubr.f32.mxu0 0.0
    %2335 = vmatmul.mubr.f32.gmra.mrb[0].mxu0 %v2231
    %v2336 = vpop.f32.mrb[0].mxu0
    %v2337 = vadd.f32 %v2258, %v2336
    %v2338 = vpop.f32.mrb[0].mxu0
    %2339 = vmatprep.mubr.f32.mxu0 0.0
    %2340 = vmatmul.mubr.f32.gmra.mrb[0].mxu0 %v2232
    %v2341 = vpop.f32.mrb[0].mxu0
    %v2342 = vadd.f32 %v2258, %v2341
    %v2343 = vpop.f32.mrb[0].mxu0
    %2344 = vmatprep.mubr.f32.mxu0 0.0
    %2345 = vmatmul.mubr.f32.gmra.mrb[0].mxu0 %v2233
    %v2346 = vpop.f32.mrb[0].mxu0
    %v2347 = vadd.f32 %v2258, %v2346
    %v2348 = vpop.f32.mrb[0].mxu0
    %2349 = vmatprep.mubr.f32.mxu0 0.0
    %2350 = vmatmul.mubr.f32.gmra.mrb[0].mxu0 %v2234
    %v2351 = vpop.f32.mrb[0].mxu0
    %v2352 = vadd.f32 %v2258, %v2351
    %v2353 = vpop.f32.mrb[0].mxu0
    %2354 = vmatprep.mubr.f32.mxu0 0.0
    %2355 = vmatmul.mubr.f32.gmra.mrb[0].mxu0 %v2235
    %v2356 = vpop.f32.mrb[0].mxu0
    %v2357 = vadd.f32 %v2258, %v2356
    %v2358 = vpop.f32.mrb[0].mxu0
    %2359 = vmatprep.mubr.f32.mxu0 0.0
    %2360 = vmatmul.mubr.f32.gmra.mrb[0].mxu0 %v2236
    %v2361 = vpop.f32.mrb[0].mxu0
    %v2362 = vadd.f32 %v2258, %v2361
    %v2363 = vpop.f32.mrb[0].mxu0
    %2364 = vdwg.mxu0
    %v2365 = vmax.f32 %v2327, 0.0
    %v2366 = vmax.f32 %v2332, 0.0
    %v2367 = vmax.f32 %v2337, 0.0
    %v2368 = vmax.f32 %v2342, 0.0
    %v2369 = vmax.f32 %v2347, 0.0
    %v2370 = vmax.f32 %v2352, 0.0
    %v2371 = vmax.f32 %v2357, 0.0
    %v2372 = vmax.f32 %v2362, 0.0
    %v2373 = vld [vmem:[#allocation14] sm:$0xff]
    %v2374 = vld [vmem:[#allocation14 + $0x8] sm:$0xff]
    %v2375 = vld [vmem:[#allocation14 + $0x10] sm:$0xff]
    %v2376 = vld [vmem:[#allocation14 + $0x18] sm:$0xff]
    %v2377 = vld [vmem:[#allocation14 + $0x20] sm:$0xff]
    %v2378 = vld [vmem:[#allocation14 + $0x28] sm:$0xff]
    %v2379 = vld [vmem:[#allocation14 + $0x30] sm:$0xff]
    %v2380 = vld [vmem:[#allocation14 + $0x38] sm:$0xff]
    %v2381 = vld [vmem:[#allocation14 + $0x40] sm:$0xff]
    %v2382 = vld [vmem:[#allocation14 + $0x48] sm:$0xff]
    %v2383 = vld [vmem:[#allocation14 + $0x50] sm:$0xff]
    %v2384 = vld [vmem:[#allocation14 + $0x58] sm:$0xff]
    %v2385 = vld [vmem:[#allocation14 + $0x60] sm:$0xff]
    %v2386 = vld [vmem:[#allocation14 + $0x68] sm:$0xff]
    %v2387 = vld [vmem:[#allocation14 + $0x70] sm:$0xff]
    %v2388 = vld [vmem:[#allocation14 + $0x78] sm:$0xff]
    %v2389 = vld [vmem:[%s12] sm:$0x1]
    %v2391 = vlaneseq
    %v2392 = vshrl.u32 %v2391, 7
    %v2393 = vsub.s32 0, %v2392
    %v2394 = vrot.slane %v2389, %v2393
    %2396 = vmatprep.subr.mxu0 0.0
    %2397 = vmatpush1.msra.mxu0 %v2373
    %2398 = vmatprep.subr.mxu0 0.0
    %2399 = vmatpush1.msra.mxu0 %v2374
    %2400 = vmatprep.subr.mxu0 0.0
    %2401 = vmatpush1.msra.mxu0 %v2375
    %2402 = vmatprep.subr.mxu0 0.0
    %2403 = vmatpush1.msra.mxu0 %v2376
    %2404 = vmatprep.subr.mxu0 0.0
    %2405 = vmatpush1.msra.mxu0 %v2377
    %2406 = vmatprep.subr.mxu0 0.0
    %2407 = vmatpush1.msra.mxu0 %v2378
    %2408 = vmatprep.subr.mxu0 0.0
    %2409 = vmatpush1.msra.mxu0 %v2379
    %2410 = vmatprep.subr.mxu0 0.0
    %2411 = vmatpush1.msra.mxu0 %v2380
    %2412 = vmatprep.subr.mxu0 0.0
    %2413 = vmatpush1.msra.mxu0 %v2381
    %2414 = vmatprep.subr.mxu0 0.0
    %2415 = vmatpush1.msra.mxu0 %v2382
    %2416 = vmatprep.subr.mxu0 0.0
    %2417 = vmatpush1.msra.mxu0 %v2383
    %2418 = vmatprep.subr.mxu0 0.0
    %2419 = vmatpush1.msra.mxu0 %v2384
    %2420 = vmatprep.subr.mxu0 0.0
    %2421 = vmatpush1.msra.mxu0 %v2385
    %2422 = vmatprep.subr.mxu0 0.0
    %2423 = vmatpush1.msra.mxu0 %v2386
    %2424 = vmatprep.subr.mxu0 0.0
    %2425 = vmatpush1.msra.mxu0 %v2387
    %2426 = vmatprep.subr.mxu0 0.0
    %2427 = vmatpush1.msra.mxu0 %v2388
    %2428 = vmatprep.subr.mxu0 0.0
    %2429 = vmatpush1.msra.mxu0 0.0
    %2430 = vmatprep.subr.mxu0 0.0
    %2431 = vmatpush1.msra.mxu0 0.0
    %2432 = vmatprep.subr.mxu0 0.0
    %2433 = vmatpush1.msra.mxu0 0.0
    %2434 = vmatprep.subr.mxu0 0.0
    %2435 = vmatpush1.msra.mxu0 0.0
    %2436 = vmatprep.subr.mxu0 0.0
    %2437 = vmatpush1.msra.mxu0 0.0
    %2438 = vmatprep.subr.mxu0 0.0
    %2439 = vmatpush1.msra.mxu0 0.0
    %2440 = vmatprep.subr.mxu0 0.0
    %2441 = vmatpush1.msra.mxu0 0.0
    %2442 = vmatprep.subr.mxu0 0.0
    %2443 = vmatpush1.msra.mxu0 0.0
    %2444 = vmatprep.subr.mxu0 0.0
    %2445 = vmatpush1.msra.mxu0 0.0
    %2446 = vmatprep.subr.mxu0 0.0
    %2447 = vmatpush1.msra.mxu0 0.0
    %2448 = vmatprep.subr.mxu0 0.0
    %2449 = vmatpush1.msra.mxu0 0.0
    %2450 = vmatprep.subr.mxu0 0.0
    %2451 = vmatpush1.msra.mxu0 0.0
    %2452 = vmatprep.subr.mxu0 0.0
    %2453 = vmatpush1.msra.mxu0 0.0
    %2454 = vmatprep.subr.mxu0 0.0
    %2455 = vmatpush1.msra.mxu0 0.0
    %2456 = vmatprep.subr.mxu0 0.0
    %2457 = vmatpush1.msra.mxu0 0.0
    %2458 = vmatprep.subr.mxu0 0.0
    %2459 = vmatpush1.msra.mxu0 0.0
    %2460 = vmatprep.mubr.f32.mxu0 0.0
    %2461 = vmatmul.mubr.f32.gmra.mrb[0].mxu0 %v2365
    %v2462 = vpop.f32.mrb[0].mxu0
    %v2463 = vadd.f32 %v2394, %v2462
    %v2464 = vpop.f32.mrb[0].mxu0
    %2465 = vmatprep.mubr.f32.mxu0 0.0
    %2466 = vmatmul.mubr.f32.gmra.mrb[0].mxu0 %v2366
    %v2467 = vpop.f32.mrb[0].mxu0
    %v2468 = vadd.f32 %v2394, %v2467
    %v2469 = vpop.f32.mrb[0].mxu0
    %2470 = vmatprep.mubr.f32.mxu0 0.0
    %2471 = vmatmul.mubr.f32.gmra.mrb[0].mxu0 %v2367
    %v2472 = vpop.f32.mrb[0].mxu0
    %v2473 = vadd.f32 %v2394, %v2472
    %v2474 = vpop.f32.mrb[0].mxu0
    %2475 = vmatprep.mubr.f32.mxu0 0.0
    %2476 = vmatmul.mubr.f32.gmra.mrb[0].mxu0 %v2368
    %v2477 = vpop.f32.mrb[0].mxu0
    %v2478 = vadd.f32 %v2394, %v2477
    %v2479 = vpop.f32.mrb[0].mxu0
    %2480 = vmatprep.mubr.f32.mxu0 0.0
    %2481 = vmatmul.mubr.f32.gmra.mrb[0].mxu0 %v2369
    %v2482 = vpop.f32.mrb[0].mxu0
    %v2483 = vadd.f32 %v2394, %v2482
    %v2484 = vpop.f32.mrb[0].mxu0
    %2485 = vmatprep.mubr.f32.mxu0 0.0
    %2486 = vmatmul.mubr.f32.gmra.mrb[0].mxu0 %v2370
    %v2487 = vpop.f32.mrb[0].mxu0
    %v2488 = vadd.f32 %v2394, %v2487
    %v2489 = vpop.f32.mrb[0].mxu0
    %2490 = vmatprep.mubr.f32.mxu0 0.0
    %2491 = vmatmul.mubr.f32.gmra.mrb[0].mxu0 %v2371
    %v2492 = vpop.f32.mrb[0].mxu0
    %v2493 = vadd.f32 %v2394, %v2492
    %v2494 = vpop.f32.mrb[0].mxu0
    %2495 = vmatprep.mubr.f32.mxu0 0.0
    %2496 = vmatmul.mubr.f32.gmra.mrb[0].mxu0 %v2372
    %v2497 = vpop.f32.mrb[0].mxu0
    %v2498 = vadd.f32 %v2394, %v2497
    %v2499 = vpop.f32.mrb[0].mxu0
    %2500 = vdwg.mxu0
    %2501 = vst [vmem:[%s13] sm:$0xff] %v2463
    %2502 = vst [vmem:[%s13 + $0x8] sm:$0xff] %v2468
    %2503 = vst [vmem:[%s13 + $0x10] sm:$0xff] %v2473
    %2504 = vst [vmem:[%s13 + $0x18] sm:$0xff] %v2478
    %2505 = vst [vmem:[%s13 + $0x20] sm:$0xff] %v2483
    %2506 = vst [vmem:[%s13 + $0x28] sm:$0xff] %v2488
    %2507 = vst [vmem:[%s13 + $0x30] sm:$0xff] %v2493
    %2508 = vst [vmem:[%s13 + $0x38] sm:$0xff] %v2498
    // Predicated region
    $region86: #{forward.1} parent=1 // pred_check
      _
    $region87: #{forward.1} parent=1 // pred_check_branch
      %2510 = sbr.rel (0) target = $region89
    $region88: #{forward.1} parent=1 // pred_region
      _
    $region89: #{forward.1} parent=1 // pred_fallthru
      _
    // Predicated region
    $region90: #{forward.1} parent=1 // pred_check
      _
    $region91: #{forward.1} parent=1 // pred_check_branch
      %2512 = sbr.rel (0) target = $region93
    $region92: #{forward.1} parent=1 // pred_region
      _
    $region93: #{forward.1} parent=1 // pred_fallthru
      _
    %2513 = vsyncpa [#allocation4], 1
    %2514 = vsyncpa [#allocation6], 1
    %2515 = vsyncpa [#allocation9], 1
    %2516 = vsyncpa [#allocation12], 1
    %2517 = vsyncpa [#allocation15], 1

</llo_original>
